<compile_context>
chip_gen: v7x
topology: tpu7x:2x2x1
jax: 0.10.0
libtpu: 0.0.40
codegen_flags: <defaults>
</compile_context>

<pallas_src>
import functools

import jax
import jax.numpy as jnp
from jax import lax
from jax.experimental import pallas as pl
from jax.experimental.pallas import tpu as pltpu

KW = 9    # conv kernel width
PAD = 4   # zero padding on each side along W
EPS = 1e-5


def _choose_lane_block(total_lanes, width, bytes_per_lane,
                       budget_bytes=8 << 20, max_lanes=32768):
    """Largest lane block of whole spatial rows, multiple of 128, dividing
    total_lanes, under a VMEM budget.  Single-TC chips (v5e/v6e) want simply
    the largest block; TODO(synk): on v7x prefer an even step count >= 2 so
    the two TensorCores get balanced 'parallel' shards."""
    rows = total_lanes // width
    best = None
    for rb in range(1, rows + 1):
        if rows % rb:
            continue
        lb = rb * width
        if lb > max_lanes or lb * bytes_per_lane > budget_bytes:
            break
        if lb % 128 == 0:
            best = lb
    if best is None:
        return total_lanes          # fallback: full-extent block (masked stores)
    return best


def basic_block_kernel(*refs, n_src, width, grow):
    """One BasicBlock layer over one lane block.

    refs = [x_0..x_{S-1},            (Cs, LB)   bf16 activation stripes
            w_0..w_{S-1},            (KW, G, Cs) bf16 per-stripe conv weights
            scale_0..scale_{S-1},    (Cs, 1)    f32 folded BN scale
            shift_0..shift_{S-1},    (Cs, 1)    f32 folded BN shift
            bias,                    (G, 1)     f32 conv bias
            o,                       (G, LB)    bf16 new channels
            psum, pssq]              (1, G, 128) f32 per-block BN stat partials
    """
    xs = refs[0:n_src]
    ws = refs[n_src:2 * n_src]
    scs = refs[2 * n_src:3 * n_src]
    shs = refs[3 * n_src:4 * n_src]
    b_ref = refs[4 * n_src]
    o_ref, psum_ref, pssq_ref = refs[4 * n_src + 1:4 * n_src + 4]

    LB = xs[0].shape[1]

    # Lane position within its spatial row (blocks hold whole rows).  Kept at
    # (1, LB) and broadcast over channels so mask/iota cost is O(LB) vregs.
    wpos = lax.broadcasted_iota(jnp.int32, (1, LB), 1) % width
    masks = [None] * KW
    for k in range(KW):
        d = k - PAD
        if d > 0:
            masks[k] = wpos < (width - d)
        elif d < 0:
            masks[k] = wpos >= (-d)

    acc = jnp.zeros((grow, LB), jnp.float32)
    # TODO(synk): for very large C*LB, chunk channels with an unrolled
    # lax.fori_loop to bound vreg live ranges; unnecessary at these widths.
    for s in range(n_src):
        # Folded BN (scale/shift) + ReLU in f32 (v5e has no bf16 VPU).
        y = jnp.maximum(xs[s][...] * scs[s][...] + shs[s][...], 0.0)
        w = ws[s][...]                                  # (KW, G, Cs) bf16
        for k in range(KW):
            d = k - PAD
            if d == 0:
                t = y
            else:
                # Lane rotation (XLU) + row-boundary mask == zero padding of 4
                # on each side of W (blocks contain whole rows, so wraps only
                # occur at row boundaries, which the mask also kills).
                t = pltpu.roll(y, shift=(-d) % LB, axis=1)
                t = jnp.where(masks[k], t, 0.0)
            # Tap-wise MXU accumulation — no im2col scratch store/reload.
            acc = acc + jnp.dot(w[k], t.astype(jnp.bfloat16),
                                preferred_element_type=jnp.float32)

    o32 = acc + b_ref[...]
    o_bf = o32.astype(jnp.bfloat16)
    o_ref[...] = o_bf

    # Fused per-block BN statistics of the *stored* (bf16) activations, folded
    # to 128-lane residues so the stat stores stay tiny and full-lane.
    # TODO(synk): E[x^2]-E[x]^2 in f32 can cancel for very large N*H*W; a
    # shifted / Welford-style accumulation would be more robust.
    oq = o_bf.astype(jnp.float32)
    if LB % 128 == 0:
        ps = oq[:, 0:128]
        ss = ps * ps
        for i in range(1, LB // 128):
            blk = oq[:, i * 128:(i + 1) * 128]
            ps = ps + blk
            ss = ss + blk * blk
    else:
        # Fallback (LB not a multiple of 128): spread totals over 128 lanes so
        # the wrapper's lane-sum recovers them exactly (power-of-two scaling).
        tot = jnp.sum(oq, axis=1, keepdims=True) * (1.0 / 128.0)
        sq = jnp.sum(oq * oq, axis=1, keepdims=True) * (1.0 / 128.0)
        ps = jnp.broadcast_to(tot, (grow, 128))
        ss = jnp.broadcast_to(sq, (grow, 128))
    psum_ref[...] = ps[None]
    pssq_ref[...] = ss[None]


def basic_block_layer(sources, wsrc, scales, shifts, bias, width, grow):
    """sources: list of (Cs, RW) bf16 stripes.  Returns (o (G, RW) bf16,
    per-channel sum (G,), per-channel sum-of-squares (G,))."""
    RW = sources[0].shape[1]
    n_src = len(sources)
    c_in = sum(s.shape[0] for s in sources)

    # Rough VMEM bytes per lane: double-buffered bf16 inputs/outputs plus f32
    # in-kernel working values; used only to bound the lane-block size.
    bytes_per_lane = 10 * c_in + 12 * grow + 64
    LB = _choose_lane_block(RW, width, bytes_per_lane)
    NB = RW // LB

    kernel = functools.partial(basic_block_kernel, n_src=n_src, width=width,
                               grow=grow)

    in_specs = (
        [pl.BlockSpec((s.shape[0], LB), lambda b: (0, b)) for s in sources]
        + [pl.BlockSpec(w.shape, lambda b: (0, 0, 0)) for w in wsrc]
        + [pl.BlockSpec(sc.shape, lambda b: (0, 0)) for sc in scales]
        + [pl.BlockSpec(sh.shape, lambda b: (0, 0)) for sh in shifts]
        + [pl.BlockSpec(bias.shape, lambda b: (0, 0))]
    )
    out_shape = (
        jax.ShapeDtypeStruct((grow, RW), jnp.bfloat16),
        jax.ShapeDtypeStruct((NB, grow, 128), jnp.float32),
        jax.ShapeDtypeStruct((NB, grow, 128), jnp.float32),
    )
    out_specs = [
        pl.BlockSpec((grow, LB), lambda b: (0, b)),
        pl.BlockSpec((1, grow, 128), lambda b: (b, 0, 0)),
        pl.BlockSpec((1, grow, 128), lambda b: (b, 0, 0)),
    ]

    o, psum, pssq = pl.pallas_call(
        kernel,
        out_shape=out_shape,
        grid_spec=pltpu.PrefetchScalarGridSpec(
            num_scalar_prefetch=0,
            grid=(NB,),
            in_specs=in_specs,
            out_specs=out_specs,
        ),
        compiler_params=pltpu.CompilerParams(
            dimension_semantics=("parallel",)),
    )(*sources, *wsrc, *scales, *shifts, bias)

    return o, jnp.sum(psum, axis=(0, 2)), jnp.sum(pssq, axis=(0, 2))


def dense_block(x, params):
    """x: (N, C0, H, W) f32.  Returns (N, C0 + nb_layers*grow_rate, H, W) f32."""
    N, C0, H, W = x.shape
    RW = N * H * W
    count = float(RW)

    rows0 = x.transpose(1, 0, 2, 3).reshape(C0, RW)       # f32, exact pass-through
    sources = [rows0.astype(jnp.bfloat16)]                 # bf16 stripes the kernels read
    r0 = sources[0].astype(jnp.float32)
    src_sum = [jnp.sum(r0, axis=1)]
    src_ssq = [jnp.sum(r0 * r0, axis=1)]
    outs_f32 = [rows0]                                     # original channels stay exact f32

    # TODO(synk): fusing all layers into one pallas_call (activations resident
    # in VMEM across layers) needs a two-phase scheme for the training-mode
    # batch statistics (layer i+1's BN requires a global reduction of layer
    # i's output), so layers stay as separate kernels here.
    for (gamma, beta, weight, bias) in params:
        G = weight.shape[0]
        scales, shifts, wsrc = [], [], []
        c_off = 0
        for s in range(len(sources)):
            Cs = sources[s].shape[0]
            mean = src_sum[s] / count
            var = jnp.maximum(src_ssq[s] / count - mean * mean, 0.0)
            scale = gamma[c_off:c_off + Cs] / jnp.sqrt(var + EPS)
            shift = beta[c_off:c_off + Cs] - mean * scale
            scales.append(scale.reshape(Cs, 1).astype(jnp.float32))
            shifts.append(shift.reshape(Cs, 1).astype(jnp.float32))
            # (G, Cs, KW) -> (KW, G, Cs) bf16, taps outermost for the tap loop.
            wsrc.append(jnp.transpose(weight[:, c_off:c_off + Cs, :], (2, 0, 1))
                        .astype(jnp.bfloat16))
            c_off += Cs

        o, osum, ossq = basic_block_layer(
            sources, wsrc, scales, shifts,
            bias.reshape(G, 1).astype(jnp.float32), W, G)

        sources.append(o)
        src_sum.append(osum)
        src_ssq.append(ossq)
        outs_f32.append(o.astype(jnp.float32))

    rows = jnp.concatenate(outs_f32, axis=0)               # single O(total) concat
    C_total = rows.shape[0]
    return rows.reshape(C_total, N, H, W).transpose(1, 0, 2, 3)


def ref_dense_block_f32(x, params):
    """Exact all-f32 module math (PyTorch train-mode forward)."""
    out = x
    for (gamma, beta, weight, bias) in params:
        Ci = out.shape[1]
        mean = jnp.mean(out, axis=(0, 2, 3), keepdims=True)
        var = jnp.mean((out - mean) ** 2, axis=(0, 2, 3), keepdims=True)
        y = (out - mean) / jnp.sqrt(var + EPS)
        y = y * gamma.reshape(1, Ci, 1, 1) + beta.reshape(1, Ci, 1, 1)
        y = jnp.maximum(y, 0.0)
        o = lax.conv_general_dilated(
            y, weight[:, :, None, :],
            window_strides=(1, 1), padding=((0, 0), (PAD, PAD)),
            dimension_numbers=('NCHW', 'OIHW', 'NCHW'),
            preferred_element_type=jnp.float32)
        o = o + bias.reshape(1, -1, 1, 1)
        out = jnp.concatenate([out, o], axis=1)
    return out


def ref_dense_block_quant(x, params):
    """Reference mimicking the kernel's quantization: bf16 activation storage
    between layers, BN batch stats computed in f32 from the bf16-stored values
    (uncentered variance), bf16 conv operands with f32 accumulation, and exact
    f32 pass-through of the original input channels."""
    stripes = [x]
    act = [x.astype(jnp.bfloat16)]
    for (gamma, beta, weight, bias) in params:
        cur = jnp.concatenate([a.astype(jnp.float32) for a in act], axis=1)
        Ci = cur.shape[1]
        mean = jnp.mean(cur, axis=(0, 2, 3), keepdims=True)
        var = jnp.maximum(
            jnp.mean(cur * cur, axis=(0, 2, 3), keepdims=True) - mean * mean, 0.0)
        y = (cur - mean) / jnp.sqrt(var + EPS)
        y = y * gamma.reshape(1, Ci, 1, 1) + beta.reshape(1, Ci, 1, 1)
        y = jnp.maximum(y, 0.0).astype(jnp.bfloat16)
        o = lax.conv_general_dilated(
            y, weight[:, :, None, :].astype(jnp.bfloat16),
            window_strides=(1, 1), padding=((0, 0), (PAD, PAD)),
            dimension_numbers=('NCHW', 'OIHW', 'NCHW'),
            preferred_element_type=jnp.float32)
        o = (o + bias.reshape(1, -1, 1, 1)).astype(jnp.bfloat16)
        act.append(o)
        stripes.append(o.astype(jnp.float32))
    return jnp.concatenate(stripes, axis=1)


def init_params(key, nb_layers, in_planes, grow_rate):
    params = []
    for i in range(nb_layers):
        cin = in_planes + i * grow_rate
        key, k1, k2, k3, k4 = jax.random.split(key, 5)
        gamma = 1.0 + 0.1 * jax.random.normal(k1, (cin,), jnp.float32)
        beta = 0.1 * jax.random.normal(k2, (cin,), jnp.float32)
        weight = jax.random.normal(k3, (grow_rate, cin, KW), jnp.float32)
        weight = weight / jnp.sqrt(float(cin * KW))
        bias = 0.1 * jax.random.normal(k4, (grow_rate,), jnp.float32)
        params.append((gamma, beta, weight, bias))
    return params


if __name__ == "__main__":
    nb_layers, in_planes, grow_rate = 3, 4, 4
    N, H, W = 2, 8, 16

    key = jax.random.PRNGKey(0)
    kx, kp = jax.random.split(key)
    x = jax.random.normal(kx, (N, in_planes, H, W), jnp.float32)
    params = init_params(kp, nb_layers, in_planes, grow_rate)

    y = jax.block_until_ready(jax.jit(dense_block)(x, params))
    assert y.shape == (N, in_planes + nb_layers * grow_rate, H, W), y.shape

    # (1) Loose semantic check vs exact all-f32 module math (tolerance covers
    #     the kernel's bf16 activation storage + bf16 MXU operands).
    y_exact = jax.block_until_ready(ref_dense_block_f32(x, params))
    assert jnp.allclose(y, y_exact, atol=1e-1, rtol=1e-1), \
        float(jnp.max(jnp.abs(y - y_exact)))

    # (2) Tight check vs a baseline that quantizes exactly like the kernel
    #     (catches layout / indexing / BN-folding regressions).
    y_quant = jax.block_until_ready(ref_dense_block_quant(x, params))
    assert jnp.allclose(y, y_quant, atol=2e-2, rtol=2e-2), \
        float(jnp.max(jnp.abs(y - y_quant)))

    print("KERNEL_OK")
</pallas_src>

<mosaic_0001>
module attributes {stable_mosaic.version = 11 : i64} {
  func.func @basic_block_kernel(%arg0: i32, %arg1: memref<4x256xbf16, #tpu.memory_space<vmem>>, %arg2: memref<9x4x4xbf16, #tpu.memory_space<vmem>>, %arg3: memref<4x1xf32, #tpu.memory_space<vmem>>, %arg4: memref<4x1xf32, #tpu.memory_space<vmem>>, %arg5: memref<4x1xf32, #tpu.memory_space<vmem>>, %arg6: memref<4x256xbf16, #tpu.memory_space<vmem>>, %arg7: memref<1x4x128xf32, #tpu.memory_space<vmem>>, %arg8: memref<1x4x128xf32, #tpu.memory_space<vmem>>) attributes {dimension_semantics = [#tpu.dimension_semantics<parallel>], iteration_bounds = array<i64: 1>, scalar_prefetch = 0 : i64, scratch_operands = 0 : i64, tpu.core_type = #tpu.core_type<tc>, window_params = [{transform_indices = @transform_0, window_bounds = array<i64: 4, 256>}, {pipeline_mode = #tpu.pipeline_mode<synchronous>, transform_indices = @transform_1, window_bounds = array<i64: 9, 4, 4>}, {pipeline_mode = #tpu.pipeline_mode<synchronous>, transform_indices = @transform_2, window_bounds = array<i64: 4, 1>}, {pipeline_mode = #tpu.pipeline_mode<synchronous>, transform_indices = @transform_3, window_bounds = array<i64: 4, 1>}, {pipeline_mode = #tpu.pipeline_mode<synchronous>, transform_indices = @transform_4, window_bounds = array<i64: 4, 1>}, {transform_indices = @transform_5, window_bounds = array<i64: 4, 256>}, {transform_indices = @transform_6, window_bounds = array<i64: 1, 4, 128>}, {transform_indices = @transform_7, window_bounds = array<i64: 1, 4, 128>}]} {
    %0 = tpu.iota {dimensions = array<i32: 1>} : vector<1x256xi32>
    %c16_i32 = arith.constant 16 : i32
    %c0_i32 = arith.constant 0 : i32
    %1 = arith.cmpi eq, %c16_i32, %c0_i32 : i32
    %c1_i32 = arith.constant 1 : i32
    %2 = arith.select %1, %c1_i32, %c16_i32 : i32
    %3 = vector.broadcast %2 : i32 to vector<1x256xi32>
    %4 = arith.remsi %0, %3 : vector<1x256xi32>
    %c0_i32_0 = arith.constant 0 : i32
    %5 = vector.broadcast %c0_i32_0 : i32 to vector<1x256xi32>
    %6 = arith.cmpi ne, %4, %5 : vector<1x256xi32>
    %c0_i32_1 = arith.constant 0 : i32
    %7 = vector.broadcast %c0_i32_1 : i32 to vector<1x256xi32>
    %8 = arith.cmpi slt, %4, %7 : vector<1x256xi32>
    %c0_i32_2 = arith.constant 0 : i32
    %9 = arith.cmpi slt, %2, %c0_i32_2 : i32
    %10 = vector.broadcast %9 : i1 to vector<1x256xi1>
    %11 = vector.broadcast %10 : vector<1x256xi1> to vector<1x256xi1>
    %12 = arith.xori %8, %11 : vector<1x256xi1>
    %13 = arith.andi %12, %6 : vector<1x256xi1>
    %14 = vector.broadcast %2 : i32 to vector<1x256xi32>
    %15 = arith.addi %4, %14 : vector<1x256xi32>
    %16 = arith.select %13, %15, %4 : vector<1x256xi1>, vector<1x256xi32>
    %c4_i32 = arith.constant 4 : i32
    %17 = vector.broadcast %c4_i32 : i32 to vector<1x256xi32>
    %18 = arith.cmpi sge, %16, %17 : vector<1x256xi32>
    %c3_i32 = arith.constant 3 : i32
    %19 = vector.broadcast %c3_i32 : i32 to vector<1x256xi32>
    %20 = arith.cmpi sge, %16, %19 : vector<1x256xi32>
    %c2_i32 = arith.constant 2 : i32
    %21 = vector.broadcast %c2_i32 : i32 to vector<1x256xi32>
    %22 = arith.cmpi sge, %16, %21 : vector<1x256xi32>
    %c1_i32_3 = arith.constant 1 : i32
    %23 = vector.broadcast %c1_i32_3 : i32 to vector<1x256xi32>
    %24 = arith.cmpi sge, %16, %23 : vector<1x256xi32>
    %c15_i32 = arith.constant 15 : i32
    %25 = vector.broadcast %c15_i32 : i32 to vector<1x256xi32>
    %26 = arith.cmpi slt, %16, %25 : vector<1x256xi32>
    %c14_i32 = arith.constant 14 : i32
    %27 = vector.broadcast %c14_i32 : i32 to vector<1x256xi32>
    %28 = arith.cmpi slt, %16, %27 : vector<1x256xi32>
    %c13_i32 = arith.constant 13 : i32
    %29 = vector.broadcast %c13_i32 : i32 to vector<1x256xi32>
    %30 = arith.cmpi slt, %16, %29 : vector<1x256xi32>
    %c12_i32 = arith.constant 12 : i32
    %31 = vector.broadcast %c12_i32 : i32 to vector<1x256xi32>
    %32 = arith.cmpi slt, %16, %31 : vector<1x256xi32>
    %cst = arith.constant 0.000000e+00 : f32
    %33 = vector.broadcast %cst : f32 to vector<4x256xf32>
    %c0 = arith.constant 0 : index
    %c0_4 = arith.constant 0 : index
    %34 = vector.load %arg1[%c0, %c0_4] : memref<4x256xbf16, #tpu.memory_space<vmem>>, vector<4x256xbf16>
    %c0_5 = arith.constant 0 : index
    %c0_6 = arith.constant 0 : index
    %35 = vector.load %arg3[%c0_5, %c0_6] : memref<4x1xf32, #tpu.memory_space<vmem>>, vector<4x1xf32>
    %36 = arith.extf %34 : vector<4x256xbf16> to vector<4x256xf32>
    %37 = vector.broadcast %35 : vector<4x1xf32> to vector<4x256xf32>
    %38 = arith.mulf %36, %37 : vector<4x256xf32>
    %c0_7 = arith.constant 0 : index
    %c0_8 = arith.constant 0 : index
    %39 = vector.load %arg4[%c0_7, %c0_8] : memref<4x1xf32, #tpu.memory_space<vmem>>, vector<4x1xf32>
    %40 = vector.broadcast %39 : vector<4x1xf32> to vector<4x256xf32>
    %41 = arith.addf %38, %40 : vector<4x256xf32>
    %cst_9 = arith.constant 0.000000e+00 : f32
    %42 = vector.broadcast %cst_9 : f32 to vector<4x256xf32>
    %43 = arith.maximumf %41, %42 : vector<4x256xf32>
    %c0_10 = arith.constant 0 : index
    %c0_11 = arith.constant 0 : index
    %c0_12 = arith.constant 0 : index
    %44 = vector.load %arg2[%c0_10, %c0_11, %c0_12] : memref<9x4x4xbf16, #tpu.memory_space<vmem>>, vector<9x4x4xbf16>
    %c4_i32_13 = arith.constant 4 : i32
    %45 = tpu.dynamic_rotate %43 by %c4_i32_13 dim 1 : vector<4x256xf32>, i32 -> vector<4x256xf32>
    %cst_14 = arith.constant 0.000000e+00 : f32
    %46 = vector.shape_cast %18 : vector<1x256xi1> to vector<1x256xi1>
    %47 = vector.broadcast %46 : vector<1x256xi1> to vector<4x256xi1>
    %48 = vector.broadcast %cst_14 : f32 to vector<4x256xf32>
    %49 = arith.select %47, %45, %48 : vector<4x256xi1>, vector<4x256xf32>
    %50 = vector.extract_strided_slice %44 {offsets = [0, 0, 0], sizes = [1, 4, 4], strides = [1, 1, 1]} : vector<9x4x4xbf16> to vector<1x4x4xbf16>
    %51 = vector.shape_cast %50 : vector<1x4x4xbf16> to vector<4x4xbf16>
    %52 = arith.truncf %49 : vector<4x256xf32> to vector<4x256xbf16>
    %cst_15 = arith.constant dense<0.000000e+00> : vector<4x256xf32>
    %53 = tpu.matmul %51, %52, %cst_15 {dimension_numbers = #tpu.dot_dimension_numbers<[1], [0], [0], [1], [0, 0, 1, 1], [], []>} : vector<4x4xbf16>, vector<4x256xbf16>, vector<4x256xf32> -> vector<4x256xf32>
    %54 = arith.addf %33, %53 : vector<4x256xf32>
    %c3_i32_16 = arith.constant 3 : i32
    %55 = tpu.dynamic_rotate %43 by %c3_i32_16 dim 1 : vector<4x256xf32>, i32 -> vector<4x256xf32>
    %cst_17 = arith.constant 0.000000e+00 : f32
    %56 = vector.shape_cast %20 : vector<1x256xi1> to vector<1x256xi1>
    %57 = vector.broadcast %56 : vector<1x256xi1> to vector<4x256xi1>
    %58 = vector.broadcast %cst_17 : f32 to vector<4x256xf32>
    %59 = arith.select %57, %55, %58 : vector<4x256xi1>, vector<4x256xf32>
    %60 = vector.extract_strided_slice %44 {offsets = [1, 0, 0], sizes = [1, 4, 4], strides = [1, 1, 1]} : vector<9x4x4xbf16> to vector<1x4x4xbf16>
    %61 = vector.shape_cast %60 : vector<1x4x4xbf16> to vector<4x4xbf16>
    %62 = arith.truncf %59 : vector<4x256xf32> to vector<4x256xbf16>
    %cst_18 = arith.constant dense<0.000000e+00> : vector<4x256xf32>
    %63 = tpu.matmul %61, %62, %cst_18 {dimension_numbers = #tpu.dot_dimension_numbers<[1], [0], [0], [1], [0, 0, 1, 1], [], []>} : vector<4x4xbf16>, vector<4x256xbf16>, vector<4x256xf32> -> vector<4x256xf32>
    %64 = arith.addf %54, %63 : vector<4x256xf32>
    %c2_i32_19 = arith.constant 2 : i32
    %65 = tpu.dynamic_rotate %43 by %c2_i32_19 dim 1 : vector<4x256xf32>, i32 -> vector<4x256xf32>
    %cst_20 = arith.constant 0.000000e+00 : f32
    %66 = vector.shape_cast %22 : vector<1x256xi1> to vector<1x256xi1>
    %67 = vector.broadcast %66 : vector<1x256xi1> to vector<4x256xi1>
    %68 = vector.broadcast %cst_20 : f32 to vector<4x256xf32>
    %69 = arith.select %67, %65, %68 : vector<4x256xi1>, vector<4x256xf32>
    %70 = vector.extract_strided_slice %44 {offsets = [2, 0, 0], sizes = [1, 4, 4], strides = [1, 1, 1]} : vector<9x4x4xbf16> to vector<1x4x4xbf16>
    %71 = vector.shape_cast %70 : vector<1x4x4xbf16> to vector<4x4xbf16>
    %72 = arith.truncf %69 : vector<4x256xf32> to vector<4x256xbf16>
    %cst_21 = arith.constant dense<0.000000e+00> : vector<4x256xf32>
    %73 = tpu.matmul %71, %72, %cst_21 {dimension_numbers = #tpu.dot_dimension_numbers<[1], [0], [0], [1], [0, 0, 1, 1], [], []>} : vector<4x4xbf16>, vector<4x256xbf16>, vector<4x256xf32> -> vector<4x256xf32>
    %74 = arith.addf %64, %73 : vector<4x256xf32>
    %c1_i32_22 = arith.constant 1 : i32
    %75 = tpu.dynamic_rotate %43 by %c1_i32_22 dim 1 : vector<4x256xf32>, i32 -> vector<4x256xf32>
    %cst_23 = arith.constant 0.000000e+00 : f32
    %76 = vector.shape_cast %24 : vector<1x256xi1> to vector<1x256xi1>
    %77 = vector.broadcast %76 : vector<1x256xi1> to vector<4x256xi1>
    %78 = vector.broadcast %cst_23 : f32 to vector<4x256xf32>
    %79 = arith.select %77, %75, %78 : vector<4x256xi1>, vector<4x256xf32>
    %80 = vector.extract_strided_slice %44 {offsets = [3, 0, 0], sizes = [1, 4, 4], strides = [1, 1, 1]} : vector<9x4x4xbf16> to vector<1x4x4xbf16>
    %81 = vector.shape_cast %80 : vector<1x4x4xbf16> to vector<4x4xbf16>
    %82 = arith.truncf %79 : vector<4x256xf32> to vector<4x256xbf16>
    %cst_24 = arith.constant dense<0.000000e+00> : vector<4x256xf32>
    %83 = tpu.matmul %81, %82, %cst_24 {dimension_numbers = #tpu.dot_dimension_numbers<[1], [0], [0], [1], [0, 0, 1, 1], [], []>} : vector<4x4xbf16>, vector<4x256xbf16>, vector<4x256xf32> -> vector<4x256xf32>
    %84 = arith.addf %74, %83 : vector<4x256xf32>
    %85 = vector.extract_strided_slice %44 {offsets = [4, 0, 0], sizes = [1, 4, 4], strides = [1, 1, 1]} : vector<9x4x4xbf16> to vector<1x4x4xbf16>
    %86 = vector.shape_cast %85 : vector<1x4x4xbf16> to vector<4x4xbf16>
    %87 = arith.truncf %43 : vector<4x256xf32> to vector<4x256xbf16>
    %cst_25 = arith.constant dense<0.000000e+00> : vector<4x256xf32>
    %88 = tpu.matmul %86, %87, %cst_25 {dimension_numbers = #tpu.dot_dimension_numbers<[1], [0], [0], [1], [0, 0, 1, 1], [], []>} : vector<4x4xbf16>, vector<4x256xbf16>, vector<4x256xf32> -> vector<4x256xf32>
    %89 = arith.addf %84, %88 : vector<4x256xf32>
    %c255_i32 = arith.constant 255 : i32
    %90 = tpu.dynamic_rotate %43 by %c255_i32 dim 1 : vector<4x256xf32>, i32 -> vector<4x256xf32>
    %cst_26 = arith.constant 0.000000e+00 : f32
    %91 = vector.shape_cast %26 : vector<1x256xi1> to vector<1x256xi1>
    %92 = vector.broadcast %91 : vector<1x256xi1> to vector<4x256xi1>
    %93 = vector.broadcast %cst_26 : f32 to vector<4x256xf32>
    %94 = arith.select %92, %90, %93 : vector<4x256xi1>, vector<4x256xf32>
    %95 = vector.extract_strided_slice %44 {offsets = [5, 0, 0], sizes = [1, 4, 4], strides = [1, 1, 1]} : vector<9x4x4xbf16> to vector<1x4x4xbf16>
    %96 = vector.shape_cast %95 : vector<1x4x4xbf16> to vector<4x4xbf16>
    %97 = arith.truncf %94 : vector<4x256xf32> to vector<4x256xbf16>
    %cst_27 = arith.constant dense<0.000000e+00> : vector<4x256xf32>
    %98 = tpu.matmul %96, %97, %cst_27 {dimension_numbers = #tpu.dot_dimension_numbers<[1], [0], [0], [1], [0, 0, 1, 1], [], []>} : vector<4x4xbf16>, vector<4x256xbf16>, vector<4x256xf32> -> vector<4x256xf32>
    %99 = arith.addf %89, %98 : vector<4x256xf32>
    %c254_i32 = arith.constant 254 : i32
    %100 = tpu.dynamic_rotate %43 by %c254_i32 dim 1 : vector<4x256xf32>, i32 -> vector<4x256xf32>
    %cst_28 = arith.constant 0.000000e+00 : f32
    %101 = vector.shape_cast %28 : vector<1x256xi1> to vector<1x256xi1>
    %102 = vector.broadcast %101 : vector<1x256xi1> to vector<4x256xi1>
    %103 = vector.broadcast %cst_28 : f32 to vector<4x256xf32>
    %104 = arith.select %102, %100, %103 : vector<4x256xi1>, vector<4x256xf32>
    %105 = vector.extract_strided_slice %44 {offsets = [6, 0, 0], sizes = [1, 4, 4], strides = [1, 1, 1]} : vector<9x4x4xbf16> to vector<1x4x4xbf16>
    %106 = vector.shape_cast %105 : vector<1x4x4xbf16> to vector<4x4xbf16>
    %107 = arith.truncf %104 : vector<4x256xf32> to vector<4x256xbf16>
    %cst_29 = arith.constant dense<0.000000e+00> : vector<4x256xf32>
    %108 = tpu.matmul %106, %107, %cst_29 {dimension_numbers = #tpu.dot_dimension_numbers<[1], [0], [0], [1], [0, 0, 1, 1], [], []>} : vector<4x4xbf16>, vector<4x256xbf16>, vector<4x256xf32> -> vector<4x256xf32>
    %109 = arith.addf %99, %108 : vector<4x256xf32>
    %c253_i32 = arith.constant 253 : i32
    %110 = tpu.dynamic_rotate %43 by %c253_i32 dim 1 : vector<4x256xf32>, i32 -> vector<4x256xf32>
    %cst_30 = arith.constant 0.000000e+00 : f32
    %111 = vector.shape_cast %30 : vector<1x256xi1> to vector<1x256xi1>
    %112 = vector.broadcast %111 : vector<1x256xi1> to vector<4x256xi1>
    %113 = vector.broadcast %cst_30 : f32 to vector<4x256xf32>
    %114 = arith.select %112, %110, %113 : vector<4x256xi1>, vector<4x256xf32>
    %115 = vector.extract_strided_slice %44 {offsets = [7, 0, 0], sizes = [1, 4, 4], strides = [1, 1, 1]} : vector<9x4x4xbf16> to vector<1x4x4xbf16>
    %116 = vector.shape_cast %115 : vector<1x4x4xbf16> to vector<4x4xbf16>
    %117 = arith.truncf %114 : vector<4x256xf32> to vector<4x256xbf16>
    %cst_31 = arith.constant dense<0.000000e+00> : vector<4x256xf32>
    %118 = tpu.matmul %116, %117, %cst_31 {dimension_numbers = #tpu.dot_dimension_numbers<[1], [0], [0], [1], [0, 0, 1, 1], [], []>} : vector<4x4xbf16>, vector<4x256xbf16>, vector<4x256xf32> -> vector<4x256xf32>
    %119 = arith.addf %109, %118 : vector<4x256xf32>
    %c252_i32 = arith.constant 252 : i32
    %120 = tpu.dynamic_rotate %43 by %c252_i32 dim 1 : vector<4x256xf32>, i32 -> vector<4x256xf32>
    %cst_32 = arith.constant 0.000000e+00 : f32
    %121 = vector.shape_cast %32 : vector<1x256xi1> to vector<1x256xi1>
    %122 = vector.broadcast %121 : vector<1x256xi1> to vector<4x256xi1>
    %123 = vector.broadcast %cst_32 : f32 to vector<4x256xf32>
    %124 = arith.select %122, %120, %123 : vector<4x256xi1>, vector<4x256xf32>
    %125 = vector.extract_strided_slice %44 {offsets = [8, 0, 0], sizes = [1, 4, 4], strides = [1, 1, 1]} : vector<9x4x4xbf16> to vector<1x4x4xbf16>
    %126 = vector.shape_cast %125 : vector<1x4x4xbf16> to vector<4x4xbf16>
    %127 = arith.truncf %124 : vector<4x256xf32> to vector<4x256xbf16>
    %cst_33 = arith.constant dense<0.000000e+00> : vector<4x256xf32>
    %128 = tpu.matmul %126, %127, %cst_33 {dimension_numbers = #tpu.dot_dimension_numbers<[1], [0], [0], [1], [0, 0, 1, 1], [], []>} : vector<4x4xbf16>, vector<4x256xbf16>, vector<4x256xf32> -> vector<4x256xf32>
    %129 = arith.addf %119, %128 : vector<4x256xf32>
    %c0_34 = arith.constant 0 : index
    %c0_35 = arith.constant 0 : index
    %130 = vector.load %arg5[%c0_34, %c0_35] : memref<4x1xf32, #tpu.memory_space<vmem>>, vector<4x1xf32>
    %131 = vector.broadcast %130 : vector<4x1xf32> to vector<4x256xf32>
    %132 = arith.addf %129, %131 : vector<4x256xf32>
    %133 = arith.truncf %132 : vector<4x256xf32> to vector<4x256xbf16>
    %c0_36 = arith.constant 0 : index
    %c0_37 = arith.constant 0 : index
    %134 = vector.load %arg6[%c0_36, %c0_37] : memref<4x256xbf16, #tpu.memory_space<vmem>>, vector<4x256xbf16>
    tpu.vector_store %arg6[%c0_36, %c0_37], %133 {strides = array<i32>} : memref<4x256xbf16, #tpu.memory_space<vmem>>, vector<4x256xbf16>,
    %135 = arith.extf %133 : vector<4x256xbf16> to vector<4x256xf32>
    %136 = vector.extract_strided_slice %135 {offsets = [0, 0], sizes = [4, 128], strides = [1, 1]} : vector<4x256xf32> to vector<4x128xf32>
    %137 = arith.mulf %136, %136 : vector<4x128xf32>
    %138 = vector.extract_strided_slice %135 {offsets = [0, 128], sizes = [4, 128], strides = [1, 1]} : vector<4x256xf32> to vector<4x128xf32>
    %139 = arith.addf %136, %138 : vector<4x128xf32>
    %140 = arith.mulf %138, %138 : vector<4x128xf32>
    %141 = arith.addf %137, %140 : vector<4x128xf32>
    %142 = vector.shape_cast %139 : vector<4x128xf32> to vector<1x4x128xf32>
    %c0_38 = arith.constant 0 : index
    %c0_39 = arith.constant 0 : index
    %c0_40 = arith.constant 0 : index
    %143 = vector.load %arg7[%c0_38, %c0_39, %c0_40] : memref<1x4x128xf32, #tpu.memory_space<vmem>>, vector<1x4x128xf32>
    tpu.vector_store %arg7[%c0_38, %c0_39, %c0_40], %142 {strides = array<i32>} : memref<1x4x128xf32, #tpu.memory_space<vmem>>, vector<1x4x128xf32>,
    %144 = vector.shape_cast %141 : vector<4x128xf32> to vector<1x4x128xf32>
    %c0_41 = arith.constant 0 : index
    %c0_42 = arith.constant 0 : index
    %c0_43 = arith.constant 0 : index
    %145 = vector.load %arg8[%c0_41, %c0_42, %c0_43] : memref<1x4x128xf32, #tpu.memory_space<vmem>>, vector<1x4x128xf32>
    tpu.vector_store %arg8[%c0_41, %c0_42, %c0_43], %144 {strides = array<i32>} : memref<1x4x128xf32, #tpu.memory_space<vmem>>, vector<1x4x128xf32>,
    return
  }
  func.func @transform_0(%arg0: i32) -> (i32, i32) {
    %c0_i32 = arith.constant 0 : i32
    %c0_i32_0 = arith.constant 0 : i32
    return %c0_i32, %arg0 : i32, i32
  }
  func.func @transform_1(%arg0: i32) -> (i32, i32, i32) {
    %c0_i32 = arith.constant 0 : i32
    %c0_i32_0 = arith.constant 0 : i32
    %c0_i32_1 = arith.constant 0 : i32
    %c0_i32_2 = arith.constant 0 : i32
    return %c0_i32, %c0_i32_0, %c0_i32_1 : i32, i32, i32
  }
  func.func @transform_2(%arg0: i32) -> (i32, i32) {
    %c0_i32 = arith.constant 0 : i32
    %c0_i32_0 = arith.constant 0 : i32
    %c0_i32_1 = arith.constant 0 : i32
    return %c0_i32, %c0_i32_0 : i32, i32
  }
  func.func @transform_3(%arg0: i32) -> (i32, i32) {
    %c0_i32 = arith.constant 0 : i32
    %c0_i32_0 = arith.constant 0 : i32
    %c0_i32_1 = arith.constant 0 : i32
    return %c0_i32, %c0_i32_0 : i32, i32
  }
  func.func @transform_4(%arg0: i32) -> (i32, i32) {
    %c0_i32 = arith.constant 0 : i32
    %c0_i32_0 = arith.constant 0 : i32
    %c0_i32_1 = arith.constant 0 : i32
    return %c0_i32, %c0_i32_0 : i32, i32
  }
  func.func @transform_5(%arg0: i32) -> (i32, i32) {
    %c0_i32 = arith.constant 0 : i32
    %c0_i32_0 = arith.constant 0 : i32
    return %c0_i32, %arg0 : i32, i32
  }
  func.func @transform_6(%arg0: i32) -> (i32, i32, i32) {
    %c0_i32 = arith.constant 0 : i32
    %c0_i32_0 = arith.constant 0 : i32
    %c0_i32_1 = arith.constant 0 : i32
    return %arg0, %c0_i32, %c0_i32_0 : i32, i32, i32
  }
  func.func @transform_7(%arg0: i32) -> (i32, i32, i32) {
    %c0_i32 = arith.constant 0 : i32
    %c0_i32_0 = arith.constant 0 : i32
    %c0_i32_1 = arith.constant 0 : i32
    return %arg0, %c0_i32, %c0_i32_0 : i32, i32, i32
  }
}

module attributes {stable_mosaic.version = 11 : i64} {
  func.func @basic_block_kernel(%arg0: i32, %arg1: memref<4x256xbf16, #tpu.memory_space<vmem>>, %arg2: memref<4x256xbf16, #tpu.memory_space<vmem>>, %arg3: memref<9x4x4xbf16, #tpu.memory_space<vmem>>, %arg4: memref<9x4x4xbf16, #tpu.memory_space<vmem>>, %arg5: memref<4x1xf32, #tpu.memory_space<vmem>>, %arg6: memref<4x1xf32, #tpu.memory_space<vmem>>, %arg7: memref<4x1xf32, #tpu.memory_space<vmem>>, %arg8: memref<4x1xf32, #tpu.memory_space<vmem>>, %arg9: memref<4x1xf32, #tpu.memory_space<vmem>>, %arg10: memref<4x256xbf16, #tpu.memory_space<vmem>>, %arg11: memref<1x4x128xf32, #tpu.memory_space<vmem>>, %arg12: memref<1x4x128xf32, #tpu.memory_space<vmem>>) attributes {dimension_semantics = [#tpu.dimension_semantics<parallel>], iteration_bounds = array<i64: 1>, scalar_prefetch = 0 : i64, scratch_operands = 0 : i64, tpu.core_type = #tpu.core_type<tc>, window_params = [{transform_indices = @transform_0, window_bounds = array<i64: 4, 256>}, {transform_indices = @transform_1, window_bounds = array<i64: 4, 256>}, {pipeline_mode = #tpu.pipeline_mode<synchronous>, transform_indices = @transform_2, window_bounds = array<i64: 9, 4, 4>}, {pipeline_mode = #tpu.pipeline_mode<synchronous>, transform_indices = @transform_3, window_bounds = array<i64: 9, 4, 4>}, {pipeline_mode = #tpu.pipeline_mode<synchronous>, transform_indices = @transform_4, window_bounds = array<i64: 4, 1>}, {pipeline_mode = #tpu.pipeline_mode<synchronous>, transform_indices = @transform_5, window_bounds = array<i64: 4, 1>}, {pipeline_mode = #tpu.pipeline_mode<synchronous>, transform_indices = @transform_6, window_bounds = array<i64: 4, 1>}, {pipeline_mode = #tpu.pipeline_mode<synchronous>, transform_indices = @transform_7, window_bounds = array<i64: 4, 1>}, {pipeline_mode = #tpu.pipeline_mode<synchronous>, transform_indices = @transform_8, window_bounds = array<i64: 4, 1>}, {transform_indices = @transform_9, window_bounds = array<i64: 4, 256>}, {transform_indices = @transform_10, window_bounds = array<i64: 1, 4, 128>}, {transform_indices = @transform_11, window_bounds = array<i64: 1, 4, 128>}]} {
    %0 = tpu.iota {dimensions = array<i32: 1>} : vector<1x256xi32>
    %c16_i32 = arith.constant 16 : i32
    %c0_i32 = arith.constant 0 : i32
    %1 = arith.cmpi eq, %c16_i32, %c0_i32 : i32
    %c1_i32 = arith.constant 1 : i32
    %2 = arith.select %1, %c1_i32, %c16_i32 : i32
    %3 = vector.broadcast %2 : i32 to vector<1x256xi32>
    %4 = arith.remsi %0, %3 : vector<1x256xi32>
    %c0_i32_0 = arith.constant 0 : i32
    %5 = vector.broadcast %c0_i32_0 : i32 to vector<1x256xi32>
    %6 = arith.cmpi ne, %4, %5 : vector<1x256xi32>
    %c0_i32_1 = arith.constant 0 : i32
    %7 = vector.broadcast %c0_i32_1 : i32 to vector<1x256xi32>
    %8 = arith.cmpi slt, %4, %7 : vector<1x256xi32>
    %c0_i32_2 = arith.constant 0 : i32
    %9 = arith.cmpi slt, %2, %c0_i32_2 : i32
    %10 = vector.broadcast %9 : i1 to vector<1x256xi1>
    %11 = vector.broadcast %10 : vector<1x256xi1> to vector<1x256xi1>
    %12 = arith.xori %8, %11 : vector<1x256xi1>
    %13 = arith.andi %12, %6 : vector<1x256xi1>
    %14 = vector.broadcast %2 : i32 to vector<1x256xi32>
    %15 = arith.addi %4, %14 : vector<1x256xi32>
    %16 = arith.select %13, %15, %4 : vector<1x256xi1>, vector<1x256xi32>
    %c4_i32 = arith.constant 4 : i32
    %17 = vector.broadcast %c4_i32 : i32 to vector<1x256xi32>
    %18 = arith.cmpi sge, %16, %17 : vector<1x256xi32>
    %c3_i32 = arith.constant 3 : i32
    %19 = vector.broadcast %c3_i32 : i32 to vector<1x256xi32>
    %20 = arith.cmpi sge, %16, %19 : vector<1x256xi32>
    %c2_i32 = arith.constant 2 : i32
    %21 = vector.broadcast %c2_i32 : i32 to vector<1x256xi32>
    %22 = arith.cmpi sge, %16, %21 : vector<1x256xi32>
    %c1_i32_3 = arith.constant 1 : i32
    %23 = vector.broadcast %c1_i32_3 : i32 to vector<1x256xi32>
    %24 = arith.cmpi sge, %16, %23 : vector<1x256xi32>
    %c15_i32 = arith.constant 15 : i32
    %25 = vector.broadcast %c15_i32 : i32 to vector<1x256xi32>
    %26 = arith.cmpi slt, %16, %25 : vector<1x256xi32>
    %c14_i32 = arith.constant 14 : i32
    %27 = vector.broadcast %c14_i32 : i32 to vector<1x256xi32>
    %28 = arith.cmpi slt, %16, %27 : vector<1x256xi32>
    %c13_i32 = arith.constant 13 : i32
    %29 = vector.broadcast %c13_i32 : i32 to vector<1x256xi32>
    %30 = arith.cmpi slt, %16, %29 : vector<1x256xi32>
    %c12_i32 = arith.constant 12 : i32
    %31 = vector.broadcast %c12_i32 : i32 to vector<1x256xi32>
    %32 = arith.cmpi slt, %16, %31 : vector<1x256xi32>
    %cst = arith.constant 0.000000e+00 : f32
    %33 = vector.broadcast %cst : f32 to vector<4x256xf32>
    %c0 = arith.constant 0 : index
    %c0_4 = arith.constant 0 : index
    %34 = vector.load %arg1[%c0, %c0_4] : memref<4x256xbf16, #tpu.memory_space<vmem>>, vector<4x256xbf16>
    %c0_5 = arith.constant 0 : index
    %c0_6 = arith.constant 0 : index
    %35 = vector.load %arg5[%c0_5, %c0_6] : memref<4x1xf32, #tpu.memory_space<vmem>>, vector<4x1xf32>
    %36 = arith.extf %34 : vector<4x256xbf16> to vector<4x256xf32>
    %37 = vector.broadcast %35 : vector<4x1xf32> to vector<4x256xf32>
    %38 = arith.mulf %36, %37 : vector<4x256xf32>
    %c0_7 = arith.constant 0 : index
    %c0_8 = arith.constant 0 : index
    %39 = vector.load %arg7[%c0_7, %c0_8] : memref<4x1xf32, #tpu.memory_space<vmem>>, vector<4x1xf32>
    %40 = vector.broadcast %39 : vector<4x1xf32> to vector<4x256xf32>
    %41 = arith.addf %38, %40 : vector<4x256xf32>
    %cst_9 = arith.constant 0.000000e+00 : f32
    %42 = vector.broadcast %cst_9 : f32 to vector<4x256xf32>
    %43 = arith.maximumf %41, %42 : vector<4x256xf32>
    %c0_10 = arith.constant 0 : index
    %c0_11 = arith.constant 0 : index
    %c0_12 = arith.constant 0 : index
    %44 = vector.load %arg3[%c0_10, %c0_11, %c0_12] : memref<9x4x4xbf16, #tpu.memory_space<vmem>>, vector<9x4x4xbf16>
    %c4_i32_13 = arith.constant 4 : i32
    %45 = tpu.dynamic_rotate %43 by %c4_i32_13 dim 1 : vector<4x256xf32>, i32 -> vector<4x256xf32>
    %cst_14 = arith.constant 0.000000e+00 : f32
    %46 = vector.shape_cast %18 : vector<1x256xi1> to vector<1x256xi1>
    %47 = vector.broadcast %46 : vector<1x256xi1> to vector<4x256xi1>
    %48 = vector.broadcast %cst_14 : f32 to vector<4x256xf32>
    %49 = arith.select %47, %45, %48 : vector<4x256xi1>, vector<4x256xf32>
    %50 = vector.extract_strided_slice %44 {offsets = [0, 0, 0], sizes = [1, 4, 4], strides = [1, 1, 1]} : vector<9x4x4xbf16> to vector<1x4x4xbf16>
    %51 = vector.shape_cast %50 : vector<1x4x4xbf16> to vector<4x4xbf16>
    %52 = arith.truncf %49 : vector<4x256xf32> to vector<4x256xbf16>
    %cst_15 = arith.constant dense<0.000000e+00> : vector<4x256xf32>
    %53 = tpu.matmul %51, %52, %cst_15 {dimension_numbers = #tpu.dot_dimension_numbers<[1], [0], [0], [1], [0, 0, 1, 1], [], []>} : vector<4x4xbf16>, vector<4x256xbf16>, vector<4x256xf32> -> vector<4x256xf32>
    %54 = arith.addf %33, %53 : vector<4x256xf32>
    %c3_i32_16 = arith.constant 3 : i32
    %55 = tpu.dynamic_rotate %43 by %c3_i32_16 dim 1 : vector<4x256xf32>, i32 -> vector<4x256xf32>
    %cst_17 = arith.constant 0.000000e+00 : f32
    %56 = vector.shape_cast %20 : vector<1x256xi1> to vector<1x256xi1>
    %57 = vector.broadcast %56 : vector<1x256xi1> to vector<4x256xi1>
    %58 = vector.broadcast %cst_17 : f32 to vector<4x256xf32>
    %59 = arith.select %57, %55, %58 : vector<4x256xi1>, vector<4x256xf32>
    %60 = vector.extract_strided_slice %44 {offsets = [1, 0, 0], sizes = [1, 4, 4], strides = [1, 1, 1]} : vector<9x4x4xbf16> to vector<1x4x4xbf16>
    %61 = vector.shape_cast %60 : vector<1x4x4xbf16> to vector<4x4xbf16>
    %62 = arith.truncf %59 : vector<4x256xf32> to vector<4x256xbf16>
    %cst_18 = arith.constant dense<0.000000e+00> : vector<4x256xf32>
    %63 = tpu.matmul %61, %62, %cst_18 {dimension_numbers = #tpu.dot_dimension_numbers<[1], [0], [0], [1], [0, 0, 1, 1], [], []>} : vector<4x4xbf16>, vector<4x256xbf16>, vector<4x256xf32> -> vector<4x256xf32>
    %64 = arith.addf %54, %63 : vector<4x256xf32>
    %c2_i32_19 = arith.constant 2 : i32
    %65 = tpu.dynamic_rotate %43 by %c2_i32_19 dim 1 : vector<4x256xf32>, i32 -> vector<4x256xf32>
    %cst_20 = arith.constant 0.000000e+00 : f32
    %66 = vector.shape_cast %22 : vector<1x256xi1> to vector<1x256xi1>
    %67 = vector.broadcast %66 : vector<1x256xi1> to vector<4x256xi1>
    %68 = vector.broadcast %cst_20 : f32 to vector<4x256xf32>
    %69 = arith.select %67, %65, %68 : vector<4x256xi1>, vector<4x256xf32>
    %70 = vector.extract_strided_slice %44 {offsets = [2, 0, 0], sizes = [1, 4, 4], strides = [1, 1, 1]} : vector<9x4x4xbf16> to vector<1x4x4xbf16>
    %71 = vector.shape_cast %70 : vector<1x4x4xbf16> to vector<4x4xbf16>
    %72 = arith.truncf %69 : vector<4x256xf32> to vector<4x256xbf16>
    %cst_21 = arith.constant dense<0.000000e+00> : vector<4x256xf32>
    %73 = tpu.matmul %71, %72, %cst_21 {dimension_numbers = #tpu.dot_dimension_numbers<[1], [0], [0], [1], [0, 0, 1, 1], [], []>} : vector<4x4xbf16>, vector<4x256xbf16>, vector<4x256xf32> -> vector<4x256xf32>
    %74 = arith.addf %64, %73 : vector<4x256xf32>
    %c1_i32_22 = arith.constant 1 : i32
    %75 = tpu.dynamic_rotate %43 by %c1_i32_22 dim 1 : vector<4x256xf32>, i32 -> vector<4x256xf32>
    %cst_23 = arith.constant 0.000000e+00 : f32
    %76 = vector.shape_cast %24 : vector<1x256xi1> to vector<1x256xi1>
    %77 = vector.broadcast %76 : vector<1x256xi1> to vector<4x256xi1>
    %78 = vector.broadcast %cst_23 : f32 to vector<4x256xf32>
    %79 = arith.select %77, %75, %78 : vector<4x256xi1>, vector<4x256xf32>
    %80 = vector.extract_strided_slice %44 {offsets = [3, 0, 0], sizes = [1, 4, 4], strides = [1, 1, 1]} : vector<9x4x4xbf16> to vector<1x4x4xbf16>
    %81 = vector.shape_cast %80 : vector<1x4x4xbf16> to vector<4x4xbf16>
    %82 = arith.truncf %79 : vector<4x256xf32> to vector<4x256xbf16>
    %cst_24 = arith.constant dense<0.000000e+00> : vector<4x256xf32>
    %83 = tpu.matmul %81, %82, %cst_24 {dimension_numbers = #tpu.dot_dimension_numbers<[1], [0], [0], [1], [0, 0, 1, 1], [], []>} : vector<4x4xbf16>, vector<4x256xbf16>, vector<4x256xf32> -> vector<4x256xf32>
    %84 = arith.addf %74, %83 : vector<4x256xf32>
    %85 = vector.extract_strided_slice %44 {offsets = [4, 0, 0], sizes = [1, 4, 4], strides = [1, 1, 1]} : vector<9x4x4xbf16> to vector<1x4x4xbf16>
    %86 = vector.shape_cast %85 : vector<1x4x4xbf16> to vector<4x4xbf16>
    %87 = arith.truncf %43 : vector<4x256xf32> to vector<4x256xbf16>
    %cst_25 = arith.constant dense<0.000000e+00> : vector<4x256xf32>
    %88 = tpu.matmul %86, %87, %cst_25 {dimension_numbers = #tpu.dot_dimension_numbers<[1], [0], [0], [1], [0, 0, 1, 1], [], []>} : vector<4x4xbf16>, vector<4x256xbf16>, vector<4x256xf32> -> vector<4x256xf32>
    %89 = arith.addf %84, %88 : vector<4x256xf32>
    %c255_i32 = arith.constant 255 : i32
    %90 = tpu.dynamic_rotate %43 by %c255_i32 dim 1 : vector<4x256xf32>, i32 -> vector<4x256xf32>
    %cst_26 = arith.constant 0.000000e+00 : f32
    %91 = vector.shape_cast %26 : vector<1x256xi1> to vector<1x256xi1>
    %92 = vector.broadcast %91 : vector<1x256xi1> to vector<4x256xi1>
    %93 = vector.broadcast %cst_26 : f32 to vector<4x256xf32>
    %94 = arith.select %92, %90, %93 : vector<4x256xi1>, vector<4x256xf32>
    %95 = vector.extract_strided_slice %44 {offsets = [5, 0, 0], sizes = [1, 4, 4], strides = [1, 1, 1]} : vector<9x4x4xbf16> to vector<1x4x4xbf16>
    %96 = vector.shape_cast %95 : vector<1x4x4xbf16> to vector<4x4xbf16>
    %97 = arith.truncf %94 : vector<4x256xf32> to vector<4x256xbf16>
    %cst_27 = arith.constant dense<0.000000e+00> : vector<4x256xf32>
    %98 = tpu.matmul %96, %97, %cst_27 {dimension_numbers = #tpu.dot_dimension_numbers<[1], [0], [0], [1], [0, 0, 1, 1], [], []>} : vector<4x4xbf16>, vector<4x256xbf16>, vector<4x256xf32> -> vector<4x256xf32>
    %99 = arith.addf %89, %98 : vector<4x256xf32>
    %c254_i32 = arith.constant 254 : i32
    %100 = tpu.dynamic_rotate %43 by %c254_i32 dim 1 : vector<4x256xf32>, i32 -> vector<4x256xf32>
    %cst_28 = arith.constant 0.000000e+00 : f32
    %101 = vector.shape_cast %28 : vector<1x256xi1> to vector<1x256xi1>
    %102 = vector.broadcast %101 : vector<1x256xi1> to vector<4x256xi1>
    %103 = vector.broadcast %cst_28 : f32 to vector<4x256xf32>
    %104 = arith.select %102, %100, %103 : vector<4x256xi1>, vector<4x256xf32>
    %105 = vector.extract_strided_slice %44 {offsets = [6, 0, 0], sizes = [1, 4, 4], strides = [1, 1, 1]} : vector<9x4x4xbf16> to vector<1x4x4xbf16>
    %106 = vector.shape_cast %105 : vector<1x4x4xbf16> to vector<4x4xbf16>
    %107 = arith.truncf %104 : vector<4x256xf32> to vector<4x256xbf16>
    %cst_29 = arith.constant dense<0.000000e+00> : vector<4x256xf32>
    %108 = tpu.matmul %106, %107, %cst_29 {dimension_numbers = #tpu.dot_dimension_numbers<[1], [0], [0], [1], [0, 0, 1, 1], [], []>} : vector<4x4xbf16>, vector<4x256xbf16>, vector<4x256xf32> -> vector<4x256xf32>
    %109 = arith.addf %99, %108 : vector<4x256xf32>
    %c253_i32 = arith.constant 253 : i32
    %110 = tpu.dynamic_rotate %43 by %c253_i32 dim 1 : vector<4x256xf32>, i32 -> vector<4x256xf32>
    %cst_30 = arith.constant 0.000000e+00 : f32
    %111 = vector.shape_cast %30 : vector<1x256xi1> to vector<1x256xi1>
    %112 = vector.broadcast %111 : vector<1x256xi1> to vector<4x256xi1>
    %113 = vector.broadcast %cst_30 : f32 to vector<4x256xf32>
    %114 = arith.select %112, %110, %113 : vector<4x256xi1>, vector<4x256xf32>
    %115 = vector.extract_strided_slice %44 {offsets = [7, 0, 0], sizes = [1, 4, 4], strides = [1, 1, 1]} : vector<9x4x4xbf16> to vector<1x4x4xbf16>
    %116 = vector.shape_cast %115 : vector<1x4x4xbf16> to vector<4x4xbf16>
    %117 = arith.truncf %114 : vector<4x256xf32> to vector<4x256xbf16>
    %cst_31 = arith.constant dense<0.000000e+00> : vector<4x256xf32>
    %118 = tpu.matmul %116, %117, %cst_31 {dimension_numbers = #tpu.dot_dimension_numbers<[1], [0], [0], [1], [0, 0, 1, 1], [], []>} : vector<4x4xbf16>, vector<4x256xbf16>, vector<4x256xf32> -> vector<4x256xf32>
    %119 = arith.addf %109, %118 : vector<4x256xf32>
    %c252_i32 = arith.constant 252 : i32
    %120 = tpu.dynamic_rotate %43 by %c252_i32 dim 1 : vector<4x256xf32>, i32 -> vector<4x256xf32>
    %cst_32 = arith.constant 0.000000e+00 : f32
    %121 = vector.shape_cast %32 : vector<1x256xi1> to vector<1x256xi1>
    %122 = vector.broadcast %121 : vector<1x256xi1> to vector<4x256xi1>
    %123 = vector.broadcast %cst_32 : f32 to vector<4x256xf32>
    %124 = arith.select %122, %120, %123 : vector<4x256xi1>, vector<4x256xf32>
    %125 = vector.extract_strided_slice %44 {offsets = [8, 0, 0], sizes = [1, 4, 4], strides = [1, 1, 1]} : vector<9x4x4xbf16> to vector<1x4x4xbf16>
    %126 = vector.shape_cast %125 : vector<1x4x4xbf16> to vector<4x4xbf16>
    %127 = arith.truncf %124 : vector<4x256xf32> to vector<4x256xbf16>
    %cst_33 = arith.constant dense<0.000000e+00> : vector<4x256xf32>
    %128 = tpu.matmul %126, %127, %cst_33 {dimension_numbers = #tpu.dot_dimension_numbers<[1], [0], [0], [1], [0, 0, 1, 1], [], []>} : vector<4x4xbf16>, vector<4x256xbf16>, vector<4x256xf32> -> vector<4x256xf32>
    %129 = arith.addf %119, %128 : vector<4x256xf32>
    %c0_34 = arith.constant 0 : index
    %c0_35 = arith.constant 0 : index
    %130 = vector.load %arg2[%c0_34, %c0_35] : memref<4x256xbf16, #tpu.memory_space<vmem>>, vector<4x256xbf16>
    %c0_36 = arith.constant 0 : index
    %c0_37 = arith.constant 0 : index
    %131 = vector.load %arg6[%c0_36, %c0_37] : memref<4x1xf32, #tpu.memory_space<vmem>>, vector<4x1xf32>
    %132 = arith.extf %130 : vector<4x256xbf16> to vector<4x256xf32>
    %133 = vector.broadcast %131 : vector<4x1xf32> to vector<4x256xf32>
    %134 = arith.mulf %132, %133 : vector<4x256xf32>
    %c0_38 = arith.constant 0 : index
    %c0_39 = arith.constant 0 : index
    %135 = vector.load %arg8[%c0_38, %c0_39] : memref<4x1xf32, #tpu.memory_space<vmem>>, vector<4x1xf32>
    %136 = vector.broadcast %135 : vector<4x1xf32> to vector<4x256xf32>
    %137 = arith.addf %134, %136 : vector<4x256xf32>
    %cst_40 = arith.constant 0.000000e+00 : f32
    %138 = vector.broadcast %cst_40 : f32 to vector<4x256xf32>
    %139 = arith.maximumf %137, %138 : vector<4x256xf32>
    %c0_41 = arith.constant 0 : index
    %c0_42 = arith.constant 0 : index
    %c0_43 = arith.constant 0 : index
    %140 = vector.load %arg4[%c0_41, %c0_42, %c0_43] : memref<9x4x4xbf16, #tpu.memory_space<vmem>>, vector<9x4x4xbf16>
    %c4_i32_44 = arith.constant 4 : i32
    %141 = tpu.dynamic_rotate %139 by %c4_i32_44 dim 1 : vector<4x256xf32>, i32 -> vector<4x256xf32>
    %cst_45 = arith.constant 0.000000e+00 : f32
    %142 = vector.shape_cast %18 : vector<1x256xi1> to vector<1x256xi1>
    %143 = vector.broadcast %142 : vector<1x256xi1> to vector<4x256xi1>
    %144 = vector.broadcast %cst_45 : f32 to vector<4x256xf32>
    %145 = arith.select %143, %141, %144 : vector<4x256xi1>, vector<4x256xf32>
    %146 = vector.extract_strided_slice %140 {offsets = [0, 0, 0], sizes = [1, 4, 4], strides = [1, 1, 1]} : vector<9x4x4xbf16> to vector<1x4x4xbf16>
    %147 = vector.shape_cast %146 : vector<1x4x4xbf16> to vector<4x4xbf16>
    %148 = arith.truncf %145 : vector<4x256xf32> to vector<4x256xbf16>
    %cst_46 = arith.constant dense<0.000000e+00> : vector<4x256xf32>
    %149 = tpu.matmul %147, %148, %cst_46 {dimension_numbers = #tpu.dot_dimension_numbers<[1], [0], [0], [1], [0, 0, 1, 1], [], []>} : vector<4x4xbf16>, vector<4x256xbf16>, vector<4x256xf32> -> vector<4x256xf32>
    %150 = arith.addf %129, %149 : vector<4x256xf32>
    %c3_i32_47 = arith.constant 3 : i32
    %151 = tpu.dynamic_rotate %139 by %c3_i32_47 dim 1 : vector<4x256xf32>, i32 -> vector<4x256xf32>
    %cst_48 = arith.constant 0.000000e+00 : f32
    %152 = vector.shape_cast %20 : vector<1x256xi1> to vector<1x256xi1>
    %153 = vector.broadcast %152 : vector<1x256xi1> to vector<4x256xi1>
    %154 = vector.broadcast %cst_48 : f32 to vector<4x256xf32>
    %155 = arith.select %153, %151, %154 : vector<4x256xi1>, vector<4x256xf32>
    %156 = vector.extract_strided_slice %140 {offsets = [1, 0, 0], sizes = [1, 4, 4], strides = [1, 1, 1]} : vector<9x4x4xbf16> to vector<1x4x4xbf16>
    %157 = vector.shape_cast %156 : vector<1x4x4xbf16> to vector<4x4xbf16>
    %158 = arith.truncf %155 : vector<4x256xf32> to vector<4x256xbf16>
    %cst_49 = arith.constant dense<0.000000e+00> : vector<4x256xf32>
    %159 = tpu.matmul %157, %158, %cst_49 {dimension_numbers = #tpu.dot_dimension_numbers<[1], [0], [0], [1], [0, 0, 1, 1], [], []>} : vector<4x4xbf16>, vector<4x256xbf16>, vector<4x256xf32> -> vector<4x256xf32>
    %160 = arith.addf %150, %159 : vector<4x256xf32>
    %c2_i32_50 = arith.constant 2 : i32
    %161 = tpu.dynamic_rotate %139 by %c2_i32_50 dim 1 : vector<4x256xf32>, i32 -> vector<4x256xf32>
    %cst_51 = arith.constant 0.000000e+00 : f32
    %162 = vector.shape_cast %22 : vector<1x256xi1> to vector<1x256xi1>
    %163 = vector.broadcast %162 : vector<1x256xi1> to vector<4x256xi1>
    %164 = vector.broadcast %cst_51 : f32 to vector<4x256xf32>
    %165 = arith.select %163, %161, %164 : vector<4x256xi1>, vector<4x256xf32>
    %166 = vector.extract_strided_slice %140 {offsets = [2, 0, 0], sizes = [1, 4, 4], strides = [1, 1, 1]} : vector<9x4x4xbf16> to vector<1x4x4xbf16>
    %167 = vector.shape_cast %166 : vector<1x4x4xbf16> to vector<4x4xbf16>
    %168 = arith.truncf %165 : vector<4x256xf32> to vector<4x256xbf16>
    %cst_52 = arith.constant dense<0.000000e+00> : vector<4x256xf32>
    %169 = tpu.matmul %167, %168, %cst_52 {dimension_numbers = #tpu.dot_dimension_numbers<[1], [0], [0], [1], [0, 0, 1, 1], [], []>} : vector<4x4xbf16>, vector<4x256xbf16>, vector<4x256xf32> -> vector<4x256xf32>
    %170 = arith.addf %160, %169 : vector<4x256xf32>
    %c1_i32_53 = arith.constant 1 : i32
    %171 = tpu.dynamic_rotate %139 by %c1_i32_53 dim 1 : vector<4x256xf32>, i32 -> vector<4x256xf32>
    %cst_54 = arith.constant 0.000000e+00 : f32
    %172 = vector.shape_cast %24 : vector<1x256xi1> to vector<1x256xi1>
    %173 = vector.broadcast %172 : vector<1x256xi1> to vector<4x256xi1>
    %174 = vector.broadcast %cst_54 : f32 to vector<4x256xf32>
    %175 = arith.select %173, %171, %174 : vector<4x256xi1>, vector<4x256xf32>
    %176 = vector.extract_strided_slice %140 {offsets = [3, 0, 0], sizes = [1, 4, 4], strides = [1, 1, 1]} : vector<9x4x4xbf16> to vector<1x4x4xbf16>
    %177 = vector.shape_cast %176 : vector<1x4x4xbf16> to vector<4x4xbf16>
    %178 = arith.truncf %175 : vector<4x256xf32> to vector<4x256xbf16>
    %cst_55 = arith.constant dense<0.000000e+00> : vector<4x256xf32>
    %179 = tpu.matmul %177, %178, %cst_55 {dimension_numbers = #tpu.dot_dimension_numbers<[1], [0], [0], [1], [0, 0, 1, 1], [], []>} : vector<4x4xbf16>, vector<4x256xbf16>, vector<4x256xf32> -> vector<4x256xf32>
    %180 = arith.addf %170, %179 : vector<4x256xf32>
    %181 = vector.extract_strided_slice %140 {offsets = [4, 0, 0], sizes = [1, 4, 4], strides = [1, 1, 1]} : vector<9x4x4xbf16> to vector<1x4x4xbf16>
    %182 = vector.shape_cast %181 : vector<1x4x4xbf16> to vector<4x4xbf16>
    %183 = arith.truncf %139 : vector<4x256xf32> to vector<4x256xbf16>
    %cst_56 = arith.constant dense<0.000000e+00> : vector<4x256xf32>
    %184 = tpu.matmul %182, %183, %cst_56 {dimension_numbers = #tpu.dot_dimension_numbers<[1], [0], [0], [1], [0, 0, 1, 1], [], []>} : vector<4x4xbf16>, vector<4x256xbf16>, vector<4x256xf32> -> vector<4x256xf32>
    %185 = arith.addf %180, %184 : vector<4x256xf32>
    %c255_i32_57 = arith.constant 255 : i32
    %186 = tpu.dynamic_rotate %139 by %c255_i32_57 dim 1 : vector<4x256xf32>, i32 -> vector<4x256xf32>
    %cst_58 = arith.constant 0.000000e+00 : f32
    %187 = vector.shape_cast %26 : vector<1x256xi1> to vector<1x256xi1>
    %188 = vector.broadcast %187 : vector<1x256xi1> to vector<4x256xi1>
    %189 = vector.broadcast %cst_58 : f32 to vector<4x256xf32>
    %190 = arith.select %188, %186, %189 : vector<4x256xi1>, vector<4x256xf32>
    %191 = vector.extract_strided_slice %140 {offsets = [5, 0, 0], sizes = [1, 4, 4], strides = [1, 1, 1]} : vector<9x4x4xbf16> to vector<1x4x4xbf16>
    %192 = vector.shape_cast %191 : vector<1x4x4xbf16> to vector<4x4xbf16>
    %193 = arith.truncf %190 : vector<4x256xf32> to vector<4x256xbf16>
    %cst_59 = arith.constant dense<0.000000e+00> : vector<4x256xf32>
    %194 = tpu.matmul %192, %193, %cst_59 {dimension_numbers = #tpu.dot_dimension_numbers<[1], [0], [0], [1], [0, 0, 1, 1], [], []>} : vector<4x4xbf16>, vector<4x256xbf16>, vector<4x256xf32> -> vector<4x256xf32>
    %195 = arith.addf %185, %194 : vector<4x256xf32>
    %c254_i32_60 = arith.constant 254 : i32
    %196 = tpu.dynamic_rotate %139 by %c254_i32_60 dim 1 : vector<4x256xf32>, i32 -> vector<4x256xf32>
    %cst_61 = arith.constant 0.000000e+00 : f32
    %197 = vector.shape_cast %28 : vector<1x256xi1> to vector<1x256xi1>
    %198 = vector.broadcast %197 : vector<1x256xi1> to vector<4x256xi1>
    %199 = vector.broadcast %cst_61 : f32 to vector<4x256xf32>
    %200 = arith.select %198, %196, %199 : vector<4x256xi1>, vector<4x256xf32>
    %201 = vector.extract_strided_slice %140 {offsets = [6, 0, 0], sizes = [1, 4, 4], strides = [1, 1, 1]} : vector<9x4x4xbf16> to vector<1x4x4xbf16>
    %202 = vector.shape_cast %201 : vector<1x4x4xbf16> to vector<4x4xbf16>
    %203 = arith.truncf %200 : vector<4x256xf32> to vector<4x256xbf16>
    %cst_62 = arith.constant dense<0.000000e+00> : vector<4x256xf32>
    %204 = tpu.matmul %202, %203, %cst_62 {dimension_numbers = #tpu.dot_dimension_numbers<[1], [0], [0], [1], [0, 0, 1, 1], [], []>} : vector<4x4xbf16>, vector<4x256xbf16>, vector<4x256xf32> -> vector<4x256xf32>
    %205 = arith.addf %195, %204 : vector<4x256xf32>
    %c253_i32_63 = arith.constant 253 : i32
    %206 = tpu.dynamic_rotate %139 by %c253_i32_63 dim 1 : vector<4x256xf32>, i32 -> vector<4x256xf32>
    %cst_64 = arith.constant 0.000000e+00 : f32
    %207 = vector.shape_cast %30 : vector<1x256xi1> to vector<1x256xi1>
    %208 = vector.broadcast %207 : vector<1x256xi1> to vector<4x256xi1>
    %209 = vector.broadcast %cst_64 : f32 to vector<4x256xf32>
    %210 = arith.select %208, %206, %209 : vector<4x256xi1>, vector<4x256xf32>
    %211 = vector.extract_strided_slice %140 {offsets = [7, 0, 0], sizes = [1, 4, 4], strides = [1, 1, 1]} : vector<9x4x4xbf16> to vector<1x4x4xbf16>
    %212 = vector.shape_cast %211 : vector<1x4x4xbf16> to vector<4x4xbf16>
    %213 = arith.truncf %210 : vector<4x256xf32> to vector<4x256xbf16>
    %cst_65 = arith.constant dense<0.000000e+00> : vector<4x256xf32>
    %214 = tpu.matmul %212, %213, %cst_65 {dimension_numbers = #tpu.dot_dimension_numbers<[1], [0], [0], [1], [0, 0, 1, 1], [], []>} : vector<4x4xbf16>, vector<4x256xbf16>, vector<4x256xf32> -> vector<4x256xf32>
    %215 = arith.addf %205, %214 : vector<4x256xf32>
    %c252_i32_66 = arith.constant 252 : i32
    %216 = tpu.dynamic_rotate %139 by %c252_i32_66 dim 1 : vector<4x256xf32>, i32 -> vector<4x256xf32>
    %cst_67 = arith.constant 0.000000e+00 : f32
    %217 = vector.shape_cast %32 : vector<1x256xi1> to vector<1x256xi1>
    %218 = vector.broadcast %217 : vector<1x256xi1> to vector<4x256xi1>
    %219 = vector.broadcast %cst_67 : f32 to vector<4x256xf32>
    %220 = arith.select %218, %216, %219 : vector<4x256xi1>, vector<4x256xf32>
    %221 = vector.extract_strided_slice %140 {offsets = [8, 0, 0], sizes = [1, 4, 4], strides = [1, 1, 1]} : vector<9x4x4xbf16> to vector<1x4x4xbf16>
    %222 = vector.shape_cast %221 : vector<1x4x4xbf16> to vector<4x4xbf16>
    %223 = arith.truncf %220 : vector<4x256xf32> to vector<4x256xbf16>
    %cst_68 = arith.constant dense<0.000000e+00> : vector<4x256xf32>
    %224 = tpu.matmul %222, %223, %cst_68 {dimension_numbers = #tpu.dot_dimension_numbers<[1], [0], [0], [1], [0, 0, 1, 1], [], []>} : vector<4x4xbf16>, vector<4x256xbf16>, vector<4x256xf32> -> vector<4x256xf32>
    %225 = arith.addf %215, %224 : vector<4x256xf32>
    %c0_69 = arith.constant 0 : index
    %c0_70 = arith.constant 0 : index
    %226 = vector.load %arg9[%c0_69, %c0_70] : memref<4x1xf32, #tpu.memory_space<vmem>>, vector<4x1xf32>
    %227 = vector.broadcast %226 : vector<4x1xf32> to vector<4x256xf32>
    %228 = arith.addf %225, %227 : vector<4x256xf32>
    %229 = arith.truncf %228 : vector<4x256xf32> to vector<4x256xbf16>
    %c0_71 = arith.constant 0 : index
    %c0_72 = arith.constant 0 : index
    %230 = vector.load %arg10[%c0_71, %c0_72] : memref<4x256xbf16, #tpu.memory_space<vmem>>, vector<4x256xbf16>
    tpu.vector_store %arg10[%c0_71, %c0_72], %229 {strides = array<i32>} : memref<4x256xbf16, #tpu.memory_space<vmem>>, vector<4x256xbf16>,
    %231 = arith.extf %229 : vector<4x256xbf16> to vector<4x256xf32>
    %232 = vector.extract_strided_slice %231 {offsets = [0, 0], sizes = [4, 128], strides = [1, 1]} : vector<4x256xf32> to vector<4x128xf32>
    %233 = arith.mulf %232, %232 : vector<4x128xf32>
    %234 = vector.extract_strided_slice %231 {offsets = [0, 128], sizes = [4, 128], strides = [1, 1]} : vector<4x256xf32> to vector<4x128xf32>
    %235 = arith.addf %232, %234 : vector<4x128xf32>
    %236 = arith.mulf %234, %234 : vector<4x128xf32>
    %237 = arith.addf %233, %236 : vector<4x128xf32>
    %238 = vector.shape_cast %235 : vector<4x128xf32> to vector<1x4x128xf32>
    %c0_73 = arith.constant 0 : index
    %c0_74 = arith.constant 0 : index
    %c0_75 = arith.constant 0 : index
    %239 = vector.load %arg11[%c0_73, %c0_74, %c0_75] : memref<1x4x128xf32, #tpu.memory_space<vmem>>, vector<1x4x128xf32>
    tpu.vector_store %arg11[%c0_73, %c0_74, %c0_75], %238 {strides = array<i32>} : memref<1x4x128xf32, #tpu.memory_space<vmem>>, vector<1x4x128xf32>,
    %240 = vector.shape_cast %237 : vector<4x128xf32> to vector<1x4x128xf32>
    %c0_76 = arith.constant 0 : index
    %c0_77 = arith.constant 0 : index
    %c0_78 = arith.constant 0 : index
    %241 = vector.load %arg12[%c0_76, %c0_77, %c0_78] : memref<1x4x128xf32, #tpu.memory_space<vmem>>, vector<1x4x128xf32>
    tpu.vector_store %arg12[%c0_76, %c0_77, %c0_78], %240 {strides = array<i32>} : memref<1x4x128xf32, #tpu.memory_space<vmem>>, vector<1x4x128xf32>,
    return
  }
  func.func @transform_0(%arg0: i32) -> (i32, i32) {
    %c0_i32 = arith.constant 0 : i32
    %c0_i32_0 = arith.constant 0 : i32
    return %c0_i32, %arg0 : i32, i32
  }
  func.func @transform_1(%arg0: i32) -> (i32, i32) {
    %c0_i32 = arith.constant 0 : i32
    %c0_i32_0 = arith.constant 0 : i32
    return %c0_i32, %arg0 : i32, i32
  }
  func.func @transform_2(%arg0: i32) -> (i32, i32, i32) {
    %c0_i32 = arith.constant 0 : i32
    %c0_i32_0 = arith.constant 0 : i32
    %c0_i32_1 = arith.constant 0 : i32
    %c0_i32_2 = arith.constant 0 : i32
    return %c0_i32, %c0_i32_0, %c0_i32_1 : i32, i32, i32
  }
  func.func @transform_3(%arg0: i32) -> (i32, i32, i32) {
    %c0_i32 = arith.constant 0 : i32
    %c0_i32_0 = arith.constant 0 : i32
    %c0_i32_1 = arith.constant 0 : i32
    %c0_i32_2 = arith.constant 0 : i32
    return %c0_i32, %c0_i32_0, %c0_i32_1 : i32, i32, i32
  }
  func.func @transform_4(%arg0: i32) -> (i32, i32) {
    %c0_i32 = arith.constant 0 : i32
    %c0_i32_0 = arith.constant 0 : i32
    %c0_i32_1 = arith.constant 0 : i32
    return %c0_i32, %c0_i32_0 : i32, i32
  }
  func.func @transform_5(%arg0: i32) -> (i32, i32) {
    %c0_i32 = arith.constant 0 : i32
    %c0_i32_0 = arith.constant 0 : i32
    %c0_i32_1 = arith.constant 0 : i32
    return %c0_i32, %c0_i32_0 : i32, i32
  }
  func.func @transform_6(%arg0: i32) -> (i32, i32) {
    %c0_i32 = arith.constant 0 : i32
    %c0_i32_0 = arith.constant 0 : i32
    %c0_i32_1 = arith.constant 0 : i32
    return %c0_i32, %c0_i32_0 : i32, i32
  }
  func.func @transform_7(%arg0: i32) -> (i32, i32) {
    %c0_i32 = arith.constant 0 : i32
    %c0_i32_0 = arith.constant 0 : i32
    %c0_i32_1 = arith.constant 0 : i32
    return %c0_i32, %c0_i32_0 : i32, i32
  }
  func.func @transform_8(%arg0: i32) -> (i32, i32) {
    %c0_i32 = arith.constant 0 : i32
    %c0_i32_0 = arith.constant 0 : i32
    %c0_i32_1 = arith.constant 0 : i32
    return %c0_i32, %c0_i32_0 : i32, i32
  }
  func.func @transform_9(%arg0: i32) -> (i32, i32) {
    %c0_i32 = arith.constant 0 : i32
    %c0_i32_0 = arith.constant 0 : i32
    return %c0_i32, %arg0 : i32, i32
  }
  func.func @transform_10(%arg0: i32) -> (i32, i32, i32) {
    %c0_i32 = arith.constant 0 : i32
    %c0_i32_0 = arith.constant 0 : i32
    %c0_i32_1 = arith.constant 0 : i32
    return %arg0, %c0_i32, %c0_i32_0 : i32, i32, i32
  }
  func.func @transform_11(%arg0: i32) -> (i32, i32, i32) {
    %c0_i32 = arith.constant 0 : i32
    %c0_i32_0 = arith.constant 0 : i32
    %c0_i32_1 = arith.constant 0 : i32
    return %arg0, %c0_i32, %c0_i32_0 : i32, i32, i32
  }
}

module attributes {stable_mosaic.version = 11 : i64} {
  func.func @basic_block_kernel(%arg0: i32, %arg1: memref<4x256xbf16, #tpu.memory_space<vmem>>, %arg2: memref<4x256xbf16, #tpu.memory_space<vmem>>, %arg3: memref<4x256xbf16, #tpu.memory_space<vmem>>, %arg4: memref<9x4x4xbf16, #tpu.memory_space<vmem>>, %arg5: memref<9x4x4xbf16, #tpu.memory_space<vmem>>, %arg6: memref<9x4x4xbf16, #tpu.memory_space<vmem>>, %arg7: memref<4x1xf32, #tpu.memory_space<vmem>>, %arg8: memref<4x1xf32, #tpu.memory_space<vmem>>, %arg9: memref<4x1xf32, #tpu.memory_space<vmem>>, %arg10: memref<4x1xf32, #tpu.memory_space<vmem>>, %arg11: memref<4x1xf32, #tpu.memory_space<vmem>>, %arg12: memref<4x1xf32, #tpu.memory_space<vmem>>, %arg13: memref<4x1xf32, #tpu.memory_space<vmem>>, %arg14: memref<4x256xbf16, #tpu.memory_space<vmem>>, %arg15: memref<1x4x128xf32, #tpu.memory_space<vmem>>, %arg16: memref<1x4x128xf32, #tpu.memory_space<vmem>>) attributes {dimension_semantics = [#tpu.dimension_semantics<parallel>], iteration_bounds = array<i64: 1>, scalar_prefetch = 0 : i64, scratch_operands = 0 : i64, tpu.core_type = #tpu.core_type<tc>, window_params = [{transform_indices = @transform_0, window_bounds = array<i64: 4, 256>}, {transform_indices = @transform_1, window_bounds = array<i64: 4, 256>}, {transform_indices = @transform_2, window_bounds = array<i64: 4, 256>}, {pipeline_mode = #tpu.pipeline_mode<synchronous>, transform_indices = @transform_3, window_bounds = array<i64: 9, 4, 4>}, {pipeline_mode = #tpu.pipeline_mode<synchronous>, transform_indices = @transform_4, window_bounds = array<i64: 9, 4, 4>}, {pipeline_mode = #tpu.pipeline_mode<synchronous>, transform_indices = @transform_5, window_bounds = array<i64: 9, 4, 4>}, {pipeline_mode = #tpu.pipeline_mode<synchronous>, transform_indices = @transform_6, window_bounds = array<i64: 4, 1>}, {pipeline_mode = #tpu.pipeline_mode<synchronous>, transform_indices = @transform_7, window_bounds = array<i64: 4, 1>}, {pipeline_mode = #tpu.pipeline_mode<synchronous>, transform_indices = @transform_8, window_bounds = array<i64: 4, 1>}, {pipeline_mode = #tpu.pipeline_mode<synchronous>, transform_indices = @transform_9, window_bounds = array<i64: 4, 1>}, {pipeline_mode = #tpu.pipeline_mode<synchronous>, transform_indices = @transform_10, window_bounds = array<i64: 4, 1>}, {pipeline_mode = #tpu.pipeline_mode<synchronous>, transform_indices = @transform_11, window_bounds = array<i64: 4, 1>}, {pipeline_mode = #tpu.pipeline_mode<synchronous>, transform_indices = @transform_12, window_bounds = array<i64: 4, 1>}, {transform_indices = @transform_13, window_bounds = array<i64: 4, 256>}, {transform_indices = @transform_14, window_bounds = array<i64: 1, 4, 128>}, {transform_indices = @transform_15, window_bounds = array<i64: 1, 4, 128>}]} {
    %0 = tpu.iota {dimensions = array<i32: 1>} : vector<1x256xi32>
    %c16_i32 = arith.constant 16 : i32
    %c0_i32 = arith.constant 0 : i32
    %1 = arith.cmpi eq, %c16_i32, %c0_i32 : i32
    %c1_i32 = arith.constant 1 : i32
    %2 = arith.select %1, %c1_i32, %c16_i32 : i32
    %3 = vector.broadcast %2 : i32 to vector<1x256xi32>
    %4 = arith.remsi %0, %3 : vector<1x256xi32>
    %c0_i32_0 = arith.constant 0 : i32
    %5 = vector.broadcast %c0_i32_0 : i32 to vector<1x256xi32>
    %6 = arith.cmpi ne, %4, %5 : vector<1x256xi32>
    %c0_i32_1 = arith.constant 0 : i32
    %7 = vector.broadcast %c0_i32_1 : i32 to vector<1x256xi32>
    %8 = arith.cmpi slt, %4, %7 : vector<1x256xi32>
    %c0_i32_2 = arith.constant 0 : i32
    %9 = arith.cmpi slt, %2, %c0_i32_2 : i32
    %10 = vector.broadcast %9 : i1 to vector<1x256xi1>
    %11 = vector.broadcast %10 : vector<1x256xi1> to vector<1x256xi1>
    %12 = arith.xori %8, %11 : vector<1x256xi1>
    %13 = arith.andi %12, %6 : vector<1x256xi1>
    %14 = vector.broadcast %2 : i32 to vector<1x256xi32>
    %15 = arith.addi %4, %14 : vector<1x256xi32>
    %16 = arith.select %13, %15, %4 : vector<1x256xi1>, vector<1x256xi32>
    %c4_i32 = arith.constant 4 : i32
    %17 = vector.broadcast %c4_i32 : i32 to vector<1x256xi32>
    %18 = arith.cmpi sge, %16, %17 : vector<1x256xi32>
    %c3_i32 = arith.constant 3 : i32
    %19 = vector.broadcast %c3_i32 : i32 to vector<1x256xi32>
    %20 = arith.cmpi sge, %16, %19 : vector<1x256xi32>
    %c2_i32 = arith.constant 2 : i32
    %21 = vector.broadcast %c2_i32 : i32 to vector<1x256xi32>
    %22 = arith.cmpi sge, %16, %21 : vector<1x256xi32>
    %c1_i32_3 = arith.constant 1 : i32
    %23 = vector.broadcast %c1_i32_3 : i32 to vector<1x256xi32>
    %24 = arith.cmpi sge, %16, %23 : vector<1x256xi32>
    %c15_i32 = arith.constant 15 : i32
    %25 = vector.broadcast %c15_i32 : i32 to vector<1x256xi32>
    %26 = arith.cmpi slt, %16, %25 : vector<1x256xi32>
    %c14_i32 = arith.constant 14 : i32
    %27 = vector.broadcast %c14_i32 : i32 to vector<1x256xi32>
    %28 = arith.cmpi slt, %16, %27 : vector<1x256xi32>
    %c13_i32 = arith.constant 13 : i32
    %29 = vector.broadcast %c13_i32 : i32 to vector<1x256xi32>
    %30 = arith.cmpi slt, %16, %29 : vector<1x256xi32>
    %c12_i32 = arith.constant 12 : i32
    %31 = vector.broadcast %c12_i32 : i32 to vector<1x256xi32>
    %32 = arith.cmpi slt, %16, %31 : vector<1x256xi32>
    %cst = arith.constant 0.000000e+00 : f32
    %33 = vector.broadcast %cst : f32 to vector<4x256xf32>
    %c0 = arith.constant 0 : index
    %c0_4 = arith.constant 0 : index
    %34 = vector.load %arg1[%c0, %c0_4] : memref<4x256xbf16, #tpu.memory_space<vmem>>, vector<4x256xbf16>
    %c0_5 = arith.constant 0 : index
    %c0_6 = arith.constant 0 : index
    %35 = vector.load %arg7[%c0_5, %c0_6] : memref<4x1xf32, #tpu.memory_space<vmem>>, vector<4x1xf32>
    %36 = arith.extf %34 : vector<4x256xbf16> to vector<4x256xf32>
    %37 = vector.broadcast %35 : vector<4x1xf32> to vector<4x256xf32>
    %38 = arith.mulf %36, %37 : vector<4x256xf32>
    %c0_7 = arith.constant 0 : index
    %c0_8 = arith.constant 0 : index
    %39 = vector.load %arg10[%c0_7, %c0_8] : memref<4x1xf32, #tpu.memory_space<vmem>>, vector<4x1xf32>
    %40 = vector.broadcast %39 : vector<4x1xf32> to vector<4x256xf32>
    %41 = arith.addf %38, %40 : vector<4x256xf32>
    %cst_9 = arith.constant 0.000000e+00 : f32
    %42 = vector.broadcast %cst_9 : f32 to vector<4x256xf32>
    %43 = arith.maximumf %41, %42 : vector<4x256xf32>
    %c0_10 = arith.constant 0 : index
    %c0_11 = arith.constant 0 : index
    %c0_12 = arith.constant 0 : index
    %44 = vector.load %arg4[%c0_10, %c0_11, %c0_12] : memref<9x4x4xbf16, #tpu.memory_space<vmem>>, vector<9x4x4xbf16>
    %c4_i32_13 = arith.constant 4 : i32
    %45 = tpu.dynamic_rotate %43 by %c4_i32_13 dim 1 : vector<4x256xf32>, i32 -> vector<4x256xf32>
    %cst_14 = arith.constant 0.000000e+00 : f32
    %46 = vector.shape_cast %18 : vector<1x256xi1> to vector<1x256xi1>
    %47 = vector.broadcast %46 : vector<1x256xi1> to vector<4x256xi1>
    %48 = vector.broadcast %cst_14 : f32 to vector<4x256xf32>
    %49 = arith.select %47, %45, %48 : vector<4x256xi1>, vector<4x256xf32>
    %50 = vector.extract_strided_slice %44 {offsets = [0, 0, 0], sizes = [1, 4, 4], strides = [1, 1, 1]} : vector<9x4x4xbf16> to vector<1x4x4xbf16>
    %51 = vector.shape_cast %50 : vector<1x4x4xbf16> to vector<4x4xbf16>
    %52 = arith.truncf %49 : vector<4x256xf32> to vector<4x256xbf16>
    %cst_15 = arith.constant dense<0.000000e+00> : vector<4x256xf32>
    %53 = tpu.matmul %51, %52, %cst_15 {dimension_numbers = #tpu.dot_dimension_numbers<[1], [0], [0], [1], [0, 0, 1, 1], [], []>} : vector<4x4xbf16>, vector<4x256xbf16>, vector<4x256xf32> -> vector<4x256xf32>
    %54 = arith.addf %33, %53 : vector<4x256xf32>
    %c3_i32_16 = arith.constant 3 : i32
    %55 = tpu.dynamic_rotate %43 by %c3_i32_16 dim 1 : vector<4x256xf32>, i32 -> vector<4x256xf32>
    %cst_17 = arith.constant 0.000000e+00 : f32
    %56 = vector.shape_cast %20 : vector<1x256xi1> to vector<1x256xi1>
    %57 = vector.broadcast %56 : vector<1x256xi1> to vector<4x256xi1>
    %58 = vector.broadcast %cst_17 : f32 to vector<4x256xf32>
    %59 = arith.select %57, %55, %58 : vector<4x256xi1>, vector<4x256xf32>
    %60 = vector.extract_strided_slice %44 {offsets = [1, 0, 0], sizes = [1, 4, 4], strides = [1, 1, 1]} : vector<9x4x4xbf16> to vector<1x4x4xbf16>
    %61 = vector.shape_cast %60 : vector<1x4x4xbf16> to vector<4x4xbf16>
    %62 = arith.truncf %59 : vector<4x256xf32> to vector<4x256xbf16>
    %cst_18 = arith.constant dense<0.000000e+00> : vector<4x256xf32>
    %63 = tpu.matmul %61, %62, %cst_18 {dimension_numbers = #tpu.dot_dimension_numbers<[1], [0], [0], [1], [0, 0, 1, 1], [], []>} : vector<4x4xbf16>, vector<4x256xbf16>, vector<4x256xf32> -> vector<4x256xf32>
    %64 = arith.addf %54, %63 : vector<4x256xf32>
    %c2_i32_19 = arith.constant 2 : i32
    %65 = tpu.dynamic_rotate %43 by %c2_i32_19 dim 1 : vector<4x256xf32>, i32 -> vector<4x256xf32>
    %cst_20 = arith.constant 0.000000e+00 : f32
    %66 = vector.shape_cast %22 : vector<1x256xi1> to vector<1x256xi1>
    %67 = vector.broadcast %66 : vector<1x256xi1> to vector<4x256xi1>
    %68 = vector.broadcast %cst_20 : f32 to vector<4x256xf32>
    %69 = arith.select %67, %65, %68 : vector<4x256xi1>, vector<4x256xf32>
    %70 = vector.extract_strided_slice %44 {offsets = [2, 0, 0], sizes = [1, 4, 4], strides = [1, 1, 1]} : vector<9x4x4xbf16> to vector<1x4x4xbf16>
    %71 = vector.shape_cast %70 : vector<1x4x4xbf16> to vector<4x4xbf16>
    %72 = arith.truncf %69 : vector<4x256xf32> to vector<4x256xbf16>
    %cst_21 = arith.constant dense<0.000000e+00> : vector<4x256xf32>
    %73 = tpu.matmul %71, %72, %cst_21 {dimension_numbers = #tpu.dot_dimension_numbers<[1], [0], [0], [1], [0, 0, 1, 1], [], []>} : vector<4x4xbf16>, vector<4x256xbf16>, vector<4x256xf32> -> vector<4x256xf32>
    %74 = arith.addf %64, %73 : vector<4x256xf32>
    %c1_i32_22 = arith.constant 1 : i32
    %75 = tpu.dynamic_rotate %43 by %c1_i32_22 dim 1 : vector<4x256xf32>, i32 -> vector<4x256xf32>
    %cst_23 = arith.constant 0.000000e+00 : f32
    %76 = vector.shape_cast %24 : vector<1x256xi1> to vector<1x256xi1>
    %77 = vector.broadcast %76 : vector<1x256xi1> to vector<4x256xi1>
    %78 = vector.broadcast %cst_23 : f32 to vector<4x256xf32>
    %79 = arith.select %77, %75, %78 : vector<4x256xi1>, vector<4x256xf32>
    %80 = vector.extract_strided_slice %44 {offsets = [3, 0, 0], sizes = [1, 4, 4], strides = [1, 1, 1]} : vector<9x4x4xbf16> to vector<1x4x4xbf16>
    %81 = vector.shape_cast %80 : vector<1x4x4xbf16> to vector<4x4xbf16>
    %82 = arith.truncf %79 : vector<4x256xf32> to vector<4x256xbf16>
    %cst_24 = arith.constant dense<0.000000e+00> : vector<4x256xf32>
    %83 = tpu.matmul %81, %82, %cst_24 {dimension_numbers = #tpu.dot_dimension_numbers<[1], [0], [0], [1], [0, 0, 1, 1], [], []>} : vector<4x4xbf16>, vector<4x256xbf16>, vector<4x256xf32> -> vector<4x256xf32>
    %84 = arith.addf %74, %83 : vector<4x256xf32>
    %85 = vector.extract_strided_slice %44 {offsets = [4, 0, 0], sizes = [1, 4, 4], strides = [1, 1, 1]} : vector<9x4x4xbf16> to vector<1x4x4xbf16>
    %86 = vector.shape_cast %85 : vector<1x4x4xbf16> to vector<4x4xbf16>
    %87 = arith.truncf %43 : vector<4x256xf32> to vector<4x256xbf16>
    %cst_25 = arith.constant dense<0.000000e+00> : vector<4x256xf32>
    %88 = tpu.matmul %86, %87, %cst_25 {dimension_numbers = #tpu.dot_dimension_numbers<[1], [0], [0], [1], [0, 0, 1, 1], [], []>} : vector<4x4xbf16>, vector<4x256xbf16>, vector<4x256xf32> -> vector<4x256xf32>
    %89 = arith.addf %84, %88 : vector<4x256xf32>
    %c255_i32 = arith.constant 255 : i32
    %90 = tpu.dynamic_rotate %43 by %c255_i32 dim 1 : vector<4x256xf32>, i32 -> vector<4x256xf32>
    %cst_26 = arith.constant 0.000000e+00 : f32
    %91 = vector.shape_cast %26 : vector<1x256xi1> to vector<1x256xi1>
    %92 = vector.broadcast %91 : vector<1x256xi1> to vector<4x256xi1>
    %93 = vector.broadcast %cst_26 : f32 to vector<4x256xf32>
    %94 = arith.select %92, %90, %93 : vector<4x256xi1>, vector<4x256xf32>
    %95 = vector.extract_strided_slice %44 {offsets = [5, 0, 0], sizes = [1, 4, 4], strides = [1, 1, 1]} : vector<9x4x4xbf16> to vector<1x4x4xbf16>
    %96 = vector.shape_cast %95 : vector<1x4x4xbf16> to vector<4x4xbf16>
    %97 = arith.truncf %94 : vector<4x256xf32> to vector<4x256xbf16>
    %cst_27 = arith.constant dense<0.000000e+00> : vector<4x256xf32>
    %98 = tpu.matmul %96, %97, %cst_27 {dimension_numbers = #tpu.dot_dimension_numbers<[1], [0], [0], [1], [0, 0, 1, 1], [], []>} : vector<4x4xbf16>, vector<4x256xbf16>, vector<4x256xf32> -> vector<4x256xf32>
    %99 = arith.addf %89, %98 : vector<4x256xf32>
    %c254_i32 = arith.constant 254 : i32
    %100 = tpu.dynamic_rotate %43 by %c254_i32 dim 1 : vector<4x256xf32>, i32 -> vector<4x256xf32>
    %cst_28 = arith.constant 0.000000e+00 : f32
    %101 = vector.shape_cast %28 : vector<1x256xi1> to vector<1x256xi1>
    %102 = vector.broadcast %101 : vector<1x256xi1> to vector<4x256xi1>
    %103 = vector.broadcast %cst_28 : f32 to vector<4x256xf32>
    %104 = arith.select %102, %100, %103 : vector<4x256xi1>, vector<4x256xf32>
    %105 = vector.extract_strided_slice %44 {offsets = [6, 0, 0], sizes = [1, 4, 4], strides = [1, 1, 1]} : vector<9x4x4xbf16> to vector<1x4x4xbf16>
    %106 = vector.shape_cast %105 : vector<1x4x4xbf16> to vector<4x4xbf16>
    %107 = arith.truncf %104 : vector<4x256xf32> to vector<4x256xbf16>
    %cst_29 = arith.constant dense<0.000000e+00> : vector<4x256xf32>
    %108 = tpu.matmul %106, %107, %cst_29 {dimension_numbers = #tpu.dot_dimension_numbers<[1], [0], [0], [1], [0, 0, 1, 1], [], []>} : vector<4x4xbf16>, vector<4x256xbf16>, vector<4x256xf32> -> vector<4x256xf32>
    %109 = arith.addf %99, %108 : vector<4x256xf32>
    %c253_i32 = arith.constant 253 : i32
    %110 = tpu.dynamic_rotate %43 by %c253_i32 dim 1 : vector<4x256xf32>, i32 -> vector<4x256xf32>
    %cst_30 = arith.constant 0.000000e+00 : f32
    %111 = vector.shape_cast %30 : vector<1x256xi1> to vector<1x256xi1>
    %112 = vector.broadcast %111 : vector<1x256xi1> to vector<4x256xi1>
    %113 = vector.broadcast %cst_30 : f32 to vector<4x256xf32>
    %114 = arith.select %112, %110, %113 : vector<4x256xi1>, vector<4x256xf32>
    %115 = vector.extract_strided_slice %44 {offsets = [7, 0, 0], sizes = [1, 4, 4], strides = [1, 1, 1]} : vector<9x4x4xbf16> to vector<1x4x4xbf16>
    %116 = vector.shape_cast %115 : vector<1x4x4xbf16> to vector<4x4xbf16>
    %117 = arith.truncf %114 : vector<4x256xf32> to vector<4x256xbf16>
    %cst_31 = arith.constant dense<0.000000e+00> : vector<4x256xf32>
    %118 = tpu.matmul %116, %117, %cst_31 {dimension_numbers = #tpu.dot_dimension_numbers<[1], [0], [0], [1], [0, 0, 1, 1], [], []>} : vector<4x4xbf16>, vector<4x256xbf16>, vector<4x256xf32> -> vector<4x256xf32>
    %119 = arith.addf %109, %118 : vector<4x256xf32>
    %c252_i32 = arith.constant 252 : i32
    %120 = tpu.dynamic_rotate %43 by %c252_i32 dim 1 : vector<4x256xf32>, i32 -> vector<4x256xf32>
    %cst_32 = arith.constant 0.000000e+00 : f32
    %121 = vector.shape_cast %32 : vector<1x256xi1> to vector<1x256xi1>
    %122 = vector.broadcast %121 : vector<1x256xi1> to vector<4x256xi1>
    %123 = vector.broadcast %cst_32 : f32 to vector<4x256xf32>
    %124 = arith.select %122, %120, %123 : vector<4x256xi1>, vector<4x256xf32>
    %125 = vector.extract_strided_slice %44 {offsets = [8, 0, 0], sizes = [1, 4, 4], strides = [1, 1, 1]} : vector<9x4x4xbf16> to vector<1x4x4xbf16>
    %126 = vector.shape_cast %125 : vector<1x4x4xbf16> to vector<4x4xbf16>
    %127 = arith.truncf %124 : vector<4x256xf32> to vector<4x256xbf16>
    %cst_33 = arith.constant dense<0.000000e+00> : vector<4x256xf32>
    %128 = tpu.matmul %126, %127, %cst_33 {dimension_numbers = #tpu.dot_dimension_numbers<[1], [0], [0], [1], [0, 0, 1, 1], [], []>} : vector<4x4xbf16>, vector<4x256xbf16>, vector<4x256xf32> -> vector<4x256xf32>
    %129 = arith.addf %119, %128 : vector<4x256xf32>
    %c0_34 = arith.constant 0 : index
    %c0_35 = arith.constant 0 : index
    %130 = vector.load %arg2[%c0_34, %c0_35] : memref<4x256xbf16, #tpu.memory_space<vmem>>, vector<4x256xbf16>
    %c0_36 = arith.constant 0 : index
    %c0_37 = arith.constant 0 : index
    %131 = vector.load %arg8[%c0_36, %c0_37] : memref<4x1xf32, #tpu.memory_space<vmem>>, vector<4x1xf32>
    %132 = arith.extf %130 : vector<4x256xbf16> to vector<4x256xf32>
    %133 = vector.broadcast %131 : vector<4x1xf32> to vector<4x256xf32>
    %134 = arith.mulf %132, %133 : vector<4x256xf32>
    %c0_38 = arith.constant 0 : index
    %c0_39 = arith.constant 0 : index
    %135 = vector.load %arg11[%c0_38, %c0_39] : memref<4x1xf32, #tpu.memory_space<vmem>>, vector<4x1xf32>
    %136 = vector.broadcast %135 : vector<4x1xf32> to vector<4x256xf32>
    %137 = arith.addf %134, %136 : vector<4x256xf32>
    %cst_40 = arith.constant 0.000000e+00 : f32
    %138 = vector.broadcast %cst_40 : f32 to vector<4x256xf32>
    %139 = arith.maximumf %137, %138 : vector<4x256xf32>
    %c0_41 = arith.constant 0 : index
    %c0_42 = arith.constant 0 : index
    %c0_43 = arith.constant 0 : index
    %140 = vector.load %arg5[%c0_41, %c0_42, %c0_43] : memref<9x4x4xbf16, #tpu.memory_space<vmem>>, vector<9x4x4xbf16>
    %c4_i32_44 = arith.constant 4 : i32
    %141 = tpu.dynamic_rotate %139 by %c4_i32_44 dim 1 : vector<4x256xf32>, i32 -> vector<4x256xf32>
    %cst_45 = arith.constant 0.000000e+00 : f32
    %142 = vector.shape_cast %18 : vector<1x256xi1> to vector<1x256xi1>
    %143 = vector.broadcast %142 : vector<1x256xi1> to vector<4x256xi1>
    %144 = vector.broadcast %cst_45 : f32 to vector<4x256xf32>
    %145 = arith.select %143, %141, %144 : vector<4x256xi1>, vector<4x256xf32>
    %146 = vector.extract_strided_slice %140 {offsets = [0, 0, 0], sizes = [1, 4, 4], strides = [1, 1, 1]} : vector<9x4x4xbf16> to vector<1x4x4xbf16>
    %147 = vector.shape_cast %146 : vector<1x4x4xbf16> to vector<4x4xbf16>
    %148 = arith.truncf %145 : vector<4x256xf32> to vector<4x256xbf16>
    %cst_46 = arith.constant dense<0.000000e+00> : vector<4x256xf32>
    %149 = tpu.matmul %147, %148, %cst_46 {dimension_numbers = #tpu.dot_dimension_numbers<[1], [0], [0], [1], [0, 0, 1, 1], [], []>} : vector<4x4xbf16>, vector<4x256xbf16>, vector<4x256xf32> -> vector<4x256xf32>
    %150 = arith.addf %129, %149 : vector<4x256xf32>
    %c3_i32_47 = arith.constant 3 : i32
    %151 = tpu.dynamic_rotate %139 by %c3_i32_47 dim 1 : vector<4x256xf32>, i32 -> vector<4x256xf32>
    %cst_48 = arith.constant 0.000000e+00 : f32
    %152 = vector.shape_cast %20 : vector<1x256xi1> to vector<1x256xi1>
    %153 = vector.broadcast %152 : vector<1x256xi1> to vector<4x256xi1>
    %154 = vector.broadcast %cst_48 : f32 to vector<4x256xf32>
    %155 = arith.select %153, %151, %154 : vector<4x256xi1>, vector<4x256xf32>
    %156 = vector.extract_strided_slice %140 {offsets = [1, 0, 0], sizes = [1, 4, 4], strides = [1, 1, 1]} : vector<9x4x4xbf16> to vector<1x4x4xbf16>
    %157 = vector.shape_cast %156 : vector<1x4x4xbf16> to vector<4x4xbf16>
    %158 = arith.truncf %155 : vector<4x256xf32> to vector<4x256xbf16>
    %cst_49 = arith.constant dense<0.000000e+00> : vector<4x256xf32>
    %159 = tpu.matmul %157, %158, %cst_49 {dimension_numbers = #tpu.dot_dimension_numbers<[1], [0], [0], [1], [0, 0, 1, 1], [], []>} : vector<4x4xbf16>, vector<4x256xbf16>, vector<4x256xf32> -> vector<4x256xf32>
    %160 = arith.addf %150, %159 : vector<4x256xf32>
    %c2_i32_50 = arith.constant 2 : i32
    %161 = tpu.dynamic_rotate %139 by %c2_i32_50 dim 1 : vector<4x256xf32>, i32 -> vector<4x256xf32>
    %cst_51 = arith.constant 0.000000e+00 : f32
    %162 = vector.shape_cast %22 : vector<1x256xi1> to vector<1x256xi1>
    %163 = vector.broadcast %162 : vector<1x256xi1> to vector<4x256xi1>
    %164 = vector.broadcast %cst_51 : f32 to vector<4x256xf32>
    %165 = arith.select %163, %161, %164 : vector<4x256xi1>, vector<4x256xf32>
    %166 = vector.extract_strided_slice %140 {offsets = [2, 0, 0], sizes = [1, 4, 4], strides = [1, 1, 1]} : vector<9x4x4xbf16> to vector<1x4x4xbf16>
    %167 = vector.shape_cast %166 : vector<1x4x4xbf16> to vector<4x4xbf16>
    %168 = arith.truncf %165 : vector<4x256xf32> to vector<4x256xbf16>
    %cst_52 = arith.constant dense<0.000000e+00> : vector<4x256xf32>
    %169 = tpu.matmul %167, %168, %cst_52 {dimension_numbers = #tpu.dot_dimension_numbers<[1], [0], [0], [1], [0, 0, 1, 1], [], []>} : vector<4x4xbf16>, vector<4x256xbf16>, vector<4x256xf32> -> vector<4x256xf32>
    %170 = arith.addf %160, %169 : vector<4x256xf32>
    %c1_i32_53 = arith.constant 1 : i32
    %171 = tpu.dynamic_rotate %139 by %c1_i32_53 dim 1 : vector<4x256xf32>, i32 -> vector<4x256xf32>
    %cst_54 = arith.constant 0.000000e+00 : f32
    %172 = vector.shape_cast %24 : vector<1x256xi1> to vector<1x256xi1>
    %173 = vector.broadcast %172 : vector<1x256xi1> to vector<4x256xi1>
    %174 = vector.broadcast %cst_54 : f32 to vector<4x256xf32>
    %175 = arith.select %173, %171, %174 : vector<4x256xi1>, vector<4x256xf32>
    %176 = vector.extract_strided_slice %140 {offsets = [3, 0, 0], sizes = [1, 4, 4], strides = [1, 1, 1]} : vector<9x4x4xbf16> to vector<1x4x4xbf16>
    %177 = vector.shape_cast %176 : vector<1x4x4xbf16> to vector<4x4xbf16>
    %178 = arith.truncf %175 : vector<4x256xf32> to vector<4x256xbf16>
    %cst_55 = arith.constant dense<0.000000e+00> : vector<4x256xf32>
    %179 = tpu.matmul %177, %178, %cst_55 {dimension_numbers = #tpu.dot_dimension_numbers<[1], [0], [0], [1], [0, 0, 1, 1], [], []>} : vector<4x4xbf16>, vector<4x256xbf16>, vector<4x256xf32> -> vector<4x256xf32>
    %180 = arith.addf %170, %179 : vector<4x256xf32>
    %181 = vector.extract_strided_slice %140 {offsets = [4, 0, 0], sizes = [1, 4, 4], strides = [1, 1, 1]} : vector<9x4x4xbf16> to vector<1x4x4xbf16>
    %182 = vector.shape_cast %181 : vector<1x4x4xbf16> to vector<4x4xbf16>
    %183 = arith.truncf %139 : vector<4x256xf32> to vector<4x256xbf16>
    %cst_56 = arith.constant dense<0.000000e+00> : vector<4x256xf32>
    %184 = tpu.matmul %182, %183, %cst_56 {dimension_numbers = #tpu.dot_dimension_numbers<[1], [0], [0], [1], [0, 0, 1, 1], [], []>} : vector<4x4xbf16>, vector<4x256xbf16>, vector<4x256xf32> -> vector<4x256xf32>
    %185 = arith.addf %180, %184 : vector<4x256xf32>
    %c255_i32_57 = arith.constant 255 : i32
    %186 = tpu.dynamic_rotate %139 by %c255_i32_57 dim 1 : vector<4x256xf32>, i32 -> vector<4x256xf32>
    %cst_58 = arith.constant 0.000000e+00 : f32
    %187 = vector.shape_cast %26 : vector<1x256xi1> to vector<1x256xi1>
    %188 = vector.broadcast %187 : vector<1x256xi1> to vector<4x256xi1>
    %189 = vector.broadcast %cst_58 : f32 to vector<4x256xf32>
    %190 = arith.select %188, %186, %189 : vector<4x256xi1>, vector<4x256xf32>
    %191 = vector.extract_strided_slice %140 {offsets = [5, 0, 0], sizes = [1, 4, 4], strides = [1, 1, 1]} : vector<9x4x4xbf16> to vector<1x4x4xbf16>
    %192 = vector.shape_cast %191 : vector<1x4x4xbf16> to vector<4x4xbf16>
    %193 = arith.truncf %190 : vector<4x256xf32> to vector<4x256xbf16>
    %cst_59 = arith.constant dense<0.000000e+00> : vector<4x256xf32>
    %194 = tpu.matmul %192, %193, %cst_59 {dimension_numbers = #tpu.dot_dimension_numbers<[1], [0], [0], [1], [0, 0, 1, 1], [], []>} : vector<4x4xbf16>, vector<4x256xbf16>, vector<4x256xf32> -> vector<4x256xf32>
    %195 = arith.addf %185, %194 : vector<4x256xf32>
    %c254_i32_60 = arith.constant 254 : i32
    %196 = tpu.dynamic_rotate %139 by %c254_i32_60 dim 1 : vector<4x256xf32>, i32 -> vector<4x256xf32>
    %cst_61 = arith.constant 0.000000e+00 : f32
    %197 = vector.shape_cast %28 : vector<1x256xi1> to vector<1x256xi1>
    %198 = vector.broadcast %197 : vector<1x256xi1> to vector<4x256xi1>
    %199 = vector.broadcast %cst_61 : f32 to vector<4x256xf32>
    %200 = arith.select %198, %196, %199 : vector<4x256xi1>, vector<4x256xf32>
    %201 = vector.extract_strided_slice %140 {offsets = [6, 0, 0], sizes = [1, 4, 4], strides = [1, 1, 1]} : vector<9x4x4xbf16> to vector<1x4x4xbf16>
    %202 = vector.shape_cast %201 : vector<1x4x4xbf16> to vector<4x4xbf16>
    %203 = arith.truncf %200 : vector<4x256xf32> to vector<4x256xbf16>
    %cst_62 = arith.constant dense<0.000000e+00> : vector<4x256xf32>
    %204 = tpu.matmul %202, %203, %cst_62 {dimension_numbers = #tpu.dot_dimension_numbers<[1], [0], [0], [1], [0, 0, 1, 1], [], []>} : vector<4x4xbf16>, vector<4x256xbf16>, vector<4x256xf32> -> vector<4x256xf32>
    %205 = arith.addf %195, %204 : vector<4x256xf32>
    %c253_i32_63 = arith.constant 253 : i32
    %206 = tpu.dynamic_rotate %139 by %c253_i32_63 dim 1 : vector<4x256xf32>, i32 -> vector<4x256xf32>
    %cst_64 = arith.constant 0.000000e+00 : f32
    %207 = vector.shape_cast %30 : vector<1x256xi1> to vector<1x256xi1>
    %208 = vector.broadcast %207 : vector<1x256xi1> to vector<4x256xi1>
    %209 = vector.broadcast %cst_64 : f32 to vector<4x256xf32>
    %210 = arith.select %208, %206, %209 : vector<4x256xi1>, vector<4x256xf32>
    %211 = vector.extract_strided_slice %140 {offsets = [7, 0, 0], sizes = [1, 4, 4], strides = [1, 1, 1]} : vector<9x4x4xbf16> to vector<1x4x4xbf16>
    %212 = vector.shape_cast %211 : vector<1x4x4xbf16> to vector<4x4xbf16>
    %213 = arith.truncf %210 : vector<4x256xf32> to vector<4x256xbf16>
    %cst_65 = arith.constant dense<0.000000e+00> : vector<4x256xf32>
    %214 = tpu.matmul %212, %213, %cst_65 {dimension_numbers = #tpu.dot_dimension_numbers<[1], [0], [0], [1], [0, 0, 1, 1], [], []>} : vector<4x4xbf16>, vector<4x256xbf16>, vector<4x256xf32> -> vector<4x256xf32>
    %215 = arith.addf %205, %214 : vector<4x256xf32>
    %c252_i32_66 = arith.constant 252 : i32
    %216 = tpu.dynamic_rotate %139 by %c252_i32_66 dim 1 : vector<4x256xf32>, i32 -> vector<4x256xf32>
    %cst_67 = arith.constant 0.000000e+00 : f32
    %217 = vector.shape_cast %32 : vector<1x256xi1> to vector<1x256xi1>
    %218 = vector.broadcast %217 : vector<1x256xi1> to vector<4x256xi1>
    %219 = vector.broadcast %cst_67 : f32 to vector<4x256xf32>
    %220 = arith.select %218, %216, %219 : vector<4x256xi1>, vector<4x256xf32>
    %221 = vector.extract_strided_slice %140 {offsets = [8, 0, 0], sizes = [1, 4, 4], strides = [1, 1, 1]} : vector<9x4x4xbf16> to vector<1x4x4xbf16>
    %222 = vector.shape_cast %221 : vector<1x4x4xbf16> to vector<4x4xbf16>
    %223 = arith.truncf %220 : vector<4x256xf32> to vector<4x256xbf16>
    %cst_68 = arith.constant dense<0.000000e+00> : vector<4x256xf32>
    %224 = tpu.matmul %222, %223, %cst_68 {dimension_numbers = #tpu.dot_dimension_numbers<[1], [0], [0], [1], [0, 0, 1, 1], [], []>} : vector<4x4xbf16>, vector<4x256xbf16>, vector<4x256xf32> -> vector<4x256xf32>
    %225 = arith.addf %215, %224 : vector<4x256xf32>
    %c0_69 = arith.constant 0 : index
    %c0_70 = arith.constant 0 : index
    %226 = vector.load %arg3[%c0_69, %c0_70] : memref<4x256xbf16, #tpu.memory_space<vmem>>, vector<4x256xbf16>
    %c0_71 = arith.constant 0 : index
    %c0_72 = arith.constant 0 : index
    %227 = vector.load %arg9[%c0_71, %c0_72] : memref<4x1xf32, #tpu.memory_space<vmem>>, vector<4x1xf32>
    %228 = arith.extf %226 : vector<4x256xbf16> to vector<4x256xf32>
    %229 = vector.broadcast %227 : vector<4x1xf32> to vector<4x256xf32>
    %230 = arith.mulf %228, %229 : vector<4x256xf32>
    %c0_73 = arith.constant 0 : index
    %c0_74 = arith.constant 0 : index
    %231 = vector.load %arg12[%c0_73, %c0_74] : memref<4x1xf32, #tpu.memory_space<vmem>>, vector<4x1xf32>
    %232 = vector.broadcast %231 : vector<4x1xf32> to vector<4x256xf32>
    %233 = arith.addf %230, %232 : vector<4x256xf32>
    %cst_75 = arith.constant 0.000000e+00 : f32
    %234 = vector.broadcast %cst_75 : f32 to vector<4x256xf32>
    %235 = arith.maximumf %233, %234 : vector<4x256xf32>
    %c0_76 = arith.constant 0 : index
    %c0_77 = arith.constant 0 : index
    %c0_78 = arith.constant 0 : index
    %236 = vector.load %arg6[%c0_76, %c0_77, %c0_78] : memref<9x4x4xbf16, #tpu.memory_space<vmem>>, vector<9x4x4xbf16>
    %c4_i32_79 = arith.constant 4 : i32
    %237 = tpu.dynamic_rotate %235 by %c4_i32_79 dim 1 : vector<4x256xf32>, i32 -> vector<4x256xf32>
    %cst_80 = arith.constant 0.000000e+00 : f32
    %238 = vector.shape_cast %18 : vector<1x256xi1> to vector<1x256xi1>
    %239 = vector.broadcast %238 : vector<1x256xi1> to vector<4x256xi1>
    %240 = vector.broadcast %cst_80 : f32 to vector<4x256xf32>
    %241 = arith.select %239, %237, %240 : vector<4x256xi1>, vector<4x256xf32>
    %242 = vector.extract_strided_slice %236 {offsets = [0, 0, 0], sizes = [1, 4, 4], strides = [1, 1, 1]} : vector<9x4x4xbf16> to vector<1x4x4xbf16>
    %243 = vector.shape_cast %242 : vector<1x4x4xbf16> to vector<4x4xbf16>
    %244 = arith.truncf %241 : vector<4x256xf32> to vector<4x256xbf16>
    %cst_81 = arith.constant dense<0.000000e+00> : vector<4x256xf32>
    %245 = tpu.matmul %243, %244, %cst_81 {dimension_numbers = #tpu.dot_dimension_numbers<[1], [0], [0], [1], [0, 0, 1, 1], [], []>} : vector<4x4xbf16>, vector<4x256xbf16>, vector<4x256xf32> -> vector<4x256xf32>
    %246 = arith.addf %225, %245 : vector<4x256xf32>
    %c3_i32_82 = arith.constant 3 : i32
    %247 = tpu.dynamic_rotate %235 by %c3_i32_82 dim 1 : vector<4x256xf32>, i32 -> vector<4x256xf32>
    %cst_83 = arith.constant 0.000000e+00 : f32
    %248 = vector.shape_cast %20 : vector<1x256xi1> to vector<1x256xi1>
    %249 = vector.broadcast %248 : vector<1x256xi1> to vector<4x256xi1>
    %250 = vector.broadcast %cst_83 : f32 to vector<4x256xf32>
    %251 = arith.select %249, %247, %250 : vector<4x256xi1>, vector<4x256xf32>
    %252 = vector.extract_strided_slice %236 {offsets = [1, 0, 0], sizes = [1, 4, 4], strides = [1, 1, 1]} : vector<9x4x4xbf16> to vector<1x4x4xbf16>
    %253 = vector.shape_cast %252 : vector<1x4x4xbf16> to vector<4x4xbf16>
    %254 = arith.truncf %251 : vector<4x256xf32> to vector<4x256xbf16>
    %cst_84 = arith.constant dense<0.000000e+00> : vector<4x256xf32>
    %255 = tpu.matmul %253, %254, %cst_84 {dimension_numbers = #tpu.dot_dimension_numbers<[1], [0], [0], [1], [0, 0, 1, 1], [], []>} : vector<4x4xbf16>, vector<4x256xbf16>, vector<4x256xf32> -> vector<4x256xf32>
    %256 = arith.addf %246, %255 : vector<4x256xf32>
    %c2_i32_85 = arith.constant 2 : i32
    %257 = tpu.dynamic_rotate %235 by %c2_i32_85 dim 1 : vector<4x256xf32>, i32 -> vector<4x256xf32>
    %cst_86 = arith.constant 0.000000e+00 : f32
    %258 = vector.shape_cast %22 : vector<1x256xi1> to vector<1x256xi1>
    %259 = vector.broadcast %258 : vector<1x256xi1> to vector<4x256xi1>
    %260 = vector.broadcast %cst_86 : f32 to vector<4x256xf32>
    %261 = arith.select %259, %257, %260 : vector<4x256xi1>, vector<4x256xf32>
    %262 = vector.extract_strided_slice %236 {offsets = [2, 0, 0], sizes = [1, 4, 4], strides = [1, 1, 1]} : vector<9x4x4xbf16> to vector<1x4x4xbf16>
    %263 = vector.shape_cast %262 : vector<1x4x4xbf16> to vector<4x4xbf16>
    %264 = arith.truncf %261 : vector<4x256xf32> to vector<4x256xbf16>
    %cst_87 = arith.constant dense<0.000000e+00> : vector<4x256xf32>
    %265 = tpu.matmul %263, %264, %cst_87 {dimension_numbers = #tpu.dot_dimension_numbers<[1], [0], [0], [1], [0, 0, 1, 1], [], []>} : vector<4x4xbf16>, vector<4x256xbf16>, vector<4x256xf32> -> vector<4x256xf32>
    %266 = arith.addf %256, %265 : vector<4x256xf32>
    %c1_i32_88 = arith.constant 1 : i32
    %267 = tpu.dynamic_rotate %235 by %c1_i32_88 dim 1 : vector<4x256xf32>, i32 -> vector<4x256xf32>
    %cst_89 = arith.constant 0.000000e+00 : f32
    %268 = vector.shape_cast %24 : vector<1x256xi1> to vector<1x256xi1>
    %269 = vector.broadcast %268 : vector<1x256xi1> to vector<4x256xi1>
    %270 = vector.broadcast %cst_89 : f32 to vector<4x256xf32>
    %271 = arith.select %269, %267, %270 : vector<4x256xi1>, vector<4x256xf32>
    %272 = vector.extract_strided_slice %236 {offsets = [3, 0, 0], sizes = [1, 4, 4], strides = [1, 1, 1]} : vector<9x4x4xbf16> to vector<1x4x4xbf16>
    %273 = vector.shape_cast %272 : vector<1x4x4xbf16> to vector<4x4xbf16>
    %274 = arith.truncf %271 : vector<4x256xf32> to vector<4x256xbf16>
    %cst_90 = arith.constant dense<0.000000e+00> : vector<4x256xf32>
    %275 = tpu.matmul %273, %274, %cst_90 {dimension_numbers = #tpu.dot_dimension_numbers<[1], [0], [0], [1], [0, 0, 1, 1], [], []>} : vector<4x4xbf16>, vector<4x256xbf16>, vector<4x256xf32> -> vector<4x256xf32>
    %276 = arith.addf %266, %275 : vector<4x256xf32>
    %277 = vector.extract_strided_slice %236 {offsets = [4, 0, 0], sizes = [1, 4, 4], strides = [1, 1, 1]} : vector<9x4x4xbf16> to vector<1x4x4xbf16>
    %278 = vector.shape_cast %277 : vector<1x4x4xbf16> to vector<4x4xbf16>
    %279 = arith.truncf %235 : vector<4x256xf32> to vector<4x256xbf16>
    %cst_91 = arith.constant dense<0.000000e+00> : vector<4x256xf32>
    %280 = tpu.matmul %278, %279, %cst_91 {dimension_numbers = #tpu.dot_dimension_numbers<[1], [0], [0], [1], [0, 0, 1, 1], [], []>} : vector<4x4xbf16>, vector<4x256xbf16>, vector<4x256xf32> -> vector<4x256xf32>
    %281 = arith.addf %276, %280 : vector<4x256xf32>
    %c255_i32_92 = arith.constant 255 : i32
    %282 = tpu.dynamic_rotate %235 by %c255_i32_92 dim 1 : vector<4x256xf32>, i32 -> vector<4x256xf32>
    %cst_93 = arith.constant 0.000000e+00 : f32
    %283 = vector.shape_cast %26 : vector<1x256xi1> to vector<1x256xi1>
    %284 = vector.broadcast %283 : vector<1x256xi1> to vector<4x256xi1>
    %285 = vector.broadcast %cst_93 : f32 to vector<4x256xf32>
    %286 = arith.select %284, %282, %285 : vector<4x256xi1>, vector<4x256xf32>
    %287 = vector.extract_strided_slice %236 {offsets = [5, 0, 0], sizes = [1, 4, 4], strides = [1, 1, 1]} : vector<9x4x4xbf16> to vector<1x4x4xbf16>
    %288 = vector.shape_cast %287 : vector<1x4x4xbf16> to vector<4x4xbf16>
    %289 = arith.truncf %286 : vector<4x256xf32> to vector<4x256xbf16>
    %cst_94 = arith.constant dense<0.000000e+00> : vector<4x256xf32>
    %290 = tpu.matmul %288, %289, %cst_94 {dimension_numbers = #tpu.dot_dimension_numbers<[1], [0], [0], [1], [0, 0, 1, 1], [], []>} : vector<4x4xbf16>, vector<4x256xbf16>, vector<4x256xf32> -> vector<4x256xf32>
    %291 = arith.addf %281, %290 : vector<4x256xf32>
    %c254_i32_95 = arith.constant 254 : i32
    %292 = tpu.dynamic_rotate %235 by %c254_i32_95 dim 1 : vector<4x256xf32>, i32 -> vector<4x256xf32>
    %cst_96 = arith.constant 0.000000e+00 : f32
    %293 = vector.shape_cast %28 : vector<1x256xi1> to vector<1x256xi1>
    %294 = vector.broadcast %293 : vector<1x256xi1> to vector<4x256xi1>
    %295 = vector.broadcast %cst_96 : f32 to vector<4x256xf32>
    %296 = arith.select %294, %292, %295 : vector<4x256xi1>, vector<4x256xf32>
    %297 = vector.extract_strided_slice %236 {offsets = [6, 0, 0], sizes = [1, 4, 4], strides = [1, 1, 1]} : vector<9x4x4xbf16> to vector<1x4x4xbf16>
    %298 = vector.shape_cast %297 : vector<1x4x4xbf16> to vector<4x4xbf16>
    %299 = arith.truncf %296 : vector<4x256xf32> to vector<4x256xbf16>
    %cst_97 = arith.constant dense<0.000000e+00> : vector<4x256xf32>
    %300 = tpu.matmul %298, %299, %cst_97 {dimension_numbers = #tpu.dot_dimension_numbers<[1], [0], [0], [1], [0, 0, 1, 1], [], []>} : vector<4x4xbf16>, vector<4x256xbf16>, vector<4x256xf32> -> vector<4x256xf32>
    %301 = arith.addf %291, %300 : vector<4x256xf32>
    %c253_i32_98 = arith.constant 253 : i32
    %302 = tpu.dynamic_rotate %235 by %c253_i32_98 dim 1 : vector<4x256xf32>, i32 -> vector<4x256xf32>
    %cst_99 = arith.constant 0.000000e+00 : f32
    %303 = vector.shape_cast %30 : vector<1x256xi1> to vector<1x256xi1>
    %304 = vector.broadcast %303 : vector<1x256xi1> to vector<4x256xi1>
    %305 = vector.broadcast %cst_99 : f32 to vector<4x256xf32>
    %306 = arith.select %304, %302, %305 : vector<4x256xi1>, vector<4x256xf32>
    %307 = vector.extract_strided_slice %236 {offsets = [7, 0, 0], sizes = [1, 4, 4], strides = [1, 1, 1]} : vector<9x4x4xbf16> to vector<1x4x4xbf16>
    %308 = vector.shape_cast %307 : vector<1x4x4xbf16> to vector<4x4xbf16>
    %309 = arith.truncf %306 : vector<4x256xf32> to vector<4x256xbf16>
    %cst_100 = arith.constant dense<0.000000e+00> : vector<4x256xf32>
    %310 = tpu.matmul %308, %309, %cst_100 {dimension_numbers = #tpu.dot_dimension_numbers<[1], [0], [0], [1], [0, 0, 1, 1], [], []>} : vector<4x4xbf16>, vector<4x256xbf16>, vector<4x256xf32> -> vector<4x256xf32>
    %311 = arith.addf %301, %310 : vector<4x256xf32>
    %c252_i32_101 = arith.constant 252 : i32
    %312 = tpu.dynamic_rotate %235 by %c252_i32_101 dim 1 : vector<4x256xf32>, i32 -> vector<4x256xf32>
    %cst_102 = arith.constant 0.000000e+00 : f32
    %313 = vector.shape_cast %32 : vector<1x256xi1> to vector<1x256xi1>
    %314 = vector.broadcast %313 : vector<1x256xi1> to vector<4x256xi1>
    %315 = vector.broadcast %cst_102 : f32 to vector<4x256xf32>
    %316 = arith.select %314, %312, %315 : vector<4x256xi1>, vector<4x256xf32>
    %317 = vector.extract_strided_slice %236 {offsets = [8, 0, 0], sizes = [1, 4, 4], strides = [1, 1, 1]} : vector<9x4x4xbf16> to vector<1x4x4xbf16>
    %318 = vector.shape_cast %317 : vector<1x4x4xbf16> to vector<4x4xbf16>
    %319 = arith.truncf %316 : vector<4x256xf32> to vector<4x256xbf16>
    %cst_103 = arith.constant dense<0.000000e+00> : vector<4x256xf32>
    %320 = tpu.matmul %318, %319, %cst_103 {dimension_numbers = #tpu.dot_dimension_numbers<[1], [0], [0], [1], [0, 0, 1, 1], [], []>} : vector<4x4xbf16>, vector<4x256xbf16>, vector<4x256xf32> -> vector<4x256xf32>
    %321 = arith.addf %311, %320 : vector<4x256xf32>
    %c0_104 = arith.constant 0 : index
    %c0_105 = arith.constant 0 : index
    %322 = vector.load %arg13[%c0_104, %c0_105] : memref<4x1xf32, #tpu.memory_space<vmem>>, vector<4x1xf32>
    %323 = vector.broadcast %322 : vector<4x1xf32> to vector<4x256xf32>
    %324 = arith.addf %321, %323 : vector<4x256xf32>
    %325 = arith.truncf %324 : vector<4x256xf32> to vector<4x256xbf16>
    %c0_106 = arith.constant 0 : index
    %c0_107 = arith.constant 0 : index
    %326 = vector.load %arg14[%c0_106, %c0_107] : memref<4x256xbf16, #tpu.memory_space<vmem>>, vector<4x256xbf16>
    tpu.vector_store %arg14[%c0_106, %c0_107], %325 {strides = array<i32>} : memref<4x256xbf16, #tpu.memory_space<vmem>>, vector<4x256xbf16>,
    %327 = arith.extf %325 : vector<4x256xbf16> to vector<4x256xf32>
    %328 = vector.extract_strided_slice %327 {offsets = [0, 0], sizes = [4, 128], strides = [1, 1]} : vector<4x256xf32> to vector<4x128xf32>
    %329 = arith.mulf %328, %328 : vector<4x128xf32>
    %330 = vector.extract_strided_slice %327 {offsets = [0, 128], sizes = [4, 128], strides = [1, 1]} : vector<4x256xf32> to vector<4x128xf32>
    %331 = arith.addf %328, %330 : vector<4x128xf32>
    %332 = arith.mulf %330, %330 : vector<4x128xf32>
    %333 = arith.addf %329, %332 : vector<4x128xf32>
    %334 = vector.shape_cast %331 : vector<4x128xf32> to vector<1x4x128xf32>
    %c0_108 = arith.constant 0 : index
    %c0_109 = arith.constant 0 : index
    %c0_110 = arith.constant 0 : index
    %335 = vector.load %arg15[%c0_108, %c0_109, %c0_110] : memref<1x4x128xf32, #tpu.memory_space<vmem>>, vector<1x4x128xf32>
    tpu.vector_store %arg15[%c0_108, %c0_109, %c0_110], %334 {strides = array<i32>} : memref<1x4x128xf32, #tpu.memory_space<vmem>>, vector<1x4x128xf32>,
    %336 = vector.shape_cast %333 : vector<4x128xf32> to vector<1x4x128xf32>
    %c0_111 = arith.constant 0 : index
    %c0_112 = arith.constant 0 : index
    %c0_113 = arith.constant 0 : index
    %337 = vector.load %arg16[%c0_111, %c0_112, %c0_113] : memref<1x4x128xf32, #tpu.memory_space<vmem>>, vector<1x4x128xf32>
    tpu.vector_store %arg16[%c0_111, %c0_112, %c0_113], %336 {strides = array<i32>} : memref<1x4x128xf32, #tpu.memory_space<vmem>>, vector<1x4x128xf32>,
    return
  }
  func.func @transform_0(%arg0: i32) -> (i32, i32) {
    %c0_i32 = arith.constant 0 : i32
    %c0_i32_0 = arith.constant 0 : i32
    return %c0_i32, %arg0 : i32, i32
  }
  func.func @transform_1(%arg0: i32) -> (i32, i32) {
    %c0_i32 = arith.constant 0 : i32
    %c0_i32_0 = arith.constant 0 : i32
    return %c0_i32, %arg0 : i32, i32
  }
  func.func @transform_2(%arg0: i32) -> (i32, i32) {
    %c0_i32 = arith.constant 0 : i32
    %c0_i32_0 = arith.constant 0 : i32
    return %c0_i32, %arg0 : i32, i32
  }
  func.func @transform_3(%arg0: i32) -> (i32, i32, i32) {
    %c0_i32 = arith.constant 0 : i32
    %c0_i32_0 = arith.constant 0 : i32
    %c0_i32_1 = arith.constant 0 : i32
    %c0_i32_2 = arith.constant 0 : i32
    return %c0_i32, %c0_i32_0, %c0_i32_1 : i32, i32, i32
  }
  func.func @transform_4(%arg0: i32) -> (i32, i32, i32) {
    %c0_i32 = arith.constant 0 : i32
    %c0_i32_0 = arith.constant 0 : i32
    %c0_i32_1 = arith.constant 0 : i32
    %c0_i32_2 = arith.constant 0 : i32
    return %c0_i32, %c0_i32_0, %c0_i32_1 : i32, i32, i32
  }
  func.func @transform_5(%arg0: i32) -> (i32, i32, i32) {
    %c0_i32 = arith.constant 0 : i32
    %c0_i32_0 = arith.constant 0 : i32
    %c0_i32_1 = arith.constant 0 : i32
    %c0_i32_2 = arith.constant 0 : i32
    return %c0_i32, %c0_i32_0, %c0_i32_1 : i32, i32, i32
  }
  func.func @transform_6(%arg0: i32) -> (i32, i32) {
    %c0_i32 = arith.constant 0 : i32
    %c0_i32_0 = arith.constant 0 : i32
    %c0_i32_1 = arith.constant 0 : i32
    return %c0_i32, %c0_i32_0 : i32, i32
  }
  func.func @transform_7(%arg0: i32) -> (i32, i32) {
    %c0_i32 = arith.constant 0 : i32
    %c0_i32_0 = arith.constant 0 : i32
    %c0_i32_1 = arith.constant 0 : i32
    return %c0_i32, %c0_i32_0 : i32, i32
  }
  func.func @transform_8(%arg0: i32) -> (i32, i32) {
    %c0_i32 = arith.constant 0 : i32
    %c0_i32_0 = arith.constant 0 : i32
    %c0_i32_1 = arith.constant 0 : i32
    return %c0_i32, %c0_i32_0 : i32, i32
  }
  func.func @transform_9(%arg0: i32) -> (i32, i32) {
    %c0_i32 = arith.constant 0 : i32
    %c0_i32_0 = arith.constant 0 : i32
    %c0_i32_1 = arith.constant 0 : i32
    return %c0_i32, %c0_i32_0 : i32, i32
  }
  func.func @transform_10(%arg0: i32) -> (i32, i32) {
    %c0_i32 = arith.constant 0 : i32
    %c0_i32_0 = arith.constant 0 : i32
    %c0_i32_1 = arith.constant 0 : i32
    return %c0_i32, %c0_i32_0 : i32, i32
  }
  func.func @transform_11(%arg0: i32) -> (i32, i32) {
    %c0_i32 = arith.constant 0 : i32
    %c0_i32_0 = arith.constant 0 : i32
    %c0_i32_1 = arith.constant 0 : i32
    return %c0_i32, %c0_i32_0 : i32, i32
  }
  func.func @transform_12(%arg0: i32) -> (i32, i32) {
    %c0_i32 = arith.constant 0 : i32
    %c0_i32_0 = arith.constant 0 : i32
    %c0_i32_1 = arith.constant 0 : i32
    return %c0_i32, %c0_i32_0 : i32, i32
  }
  func.func @transform_13(%arg0: i32) -> (i32, i32) {
    %c0_i32 = arith.constant 0 : i32
    %c0_i32_0 = arith.constant 0 : i32
    return %c0_i32, %arg0 : i32, i32
  }
  func.func @transform_14(%arg0: i32) -> (i32, i32, i32) {
    %c0_i32 = arith.constant 0 : i32
    %c0_i32_0 = arith.constant 0 : i32
    %c0_i32_1 = arith.constant 0 : i32
    return %arg0, %c0_i32, %c0_i32_0 : i32, i32, i32
  }
  func.func @transform_15(%arg0: i32) -> (i32, i32, i32) {
    %c0_i32 = arith.constant 0 : i32
    %c0_i32_0 = arith.constant 0 : i32
    %c0_i32_1 = arith.constant 0 : i32
    return %arg0, %c0_i32, %c0_i32_0 : i32, i32, i32
  }
}

</mosaic_0001>

<llo_original>
// kernel: dense_block.3
$region0: #{dense_block.3}
  #allocation0 [shape = 'u32[]', space=smem, size = 0x4, offset = 0x4, fixed_abs, tag = 'smem constant byte address 0x4 - core index']
  #allocation1 [shape = 'u32[144,128]{1,0:T(1,128)}', space=vmem, size = 0x12000, scoped, tag = 'internal scratch']
  %s0 = inlined_call_operand.vmem [shape: bf16[4,256], index: 0, kind: input, shape index: {}]
  %s1 = inlined_call_operand.vmem [shape: bf16[9,4,4], index: 1, kind: input, shape index: {}]
  %s2 = inlined_call_operand.vmem [shape: f32[4,1], index: 2, kind: input, shape index: {}]
  %s3 = inlined_call_operand.vmem [shape: f32[4,1], index: 3, kind: input, shape index: {}]
  %s4 = inlined_call_operand.vmem [shape: f32[4,1], index: 4, kind: input, shape index: {}]
  %s5 = inlined_call_operand.vmem [shape: bf16[4,256], index: 5, kind: output, shape index: {0}]
  %s6 = inlined_call_operand.vmem [shape: f32[1,4,128], index: 6, kind: output, shape index: {1}]
  %s7 = inlined_call_operand.vmem [shape: f32[1,4,128], index: 7, kind: output, shape index: {2}]
  %8 = xla_tuple %s5, %s6, %s7
  %s9 = sld [smem:[#allocation0]]
  $region46: #{dense_block.3} parent=0
    _
  %s11 = ssub.s32 1, %s9
  %s12 = scalar_select 0, %s11, %s9
  // Predicated region
  $region2: #{dense_block.3} parent=0 // pred_check
    _
  $region3: #{dense_block.3} parent=0 // pred_check_branch
    %14 = sbr.rel (0) target = $region5
  $region4: #{dense_block.3} parent=0 // pred_region
    _
  $region5: #{dense_block.3} parent=0 // pred_fallthru
    _
  // Predicated region
  $region6: #{dense_block.3} parent=0 // pred_check
    _
  $region7: #{dense_block.3} parent=0 // pred_check_branch
    %16 = sbr.rel (0) target = $region9
  $region8: #{dense_block.3} parent=0 // pred_region
    _
  $region9: #{dense_block.3} parent=0 // pred_fallthru
    _
  // Predicated region
  $region10: #{dense_block.3} parent=0 // pred_check
    _
  $region11: #{dense_block.3} parent=0 // pred_check_branch
    %18 = sbr.rel (0) target = $region13
  $region12: #{dense_block.3} parent=0 // pred_region
    _
  $region13: #{dense_block.3} parent=0 // pred_fallthru
    _
  // Predicated region
  $region14: #{dense_block.3} parent=0 // pred_check
    _
  $region15: #{dense_block.3} parent=0 // pred_check_branch
    %20 = sbr.rel (0) target = $region17
  $region16: #{dense_block.3} parent=0 // pred_region
    _
  $region17: #{dense_block.3} parent=0 // pred_fallthru
    _
  // Predicated region
  $region18: #{dense_block.3} parent=0 // pred_check
    _
  $region19: #{dense_block.3} parent=0 // pred_check_branch
    %22 = sbr.rel (0) target = $region21
  $region20: #{dense_block.3} parent=0 // pred_region
    _
  $region21: #{dense_block.3} parent=0 // pred_fallthru
    _
  %v24 = vlaneseq
  %v25 = vand.u32 %v24, 127
  %v26 = vadd.s32 %v25, 128
  %vm27 = vcmp.lt.s32.totalorder %v25, 0
  %v28 = vsub.s32 0, %v25
  %v29 = vsel %vm27, %v28, %v25
  %v30 = vshrl.u32 %v29, 4
  %v31 = vand.u32 %v29, 15
  %v32 = vsub.s32 0, %v31
  %v33 = vsel %vm27, %v32, %v31
  %vm34 = vcmp.lt.s32.totalorder %v26, 0
  %v35 = vsub.s32 0, %v26
  %v36 = vsel %vm34, %v35, %v26
  %v37 = vshrl.u32 %v36, 4
  %v38 = vand.u32 %v36, 15
  %v39 = vsub.s32 0, %v38
  %v40 = vsel %vm34, %v39, %v38
  %vm41 = vcmp.ne.s32.totalorder %v33, 0
  %vm42 = vcmp.ne.s32.totalorder %v40, 0
  %vm43 = vcmp.lt.s32.totalorder %v33, 0
  %vm44 = vcmp.lt.s32.totalorder %v40, 0
  %vm45 = vmand %vm43, %vm41
  %vm46 = vmand %vm44, %vm42
  %v47 = vadd.s32 %v33, 16
  %v48 = vadd.s32 %v40, 16
  %v49 = vsel %vm45, %v47, %v33
  %v50 = vsel %vm46, %v48, %v40
  %vm51 = vcmp.ge.s32.totalorder %v49, 4
  %vm52 = vcmp.ge.s32.totalorder %v50, 4
  %vm53 = vcmp.ge.s32.totalorder %v49, 3
  %vm54 = vcmp.ge.s32.totalorder %v50, 3
  %vm55 = vcmp.ge.s32.totalorder %v49, 2
  %vm56 = vcmp.ge.s32.totalorder %v50, 2
  %vm57 = vcmp.ge.s32.totalorder %v49, 1
  %vm58 = vcmp.ge.s32.totalorder %v50, 1
  %vm59 = vcmp.lt.s32.totalorder %v49, 15
  %vm60 = vcmp.lt.s32.totalorder %v50, 15
  %vm61 = vcmp.lt.s32.totalorder %v49, 14
  %vm62 = vcmp.lt.s32.totalorder %v50, 14
  %vm63 = vcmp.lt.s32.totalorder %v49, 13
  %vm64 = vcmp.lt.s32.totalorder %v50, 13
  %vm65 = vcmp.lt.s32.totalorder %v49, 12
  %vm66 = vcmp.lt.s32.totalorder %v50, 12
  %v67 = vld [vmem:[%s0] sm:$0xf]
  %v68 = vld [vmem:[%s2] sm:$0xf]
  %v69 = vunpack.c.l.bf16 %v67
  %71 = vset.pattern.permute.xlu0 0
  %72 = vperm.xlu0 %71, %v68
  %v73 = vpop.permute.xlu0 %72
  %v75 = vunpack.c.l.s4 839922192
  %v76 = vunpack.c.0.s8 %v75
  %v77 = vlaneseq
  %v78 = vshrl.u32 %v77, 7
  %v79 = vsub.s32 %v76, %v78
  %v80 = vrot.slane %v73, %v79
  %v82 = vmul.f32 %v69, %v80
  %v83 = vld [vmem:[%s3] sm:$0xf]
  %85 = vset.pattern.permute.xlu0 0
  %86 = vperm.xlu0 %85, %v83
  %v87 = vpop.permute.xlu0 %86
  %v89 = vunpack.c.l.s4 839922192
  %v90 = vunpack.c.0.s8 %v89
  %v91 = vlaneseq
  %v92 = vshrl.u32 %v91, 7
  %v93 = vsub.s32 %v90, %v92
  %v94 = vrot.slane %v87, %v93
  %v96 = vadd.f32 %v82, %v94
  %v97 = vmax.f32 %v96, 0.0
  %v98 = vld [vmem:[%s1] sm:$0x3]
  %v99 = vld [vmem:[%s1 + $0x2] sm:$0x3]
  %v100 = vld [vmem:[%s1 + $0x4] sm:$0x3]
  %v101 = vld [vmem:[%s1 + $0x6] sm:$0x3]
  %v102 = vld [vmem:[%s1 + $0x8] sm:$0x3]
  %v103 = vld [vmem:[%s1 + $0xa] sm:$0x3]
  %v104 = vld [vmem:[%s1 + $0xc] sm:$0x3]
  %v105 = vld [vmem:[%s1 + $0xe] sm:$0x3]
  %v106 = vld [vmem:[%s1 + $0x10] sm:$0x3]
  %v108 = vcombine.high %v97, %v97
  %110 = vrot.lane.b32.xlu0 %v97, 4
  %v111 = vpop.permute.xlu0 %110
  %112 = vrot.lane.b32.xlu0 %v108, 4
  %v113 = vpop.permute.xlu0 %112
  %vm114 = vcmp.lt.s32.totalorder %v25, 4
  %v115 = vsel %vm114, %v111, %v113
  %v116 = vsel %vm114, %v113, %v111
  %v117 = vsel %vm51, 1, 0
  %v118 = vsel %vm52, 1, 0
  %vm119 = vcmp.eq.s32.totalorder %v117, 1
  %vm120 = vcmp.eq.s32.totalorder %v118, 1
  %v121 = vsel %vm119, %v116, 0.0
  %v122 = vsel %vm120, %v115, 0.0
  %v123 = vpack.c.bf16 %v121, %v121
  %v124 = vpack.c.bf16 %v122, %v122
  %125 = vrot.lane.b32.xlu0 %v97, 3
  %v126 = vpop.permute.xlu0 %125
  %127 = vrot.lane.b32.xlu0 %v108, 3
  %v128 = vpop.permute.xlu0 %127
  %vm129 = vcmp.lt.s32.totalorder %v25, 3
  %v130 = vsel %vm129, %v126, %v128
  %v131 = vsel %vm129, %v128, %v126
  %v132 = vsel %vm53, 1, 0
  %v133 = vsel %vm54, 1, 0
  %vm134 = vcmp.eq.s32.totalorder %v132, 1
  %vm135 = vcmp.eq.s32.totalorder %v133, 1
  %v136 = vsel %vm134, %v131, 0.0
  %v137 = vsel %vm135, %v130, 0.0
  %v138 = vpack.c.bf16 %v136, %v136
  %v139 = vpack.c.bf16 %v137, %v137
  %vm140 = vcmask 31744
  %v142 = vsel %vm140, %v99, 0
  %vm144 = vcmask 1041408
  %v146 = vsel %vm144, %v138, 0
  %v149 = vsel %vm144, %v139, 0
  %151 = vmatprep.subr.bf16.mxu0 %v149
  %152 = vmatpush1.bf16.msra.mxu0 %v146
  %153 = vmatprep.subr.bf16.mxu0 0
  %154 = vmatpush1.bf16.msra.mxu0 0
  %155 = vmatprep.subr.bf16.mxu0 0
  %156 = vmatpush1.bf16.msra.mxu0 0
  %157 = vmatprep.subr.bf16.mxu0 0
  %158 = vmatpush1.bf16.msra.mxu0 0
  %159 = vmatprep.subr.bf16.mxu0 0
  %160 = vmatpush1.bf16.msra.mxu0 0
  %161 = vmatprep.subr.bf16.mxu0 0
  %162 = vmatpush1.bf16.msra.mxu0 0
  %163 = vmatprep.subr.bf16.mxu0 0
  %164 = vmatpush1.bf16.msra.mxu0 0
  %165 = vmatprep.subr.bf16.mxu0 0
  %166 = vmatpush1.bf16.msra.mxu0 0
  %167 = vmatprep.subr.bf16.mxu0 0
  %168 = vmatpush1.bf16.msra.mxu0 0
  %169 = vmatprep.subr.bf16.mxu0 0
  %170 = vmatpush1.bf16.msra.mxu0 0
  %171 = vmatprep.subr.bf16.mxu0 0
  %172 = vmatpush1.bf16.msra.mxu0 0
  %173 = vmatprep.subr.bf16.mxu0 0
  %174 = vmatpush1.bf16.msra.mxu0 0
  %175 = vmatprep.subr.bf16.mxu0 0
  %176 = vmatpush1.bf16.msra.mxu0 0
  %177 = vmatprep.subr.bf16.mxu0 0
  %178 = vmatpush1.bf16.msra.mxu0 0
  %179 = vmatprep.subr.bf16.mxu0 0
  %180 = vmatpush1.bf16.msra.mxu0 0
  %181 = vmatprep.subr.bf16.mxu0 0
  %182 = vmatpush1.bf16.msra.mxu0 0
  %183 = vmatprep.mubr.bf16.mxu0 0
  %184 = vmatmul.mubr.bf16.gmra.mrb[0].mxu0 %v142
  %v185 = vpop.f32.mrb[0].mxu0
  %v186 = vadd.f32 0.0, %v185
  %v187 = vpop.f32.mrb[0].mxu0
  %v188 = vadd.f32 0.0, %v187
  %v189 = vpop.f32.mrb[0].mxu0
  %v190 = vpop.f32.mrb[0].mxu0
  %191 = vdwg.mxu0
  %v193 = vsel %vm140, %v98, 0
  %v196 = vsel %vm144, %v123, 0
  %v199 = vsel %vm144, %v124, 0
  %201 = vmatprep.subr.bf16.mxu0 %v199
  %202 = vmatpush1.bf16.msra.mxu0 %v196
  %203 = vmatprep.subr.bf16.mxu0 0
  %204 = vmatpush1.bf16.msra.mxu0 0
  %205 = vmatprep.subr.bf16.mxu0 0
  %206 = vmatpush1.bf16.msra.mxu0 0
  %207 = vmatprep.subr.bf16.mxu0 0
  %208 = vmatpush1.bf16.msra.mxu0 0
  %209 = vmatprep.subr.bf16.mxu0 0
  %210 = vmatpush1.bf16.msra.mxu0 0
  %211 = vmatprep.subr.bf16.mxu0 0
  %212 = vmatpush1.bf16.msra.mxu0 0
  %213 = vmatprep.subr.bf16.mxu0 0
  %214 = vmatpush1.bf16.msra.mxu0 0
  %215 = vmatprep.subr.bf16.mxu0 0
  %216 = vmatpush1.bf16.msra.mxu0 0
  %217 = vmatprep.subr.bf16.mxu0 0
  %218 = vmatpush1.bf16.msra.mxu0 0
  %219 = vmatprep.subr.bf16.mxu0 0
  %220 = vmatpush1.bf16.msra.mxu0 0
  %221 = vmatprep.subr.bf16.mxu0 0
  %222 = vmatpush1.bf16.msra.mxu0 0
  %223 = vmatprep.subr.bf16.mxu0 0
  %224 = vmatpush1.bf16.msra.mxu0 0
  %225 = vmatprep.subr.bf16.mxu0 0
  %226 = vmatpush1.bf16.msra.mxu0 0
  %227 = vmatprep.subr.bf16.mxu0 0
  %228 = vmatpush1.bf16.msra.mxu0 0
  %229 = vmatprep.subr.bf16.mxu0 0
  %230 = vmatpush1.bf16.msra.mxu0 0
  %231 = vmatprep.subr.bf16.mxu0 0
  %232 = vmatpush1.bf16.msra.mxu0 0
  %233 = vmatprep.mubr.bf16.mxu0 0
  %234 = vmatmul.mubr.bf16.gmra.mrb[0].mxu0 %v193
  %v235 = vpop.f32.mrb[0].mxu0
  %v236 = vadd.f32 %v186, %v235
  %v237 = vpop.f32.mrb[0].mxu0
  %v238 = vadd.f32 %v188, %v237
  %v239 = vpop.f32.mrb[0].mxu0
  %v240 = vpop.f32.mrb[0].mxu0
  %241 = vdwg.mxu0
  %242 = vrot.lane.b32.xlu0 %v97, 2
  %v243 = vpop.permute.xlu0 %242
  %244 = vrot.lane.b32.xlu0 %v108, 2
  %v245 = vpop.permute.xlu0 %244
  %vm246 = vcmp.lt.s32.totalorder %v25, 2
  %v247 = vsel %vm246, %v243, %v245
  %v248 = vsel %vm246, %v245, %v243
  %v249 = vsel %vm55, 1, 0
  %v250 = vsel %vm56, 1, 0
  %vm251 = vcmp.eq.s32.totalorder %v249, 1
  %vm252 = vcmp.eq.s32.totalorder %v250, 1
  %v253 = vsel %vm251, %v248, 0.0
  %v254 = vsel %vm252, %v247, 0.0
  %v255 = vpack.c.bf16 %v253, %v253
  %v256 = vpack.c.bf16 %v254, %v254
  %v258 = vsel %vm140, %v100, 0
  %v261 = vsel %vm144, %v255, 0
  %v264 = vsel %vm144, %v256, 0
  %266 = vmatprep.subr.bf16.mxu0 %v264
  %267 = vmatpush1.bf16.msra.mxu0 %v261
  %268 = vmatprep.subr.bf16.mxu0 0
  %269 = vmatpush1.bf16.msra.mxu0 0
  %270 = vmatprep.subr.bf16.mxu0 0
  %271 = vmatpush1.bf16.msra.mxu0 0
  %272 = vmatprep.subr.bf16.mxu0 0
  %273 = vmatpush1.bf16.msra.mxu0 0
  %274 = vmatprep.subr.bf16.mxu0 0
  %275 = vmatpush1.bf16.msra.mxu0 0
  %276 = vmatprep.subr.bf16.mxu0 0
  %277 = vmatpush1.bf16.msra.mxu0 0
  %278 = vmatprep.subr.bf16.mxu0 0
  %279 = vmatpush1.bf16.msra.mxu0 0
  %280 = vmatprep.subr.bf16.mxu0 0
  %281 = vmatpush1.bf16.msra.mxu0 0
  %282 = vmatprep.subr.bf16.mxu0 0
  %283 = vmatpush1.bf16.msra.mxu0 0
  %284 = vmatprep.subr.bf16.mxu0 0
  %285 = vmatpush1.bf16.msra.mxu0 0
  %286 = vmatprep.subr.bf16.mxu0 0
  %287 = vmatpush1.bf16.msra.mxu0 0
  %288 = vmatprep.subr.bf16.mxu0 0
  %289 = vmatpush1.bf16.msra.mxu0 0
  %290 = vmatprep.subr.bf16.mxu0 0
  %291 = vmatpush1.bf16.msra.mxu0 0
  %292 = vmatprep.subr.bf16.mxu0 0
  %293 = vmatpush1.bf16.msra.mxu0 0
  %294 = vmatprep.subr.bf16.mxu0 0
  %295 = vmatpush1.bf16.msra.mxu0 0
  %296 = vmatprep.subr.bf16.mxu0 0
  %297 = vmatpush1.bf16.msra.mxu0 0
  %298 = vmatprep.mubr.bf16.mxu0 0
  %299 = vmatmul.mubr.bf16.gmra.mrb[0].mxu0 %v258
  %v300 = vpop.f32.mrb[0].mxu0
  %v301 = vadd.f32 0.0, %v300
  %v302 = vpop.f32.mrb[0].mxu0
  %v303 = vadd.f32 0.0, %v302
  %v304 = vpop.f32.mrb[0].mxu0
  %v305 = vpop.f32.mrb[0].mxu0
  %306 = vdwg.mxu0
  %v307 = vadd.f32 %v236, %v301
  %v308 = vadd.f32 %v238, %v303
  %309 = vrot.lane.b32.xlu0 %v97, 1
  %v310 = vpop.permute.xlu0 %309
  %311 = vrot.lane.b32.xlu0 %v108, 1
  %v312 = vpop.permute.xlu0 %311
  %vm313 = vcmp.lt.s32.totalorder %v25, 1
  %v314 = vsel %vm313, %v310, %v312
  %v315 = vsel %vm313, %v312, %v310
  %v316 = vsel %vm57, 1, 0
  %v317 = vsel %vm58, 1, 0
  %vm318 = vcmp.eq.s32.totalorder %v316, 1
  %vm319 = vcmp.eq.s32.totalorder %v317, 1
  %v320 = vsel %vm318, %v315, 0.0
  %v321 = vsel %vm319, %v314, 0.0
  %v322 = vpack.c.bf16 %v320, %v320
  %v323 = vpack.c.bf16 %v321, %v321
  %v325 = vsel %vm140, %v101, 0
  %v328 = vsel %vm144, %v322, 0
  %v331 = vsel %vm144, %v323, 0
  %333 = vmatprep.subr.bf16.mxu0 %v331
  %334 = vmatpush1.bf16.msra.mxu0 %v328
  %335 = vmatprep.subr.bf16.mxu0 0
  %336 = vmatpush1.bf16.msra.mxu0 0
  %337 = vmatprep.subr.bf16.mxu0 0
  %338 = vmatpush1.bf16.msra.mxu0 0
  %339 = vmatprep.subr.bf16.mxu0 0
  %340 = vmatpush1.bf16.msra.mxu0 0
  %341 = vmatprep.subr.bf16.mxu0 0
  %342 = vmatpush1.bf16.msra.mxu0 0
  %343 = vmatprep.subr.bf16.mxu0 0
  %344 = vmatpush1.bf16.msra.mxu0 0
  %345 = vmatprep.subr.bf16.mxu0 0
  %346 = vmatpush1.bf16.msra.mxu0 0
  %347 = vmatprep.subr.bf16.mxu0 0
  %348 = vmatpush1.bf16.msra.mxu0 0
  %349 = vmatprep.subr.bf16.mxu0 0
  %350 = vmatpush1.bf16.msra.mxu0 0
  %351 = vmatprep.subr.bf16.mxu0 0
  %352 = vmatpush1.bf16.msra.mxu0 0
  %353 = vmatprep.subr.bf16.mxu0 0
  %354 = vmatpush1.bf16.msra.mxu0 0
  %355 = vmatprep.subr.bf16.mxu0 0
  %356 = vmatpush1.bf16.msra.mxu0 0
  %357 = vmatprep.subr.bf16.mxu0 0
  %358 = vmatpush1.bf16.msra.mxu0 0
  %359 = vmatprep.subr.bf16.mxu0 0
  %360 = vmatpush1.bf16.msra.mxu0 0
  %361 = vmatprep.subr.bf16.mxu0 0
  %362 = vmatpush1.bf16.msra.mxu0 0
  %363 = vmatprep.subr.bf16.mxu0 0
  %364 = vmatpush1.bf16.msra.mxu0 0
  %365 = vmatprep.mubr.bf16.mxu0 0
  %366 = vmatmul.mubr.bf16.gmra.mrb[0].mxu0 %v325
  %v367 = vpop.f32.mrb[0].mxu0
  %v368 = vadd.f32 0.0, %v367
  %v369 = vpop.f32.mrb[0].mxu0
  %v370 = vadd.f32 0.0, %v369
  %v371 = vpop.f32.mrb[0].mxu0
  %v372 = vpop.f32.mrb[0].mxu0
  %373 = vdwg.mxu0
  %v374 = vadd.f32 %v307, %v368
  %v375 = vadd.f32 %v308, %v370
  %v376 = vpack.c.bf16 %v97, %v97
  %v377 = vpack.c.bf16 %v108, %v108
  %v379 = vsel %vm140, %v102, 0
  %v382 = vsel %vm144, %v376, 0
  %v385 = vsel %vm144, %v377, 0
  %387 = vmatprep.subr.bf16.mxu0 %v385
  %388 = vmatpush1.bf16.msra.mxu0 %v382
  %389 = vmatprep.subr.bf16.mxu0 0
  %390 = vmatpush1.bf16.msra.mxu0 0
  %391 = vmatprep.subr.bf16.mxu0 0
  %392 = vmatpush1.bf16.msra.mxu0 0
  %393 = vmatprep.subr.bf16.mxu0 0
  %394 = vmatpush1.bf16.msra.mxu0 0
  %395 = vmatprep.subr.bf16.mxu0 0
  %396 = vmatpush1.bf16.msra.mxu0 0
  %397 = vmatprep.subr.bf16.mxu0 0
  %398 = vmatpush1.bf16.msra.mxu0 0
  %399 = vmatprep.subr.bf16.mxu0 0
  %400 = vmatpush1.bf16.msra.mxu0 0
  %401 = vmatprep.subr.bf16.mxu0 0
  %402 = vmatpush1.bf16.msra.mxu0 0
  %403 = vmatprep.subr.bf16.mxu0 0
  %404 = vmatpush1.bf16.msra.mxu0 0
  %405 = vmatprep.subr.bf16.mxu0 0
  %406 = vmatpush1.bf16.msra.mxu0 0
  %407 = vmatprep.subr.bf16.mxu0 0
  %408 = vmatpush1.bf16.msra.mxu0 0
  %409 = vmatprep.subr.bf16.mxu0 0
  %410 = vmatpush1.bf16.msra.mxu0 0
  %411 = vmatprep.subr.bf16.mxu0 0
  %412 = vmatpush1.bf16.msra.mxu0 0
  %413 = vmatprep.subr.bf16.mxu0 0
  %414 = vmatpush1.bf16.msra.mxu0 0
  %415 = vmatprep.subr.bf16.mxu0 0
  %416 = vmatpush1.bf16.msra.mxu0 0
  %417 = vmatprep.subr.bf16.mxu0 0
  %418 = vmatpush1.bf16.msra.mxu0 0
  %419 = vmatprep.mubr.bf16.mxu0 0
  %420 = vmatmul.mubr.bf16.gmra.mrb[0].mxu0 %v379
  %v421 = vpop.f32.mrb[0].mxu0
  %v422 = vadd.f32 0.0, %v421
  %v423 = vpop.f32.mrb[0].mxu0
  %v424 = vadd.f32 0.0, %v423
  %v425 = vpop.f32.mrb[0].mxu0
  %v426 = vpop.f32.mrb[0].mxu0
  %427 = vdwg.mxu0
  %v428 = vadd.f32 %v374, %v422
  %v429 = vadd.f32 %v375, %v424
  %430 = vrot.lane.b32.xlu0 %v97, 127
  %v431 = vpop.permute.xlu0 %430
  %432 = vrot.lane.b32.xlu0 %v108, 127
  %v433 = vpop.permute.xlu0 %432
  %vm434 = vcmp.lt.s32.totalorder %v25, 127
  %v435 = vsel %vm434, %v431, %v433
  %v436 = vsel %vm434, %v433, %v431
  %v437 = vsel %vm59, 1, 0
  %v438 = vsel %vm60, 1, 0
  %vm439 = vcmp.eq.s32.totalorder %v437, 1
  %vm440 = vcmp.eq.s32.totalorder %v438, 1
  %v441 = vsel %vm439, %v435, 0.0
  %v442 = vsel %vm440, %v436, 0.0
  %v443 = vpack.c.bf16 %v441, %v441
  %v444 = vpack.c.bf16 %v442, %v442
  %v446 = vsel %vm140, %v103, 0
  %v449 = vsel %vm144, %v443, 0
  %v452 = vsel %vm144, %v444, 0
  %454 = vmatprep.subr.bf16.mxu0 %v452
  %455 = vmatpush1.bf16.msra.mxu0 %v449
  %456 = vmatprep.subr.bf16.mxu0 0
  %457 = vmatpush1.bf16.msra.mxu0 0
  %458 = vmatprep.subr.bf16.mxu0 0
  %459 = vmatpush1.bf16.msra.mxu0 0
  %460 = vmatprep.subr.bf16.mxu0 0
  %461 = vmatpush1.bf16.msra.mxu0 0
  %462 = vmatprep.subr.bf16.mxu0 0
  %463 = vmatpush1.bf16.msra.mxu0 0
  %464 = vmatprep.subr.bf16.mxu0 0
  %465 = vmatpush1.bf16.msra.mxu0 0
  %466 = vmatprep.subr.bf16.mxu0 0
  %467 = vmatpush1.bf16.msra.mxu0 0
  %468 = vmatprep.subr.bf16.mxu0 0
  %469 = vmatpush1.bf16.msra.mxu0 0
  %470 = vmatprep.subr.bf16.mxu0 0
  %471 = vmatpush1.bf16.msra.mxu0 0
  %472 = vmatprep.subr.bf16.mxu0 0
  %473 = vmatpush1.bf16.msra.mxu0 0
  %474 = vmatprep.subr.bf16.mxu0 0
  %475 = vmatpush1.bf16.msra.mxu0 0
  %476 = vmatprep.subr.bf16.mxu0 0
  %477 = vmatpush1.bf16.msra.mxu0 0
  %478 = vmatprep.subr.bf16.mxu0 0
  %479 = vmatpush1.bf16.msra.mxu0 0
  %480 = vmatprep.subr.bf16.mxu0 0
  %481 = vmatpush1.bf16.msra.mxu0 0
  %482 = vmatprep.subr.bf16.mxu0 0
  %483 = vmatpush1.bf16.msra.mxu0 0
  %484 = vmatprep.subr.bf16.mxu0 0
  %485 = vmatpush1.bf16.msra.mxu0 0
  %486 = vmatprep.mubr.bf16.mxu0 0
  %487 = vmatmul.mubr.bf16.gmra.mrb[0].mxu0 %v446
  %v488 = vpop.f32.mrb[0].mxu0
  %v489 = vadd.f32 0.0, %v488
  %v490 = vpop.f32.mrb[0].mxu0
  %v491 = vadd.f32 0.0, %v490
  %v492 = vpop.f32.mrb[0].mxu0
  %v493 = vpop.f32.mrb[0].mxu0
  %494 = vdwg.mxu0
  %v495 = vadd.f32 %v428, %v489
  %v496 = vadd.f32 %v429, %v491
  %497 = vrot.lane.b32.xlu0 %v97, 126
  %v498 = vpop.permute.xlu0 %497
  %499 = vrot.lane.b32.xlu0 %v108, 126
  %v500 = vpop.permute.xlu0 %499
  %vm501 = vcmp.lt.s32.totalorder %v25, 126
  %v502 = vsel %vm501, %v498, %v500
  %v503 = vsel %vm501, %v500, %v498
  %v504 = vsel %vm61, 1, 0
  %v505 = vsel %vm62, 1, 0
  %vm506 = vcmp.eq.s32.totalorder %v504, 1
  %vm507 = vcmp.eq.s32.totalorder %v505, 1
  %v508 = vsel %vm506, %v502, 0.0
  %v509 = vsel %vm507, %v503, 0.0
  %v510 = vpack.c.bf16 %v508, %v508
  %v511 = vpack.c.bf16 %v509, %v509
  %v513 = vsel %vm140, %v104, 0
  %v516 = vsel %vm144, %v510, 0
  %v519 = vsel %vm144, %v511, 0
  %521 = vmatprep.subr.bf16.mxu0 %v519
  %522 = vmatpush1.bf16.msra.mxu0 %v516
  %523 = vmatprep.subr.bf16.mxu0 0
  %524 = vmatpush1.bf16.msra.mxu0 0
  %525 = vmatprep.subr.bf16.mxu0 0
  %526 = vmatpush1.bf16.msra.mxu0 0
  %527 = vmatprep.subr.bf16.mxu0 0
  %528 = vmatpush1.bf16.msra.mxu0 0
  %529 = vmatprep.subr.bf16.mxu0 0
  %530 = vmatpush1.bf16.msra.mxu0 0
  %531 = vmatprep.subr.bf16.mxu0 0
  %532 = vmatpush1.bf16.msra.mxu0 0
  %533 = vmatprep.subr.bf16.mxu0 0
  %534 = vmatpush1.bf16.msra.mxu0 0
  %535 = vmatprep.subr.bf16.mxu0 0
  %536 = vmatpush1.bf16.msra.mxu0 0
  %537 = vmatprep.subr.bf16.mxu0 0
  %538 = vmatpush1.bf16.msra.mxu0 0
  %539 = vmatprep.subr.bf16.mxu0 0
  %540 = vmatpush1.bf16.msra.mxu0 0
  %541 = vmatprep.subr.bf16.mxu0 0
  %542 = vmatpush1.bf16.msra.mxu0 0
  %543 = vmatprep.subr.bf16.mxu0 0
  %544 = vmatpush1.bf16.msra.mxu0 0
  %545 = vmatprep.subr.bf16.mxu0 0
  %546 = vmatpush1.bf16.msra.mxu0 0
  %547 = vmatprep.subr.bf16.mxu0 0
  %548 = vmatpush1.bf16.msra.mxu0 0
  %549 = vmatprep.subr.bf16.mxu0 0
  %550 = vmatpush1.bf16.msra.mxu0 0
  %551 = vmatprep.subr.bf16.mxu0 0
  %552 = vmatpush1.bf16.msra.mxu0 0
  %553 = vmatprep.mubr.bf16.mxu0 0
  %554 = vmatmul.mubr.bf16.gmra.mrb[0].mxu0 %v513
  %v555 = vpop.f32.mrb[0].mxu0
  %v556 = vadd.f32 0.0, %v555
  %v557 = vpop.f32.mrb[0].mxu0
  %v558 = vadd.f32 0.0, %v557
  %v559 = vpop.f32.mrb[0].mxu0
  %v560 = vpop.f32.mrb[0].mxu0
  %561 = vdwg.mxu0
  %v562 = vadd.f32 %v495, %v556
  %v563 = vadd.f32 %v496, %v558
  %564 = vrot.lane.b32.xlu0 %v97, 125
  %v565 = vpop.permute.xlu0 %564
  %566 = vrot.lane.b32.xlu0 %v108, 125
  %v567 = vpop.permute.xlu0 %566
  %vm568 = vcmp.lt.s32.totalorder %v25, 125
  %v569 = vsel %vm568, %v565, %v567
  %v570 = vsel %vm568, %v567, %v565
  %v571 = vsel %vm63, 1, 0
  %v572 = vsel %vm64, 1, 0
  %vm573 = vcmp.eq.s32.totalorder %v571, 1
  %vm574 = vcmp.eq.s32.totalorder %v572, 1
  %v575 = vsel %vm573, %v569, 0.0
  %v576 = vsel %vm574, %v570, 0.0
  %v577 = vpack.c.bf16 %v575, %v575
  %v578 = vpack.c.bf16 %v576, %v576
  %v580 = vsel %vm140, %v105, 0
  %v583 = vsel %vm144, %v577, 0
  %v586 = vsel %vm144, %v578, 0
  %588 = vmatprep.subr.bf16.mxu0 %v586
  %589 = vmatpush1.bf16.msra.mxu0 %v583
  %590 = vmatprep.subr.bf16.mxu0 0
  %591 = vmatpush1.bf16.msra.mxu0 0
  %592 = vmatprep.subr.bf16.mxu0 0
  %593 = vmatpush1.bf16.msra.mxu0 0
  %594 = vmatprep.subr.bf16.mxu0 0
  %595 = vmatpush1.bf16.msra.mxu0 0
  %596 = vmatprep.subr.bf16.mxu0 0
  %597 = vmatpush1.bf16.msra.mxu0 0
  %598 = vmatprep.subr.bf16.mxu0 0
  %599 = vmatpush1.bf16.msra.mxu0 0
  %600 = vmatprep.subr.bf16.mxu0 0
  %601 = vmatpush1.bf16.msra.mxu0 0
  %602 = vmatprep.subr.bf16.mxu0 0
  %603 = vmatpush1.bf16.msra.mxu0 0
  %604 = vmatprep.subr.bf16.mxu0 0
  %605 = vmatpush1.bf16.msra.mxu0 0
  %606 = vmatprep.subr.bf16.mxu0 0
  %607 = vmatpush1.bf16.msra.mxu0 0
  %608 = vmatprep.subr.bf16.mxu0 0
  %609 = vmatpush1.bf16.msra.mxu0 0
  %610 = vmatprep.subr.bf16.mxu0 0
  %611 = vmatpush1.bf16.msra.mxu0 0
  %612 = vmatprep.subr.bf16.mxu0 0
  %613 = vmatpush1.bf16.msra.mxu0 0
  %614 = vmatprep.subr.bf16.mxu0 0
  %615 = vmatpush1.bf16.msra.mxu0 0
  %616 = vmatprep.subr.bf16.mxu0 0
  %617 = vmatpush1.bf16.msra.mxu0 0
  %618 = vmatprep.subr.bf16.mxu0 0
  %619 = vmatpush1.bf16.msra.mxu0 0
  %620 = vmatprep.mubr.bf16.mxu0 0
  %621 = vmatmul.mubr.bf16.gmra.mrb[0].mxu0 %v580
  %v622 = vpop.f32.mrb[0].mxu0
  %v623 = vadd.f32 0.0, %v622
  %v624 = vpop.f32.mrb[0].mxu0
  %v625 = vadd.f32 0.0, %v624
  %v626 = vpop.f32.mrb[0].mxu0
  %v627 = vpop.f32.mrb[0].mxu0
  %628 = vdwg.mxu0
  %v629 = vadd.f32 %v562, %v623
  %v630 = vadd.f32 %v563, %v625
  %631 = vrot.lane.b32.xlu0 %v97, 124
  %v632 = vpop.permute.xlu0 %631
  %633 = vrot.lane.b32.xlu0 %v108, 124
  %v634 = vpop.permute.xlu0 %633
  %vm635 = vcmp.lt.s32.totalorder %v25, 124
  %v636 = vsel %vm635, %v632, %v634
  %v637 = vsel %vm635, %v634, %v632
  %v638 = vsel %vm65, 1, 0
  %v639 = vsel %vm66, 1, 0
  %vm640 = vcmp.eq.s32.totalorder %v638, 1
  %vm641 = vcmp.eq.s32.totalorder %v639, 1
  %v642 = vsel %vm640, %v636, 0.0
  %v643 = vsel %vm641, %v637, 0.0
  %v644 = vpack.c.bf16 %v642, %v642
  %v645 = vpack.c.bf16 %v643, %v643
  %v647 = vsel %vm140, %v106, 0
  %v650 = vsel %vm144, %v644, 0
  %v653 = vsel %vm144, %v645, 0
  %655 = vmatprep.subr.bf16.mxu0 %v653
  %656 = vmatpush1.bf16.msra.mxu0 %v650
  %657 = vmatprep.subr.bf16.mxu0 0
  %658 = vmatpush1.bf16.msra.mxu0 0
  %659 = vmatprep.subr.bf16.mxu0 0
  %660 = vmatpush1.bf16.msra.mxu0 0
  %661 = vmatprep.subr.bf16.mxu0 0
  %662 = vmatpush1.bf16.msra.mxu0 0
  %663 = vmatprep.subr.bf16.mxu0 0
  %664 = vmatpush1.bf16.msra.mxu0 0
  %665 = vmatprep.subr.bf16.mxu0 0
  %666 = vmatpush1.bf16.msra.mxu0 0
  %667 = vmatprep.subr.bf16.mxu0 0
  %668 = vmatpush1.bf16.msra.mxu0 0
  %669 = vmatprep.subr.bf16.mxu0 0
  %670 = vmatpush1.bf16.msra.mxu0 0
  %671 = vmatprep.subr.bf16.mxu0 0
  %672 = vmatpush1.bf16.msra.mxu0 0
  %673 = vmatprep.subr.bf16.mxu0 0
  %674 = vmatpush1.bf16.msra.mxu0 0
  %675 = vmatprep.subr.bf16.mxu0 0
  %676 = vmatpush1.bf16.msra.mxu0 0
  %677 = vmatprep.subr.bf16.mxu0 0
  %678 = vmatpush1.bf16.msra.mxu0 0
  %679 = vmatprep.subr.bf16.mxu0 0
  %680 = vmatpush1.bf16.msra.mxu0 0
  %681 = vmatprep.subr.bf16.mxu0 0
  %682 = vmatpush1.bf16.msra.mxu0 0
  %683 = vmatprep.subr.bf16.mxu0 0
  %684 = vmatpush1.bf16.msra.mxu0 0
  %685 = vmatprep.subr.bf16.mxu0 0
  %686 = vmatpush1.bf16.msra.mxu0 0
  %687 = vmatprep.mubr.bf16.mxu0 0
  %688 = vmatmul.mubr.bf16.gmra.mrb[0].mxu0 %v647
  %v689 = vpop.f32.mrb[0].mxu0
  %v690 = vadd.f32 0.0, %v689
  %v691 = vpop.f32.mrb[0].mxu0
  %v692 = vadd.f32 0.0, %v691
  %v693 = vpop.f32.mrb[0].mxu0
  %v694 = vpop.f32.mrb[0].mxu0
  %695 = vdwg.mxu0
  %v696 = vadd.f32 %v629, %v690
  %v697 = vadd.f32 %v630, %v692
  %v698 = vld [vmem:[%s4] sm:$0xf]
  %700 = vset.pattern.permute.xlu0 0
  %701 = vperm.xlu0 %700, %v698
  %v702 = vpop.permute.xlu0 %701
  %v704 = vadd.f32 %v696, %v702
  %v705 = vadd.f32 %v697, %v702
  %v706 = vpack.c.bf16 %v704, %v704
  %v707 = vpack.c.bf16 %v705, %v705
  %v710 = vcombine.low %v706, %v707
  %v712 = vunpack.c.l.s4 1983009808
  %v713 = vunpack.c.0.s8 %v712
  %v714 = vlaneseq
  %v715 = vshrl.u32 %v714, 7
  %v716 = vsub.s32 %v713, %v715
  %v717 = vrot.slane %v710, %v716
  %719 = vst [vmem:[%s5] sm:$0xf] %v717
  %v720 = vunpack.c.l.bf16 %v706
  %v721 = vunpack.c.l.bf16 %v707
  %v722 = vmul.f32 %v720, %v720
  %v723 = vadd.f32 %v720, %v721
  %v724 = vmul.f32 %v721, %v721
  %v725 = vadd.f32 %v722, %v724
  %726 = vst [vmem:[%s6] sm:$0xf] %v723
  %727 = vst [vmem:[%s7] sm:$0xf] %v725
  // Predicated region
  $region22: #{dense_block.3} parent=0 // pred_check
    _
  $region23: #{dense_block.3} parent=0 // pred_check_branch
    %729 = sbr.rel (0) target = $region25
  $region24: #{dense_block.3} parent=0 // pred_region
    _
  $region25: #{dense_block.3} parent=0 // pred_fallthru
    _
  // Predicated region
  $region26: #{dense_block.3} parent=0 // pred_check
    _
  $region27: #{dense_block.3} parent=0 // pred_check_branch
    %731 = sbr.rel (0) target = $region29
  $region28: #{dense_block.3} parent=0 // pred_region
    _
  $region29: #{dense_block.3} parent=0 // pred_fallthru
    _
  // Predicated region
  $region30: #{dense_block.3} parent=0 // pred_check
    _
  $region31: #{dense_block.3} parent=0 // pred_check_branch
    %733 = sbr.rel (0) target = $region33
  $region32: #{dense_block.3} parent=0 // pred_region
    _
  $region33: #{dense_block.3} parent=0 // pred_fallthru
    _
  // Predicated region
  $region34: #{dense_block.3} parent=0 // pred_check
    _
  $region35: #{dense_block.3} parent=0 // pred_check_branch
    %735 = sbr.rel (0) target = $region37
  $region36: #{dense_block.3} parent=0 // pred_region
    _
  $region37: #{dense_block.3} parent=0 // pred_fallthru
    _
  // Predicated region
  $region38: #{dense_block.3} parent=0 // pred_check
    _
  $region39: #{dense_block.3} parent=0 // pred_check_branch
    %737 = sbr.rel (0) target = $region41
  $region40: #{dense_block.3} parent=0 // pred_region
    _
  $region41: #{dense_block.3} parent=0 // pred_fallthru
    _
  // Predicated region
  $region42: #{dense_block.3} parent=0 // pred_check
    _
  $region43: #{dense_block.3} parent=0 // pred_check_branch
    %739 = sbr.rel (0) target = $region45
  $region44: #{dense_block.3} parent=0 // pred_region
    _
  $region45: #{dense_block.3} parent=0 // pred_fallthru
    _

// kernel: dense_block.4
$region0: #{dense_block.4}
  #allocation0 [shape = 'u32[]', space=smem, size = 0x4, offset = 0x4, fixed_abs, tag = 'smem constant byte address 0x4 - core index']
  #allocation1 [shape = 'u32[144,128]{1,0:T(1,128)}', space=vmem, size = 0x12000, scoped, tag = 'internal scratch']
  %s0 = inlined_call_operand.vmem [shape: bf16[4,256], index: 0, kind: input, shape index: {}]
  %s1 = inlined_call_operand.vmem [shape: bf16[4,256], index: 1, kind: input, shape index: {}]
  %s2 = inlined_call_operand.vmem [shape: bf16[9,4,4], index: 2, kind: input, shape index: {}]
  %s3 = inlined_call_operand.vmem [shape: bf16[9,4,4], index: 3, kind: input, shape index: {}]
  %s4 = inlined_call_operand.vmem [shape: f32[4,1], index: 4, kind: input, shape index: {}]
  %s5 = inlined_call_operand.vmem [shape: f32[4,1], index: 5, kind: input, shape index: {}]
  %s6 = inlined_call_operand.vmem [shape: f32[4,1], index: 6, kind: input, shape index: {}]
  %s7 = inlined_call_operand.vmem [shape: f32[4,1], index: 7, kind: input, shape index: {}]
  %s8 = inlined_call_operand.vmem [shape: f32[4,1], index: 8, kind: input, shape index: {}]
  %s9 = inlined_call_operand.vmem [shape: bf16[4,256], index: 9, kind: output, shape index: {0}]
  %s10 = inlined_call_operand.vmem [shape: f32[1,4,128], index: 10, kind: output, shape index: {1}]
  %s11 = inlined_call_operand.vmem [shape: f32[1,4,128], index: 11, kind: output, shape index: {2}]
  %12 = xla_tuple %s9, %s10, %s11
  %s13 = sld [smem:[#allocation0]]
  $region62: #{dense_block.4} parent=0
    _
  %s15 = ssub.s32 1, %s13
  %s16 = scalar_select 0, %s15, %s13
  // Predicated region
  $region2: #{dense_block.4} parent=0 // pred_check
    _
  $region3: #{dense_block.4} parent=0 // pred_check_branch
    %18 = sbr.rel (0) target = $region5
  $region4: #{dense_block.4} parent=0 // pred_region
    _
  $region5: #{dense_block.4} parent=0 // pred_fallthru
    _
  // Predicated region
  $region6: #{dense_block.4} parent=0 // pred_check
    _
  $region7: #{dense_block.4} parent=0 // pred_check_branch
    %20 = sbr.rel (0) target = $region9
  $region8: #{dense_block.4} parent=0 // pred_region
    _
  $region9: #{dense_block.4} parent=0 // pred_fallthru
    _
  // Predicated region
  $region10: #{dense_block.4} parent=0 // pred_check
    _
  $region11: #{dense_block.4} parent=0 // pred_check_branch
    %22 = sbr.rel (0) target = $region13
  $region12: #{dense_block.4} parent=0 // pred_region
    _
  $region13: #{dense_block.4} parent=0 // pred_fallthru
    _
  // Predicated region
  $region14: #{dense_block.4} parent=0 // pred_check
    _
  $region15: #{dense_block.4} parent=0 // pred_check_branch
    %24 = sbr.rel (0) target = $region17
  $region16: #{dense_block.4} parent=0 // pred_region
    _
  $region17: #{dense_block.4} parent=0 // pred_fallthru
    _
  // Predicated region
  $region18: #{dense_block.4} parent=0 // pred_check
    _
  $region19: #{dense_block.4} parent=0 // pred_check_branch
    %26 = sbr.rel (0) target = $region21
  $region20: #{dense_block.4} parent=0 // pred_region
    _
  $region21: #{dense_block.4} parent=0 // pred_fallthru
    _
  // Predicated region
  $region22: #{dense_block.4} parent=0 // pred_check
    _
  $region23: #{dense_block.4} parent=0 // pred_check_branch
    %28 = sbr.rel (0) target = $region25
  $region24: #{dense_block.4} parent=0 // pred_region
    _
  $region25: #{dense_block.4} parent=0 // pred_fallthru
    _
  // Predicated region
  $region26: #{dense_block.4} parent=0 // pred_check
    _
  $region27: #{dense_block.4} parent=0 // pred_check_branch
    %30 = sbr.rel (0) target = $region29
  $region28: #{dense_block.4} parent=0 // pred_region
    _
  $region29: #{dense_block.4} parent=0 // pred_fallthru
    _
  // Predicated region
  $region30: #{dense_block.4} parent=0 // pred_check
    _
  $region31: #{dense_block.4} parent=0 // pred_check_branch
    %32 = sbr.rel (0) target = $region33
  $region32: #{dense_block.4} parent=0 // pred_region
    _
  $region33: #{dense_block.4} parent=0 // pred_fallthru
    _
  // Predicated region
  $region34: #{dense_block.4} parent=0 // pred_check
    _
  $region35: #{dense_block.4} parent=0 // pred_check_branch
    %34 = sbr.rel (0) target = $region37
  $region36: #{dense_block.4} parent=0 // pred_region
    _
  $region37: #{dense_block.4} parent=0 // pred_fallthru
    _
  %v36 = vlaneseq
  %v37 = vand.u32 %v36, 127
  %v38 = vadd.s32 %v37, 128
  %vm39 = vcmp.lt.s32.totalorder %v37, 0
  %v40 = vsub.s32 0, %v37
  %v41 = vsel %vm39, %v40, %v37
  %v42 = vshrl.u32 %v41, 4
  %v43 = vand.u32 %v41, 15
  %v44 = vsub.s32 0, %v43
  %v45 = vsel %vm39, %v44, %v43
  %vm46 = vcmp.lt.s32.totalorder %v38, 0
  %v47 = vsub.s32 0, %v38
  %v48 = vsel %vm46, %v47, %v38
  %v49 = vshrl.u32 %v48, 4
  %v50 = vand.u32 %v48, 15
  %v51 = vsub.s32 0, %v50
  %v52 = vsel %vm46, %v51, %v50
  %vm53 = vcmp.ne.s32.totalorder %v45, 0
  %vm54 = vcmp.ne.s32.totalorder %v52, 0
  %vm55 = vcmp.lt.s32.totalorder %v45, 0
  %vm56 = vcmp.lt.s32.totalorder %v52, 0
  %vm57 = vmand %vm55, %vm53
  %vm58 = vmand %vm56, %vm54
  %v59 = vadd.s32 %v45, 16
  %v60 = vadd.s32 %v52, 16
  %v61 = vsel %vm57, %v59, %v45
  %v62 = vsel %vm58, %v60, %v52
  %vm63 = vcmp.ge.s32.totalorder %v61, 4
  %vm64 = vcmp.ge.s32.totalorder %v62, 4
  %vm65 = vcmp.ge.s32.totalorder %v61, 3
  %vm66 = vcmp.ge.s32.totalorder %v62, 3
  %vm67 = vcmp.ge.s32.totalorder %v61, 2
  %vm68 = vcmp.ge.s32.totalorder %v62, 2
  %vm69 = vcmp.ge.s32.totalorder %v61, 1
  %vm70 = vcmp.ge.s32.totalorder %v62, 1
  %vm71 = vcmp.lt.s32.totalorder %v61, 15
  %vm72 = vcmp.lt.s32.totalorder %v62, 15
  %vm73 = vcmp.lt.s32.totalorder %v61, 14
  %vm74 = vcmp.lt.s32.totalorder %v62, 14
  %vm75 = vcmp.lt.s32.totalorder %v61, 13
  %vm76 = vcmp.lt.s32.totalorder %v62, 13
  %vm77 = vcmp.lt.s32.totalorder %v61, 12
  %vm78 = vcmp.lt.s32.totalorder %v62, 12
  %v79 = vld [vmem:[%s0] sm:$0xf]
  %v80 = vld [vmem:[%s4] sm:$0xf]
  %v81 = vunpack.c.l.bf16 %v79
  %83 = vset.pattern.permute.xlu0 0
  %84 = vperm.xlu0 %83, %v80
  %v85 = vpop.permute.xlu0 %84
  %v87 = vunpack.c.l.s4 839922192
  %v88 = vunpack.c.0.s8 %v87
  %v89 = vlaneseq
  %v90 = vshrl.u32 %v89, 7
  %v91 = vsub.s32 %v88, %v90
  %v92 = vrot.slane %v85, %v91
  %v94 = vmul.f32 %v81, %v92
  %v95 = vld [vmem:[%s6] sm:$0xf]
  %97 = vset.pattern.permute.xlu0 0
  %98 = vperm.xlu0 %97, %v95
  %v99 = vpop.permute.xlu0 %98
  %v101 = vunpack.c.l.s4 839922192
  %v102 = vunpack.c.0.s8 %v101
  %v103 = vlaneseq
  %v104 = vshrl.u32 %v103, 7
  %v105 = vsub.s32 %v102, %v104
  %v106 = vrot.slane %v99, %v105
  %v108 = vadd.f32 %v94, %v106
  %v109 = vmax.f32 %v108, 0.0
  %v110 = vld [vmem:[%s2] sm:$0x3]
  %v111 = vld [vmem:[%s2 + $0x2] sm:$0x3]
  %v112 = vld [vmem:[%s2 + $0x4] sm:$0x3]
  %v113 = vld [vmem:[%s2 + $0x6] sm:$0x3]
  %v114 = vld [vmem:[%s2 + $0x8] sm:$0x3]
  %v115 = vld [vmem:[%s2 + $0xa] sm:$0x3]
  %v116 = vld [vmem:[%s2 + $0xc] sm:$0x3]
  %v117 = vld [vmem:[%s2 + $0xe] sm:$0x3]
  %v118 = vld [vmem:[%s2 + $0x10] sm:$0x3]
  %v120 = vcombine.high %v109, %v109
  %122 = vrot.lane.b32.xlu0 %v109, 4
  %v123 = vpop.permute.xlu0 %122
  %124 = vrot.lane.b32.xlu0 %v120, 4
  %v125 = vpop.permute.xlu0 %124
  %vm126 = vcmp.lt.s32.totalorder %v37, 4
  %v127 = vsel %vm126, %v123, %v125
  %v128 = vsel %vm126, %v125, %v123
  %v129 = vsel %vm63, 1, 0
  %v130 = vsel %vm64, 1, 0
  %vm131 = vcmp.eq.s32.totalorder %v129, 1
  %vm132 = vcmp.eq.s32.totalorder %v130, 1
  %v133 = vsel %vm131, %v128, 0.0
  %v134 = vsel %vm132, %v127, 0.0
  %v135 = vpack.c.bf16 %v133, %v133
  %v136 = vpack.c.bf16 %v134, %v134
  %137 = vrot.lane.b32.xlu0 %v109, 3
  %v138 = vpop.permute.xlu0 %137
  %139 = vrot.lane.b32.xlu0 %v120, 3
  %v140 = vpop.permute.xlu0 %139
  %vm141 = vcmp.lt.s32.totalorder %v37, 3
  %v142 = vsel %vm141, %v138, %v140
  %v143 = vsel %vm141, %v140, %v138
  %v144 = vsel %vm65, 1, 0
  %v145 = vsel %vm66, 1, 0
  %vm146 = vcmp.eq.s32.totalorder %v144, 1
  %vm147 = vcmp.eq.s32.totalorder %v145, 1
  %v148 = vsel %vm146, %v143, 0.0
  %v149 = vsel %vm147, %v142, 0.0
  %v150 = vpack.c.bf16 %v148, %v148
  %v151 = vpack.c.bf16 %v149, %v149
  %vm152 = vcmask 31744
  %v154 = vsel %vm152, %v111, 0
  %vm156 = vcmask 1041408
  %v158 = vsel %vm156, %v150, 0
  %v161 = vsel %vm156, %v151, 0
  %163 = vmatprep.subr.bf16.mxu0 %v161
  %164 = vmatpush1.bf16.msra.mxu0 %v158
  %165 = vmatprep.subr.bf16.mxu0 0
  %166 = vmatpush1.bf16.msra.mxu0 0
  %167 = vmatprep.subr.bf16.mxu0 0
  %168 = vmatpush1.bf16.msra.mxu0 0
  %169 = vmatprep.subr.bf16.mxu0 0
  %170 = vmatpush1.bf16.msra.mxu0 0
  %171 = vmatprep.subr.bf16.mxu0 0
  %172 = vmatpush1.bf16.msra.mxu0 0
  %173 = vmatprep.subr.bf16.mxu0 0
  %174 = vmatpush1.bf16.msra.mxu0 0
  %175 = vmatprep.subr.bf16.mxu0 0
  %176 = vmatpush1.bf16.msra.mxu0 0
  %177 = vmatprep.subr.bf16.mxu0 0
  %178 = vmatpush1.bf16.msra.mxu0 0
  %179 = vmatprep.subr.bf16.mxu0 0
  %180 = vmatpush1.bf16.msra.mxu0 0
  %181 = vmatprep.subr.bf16.mxu0 0
  %182 = vmatpush1.bf16.msra.mxu0 0
  %183 = vmatprep.subr.bf16.mxu0 0
  %184 = vmatpush1.bf16.msra.mxu0 0
  %185 = vmatprep.subr.bf16.mxu0 0
  %186 = vmatpush1.bf16.msra.mxu0 0
  %187 = vmatprep.subr.bf16.mxu0 0
  %188 = vmatpush1.bf16.msra.mxu0 0
  %189 = vmatprep.subr.bf16.mxu0 0
  %190 = vmatpush1.bf16.msra.mxu0 0
  %191 = vmatprep.subr.bf16.mxu0 0
  %192 = vmatpush1.bf16.msra.mxu0 0
  %193 = vmatprep.subr.bf16.mxu0 0
  %194 = vmatpush1.bf16.msra.mxu0 0
  %195 = vmatprep.mubr.bf16.mxu0 0
  %196 = vmatmul.mubr.bf16.gmra.mrb[0].mxu0 %v154
  %v197 = vpop.f32.mrb[0].mxu0
  %v198 = vadd.f32 0.0, %v197
  %v199 = vpop.f32.mrb[0].mxu0
  %v200 = vadd.f32 0.0, %v199
  %v201 = vpop.f32.mrb[0].mxu0
  %v202 = vpop.f32.mrb[0].mxu0
  %203 = vdwg.mxu0
  %v205 = vsel %vm152, %v110, 0
  %v208 = vsel %vm156, %v135, 0
  %v211 = vsel %vm156, %v136, 0
  %213 = vmatprep.subr.bf16.mxu0 %v211
  %214 = vmatpush1.bf16.msra.mxu0 %v208
  %215 = vmatprep.subr.bf16.mxu0 0
  %216 = vmatpush1.bf16.msra.mxu0 0
  %217 = vmatprep.subr.bf16.mxu0 0
  %218 = vmatpush1.bf16.msra.mxu0 0
  %219 = vmatprep.subr.bf16.mxu0 0
  %220 = vmatpush1.bf16.msra.mxu0 0
  %221 = vmatprep.subr.bf16.mxu0 0
  %222 = vmatpush1.bf16.msra.mxu0 0
  %223 = vmatprep.subr.bf16.mxu0 0
  %224 = vmatpush1.bf16.msra.mxu0 0
  %225 = vmatprep.subr.bf16.mxu0 0
  %226 = vmatpush1.bf16.msra.mxu0 0
  %227 = vmatprep.subr.bf16.mxu0 0
  %228 = vmatpush1.bf16.msra.mxu0 0
  %229 = vmatprep.subr.bf16.mxu0 0
  %230 = vmatpush1.bf16.msra.mxu0 0
  %231 = vmatprep.subr.bf16.mxu0 0
  %232 = vmatpush1.bf16.msra.mxu0 0
  %233 = vmatprep.subr.bf16.mxu0 0
  %234 = vmatpush1.bf16.msra.mxu0 0
  %235 = vmatprep.subr.bf16.mxu0 0
  %236 = vmatpush1.bf16.msra.mxu0 0
  %237 = vmatprep.subr.bf16.mxu0 0
  %238 = vmatpush1.bf16.msra.mxu0 0
  %239 = vmatprep.subr.bf16.mxu0 0
  %240 = vmatpush1.bf16.msra.mxu0 0
  %241 = vmatprep.subr.bf16.mxu0 0
  %242 = vmatpush1.bf16.msra.mxu0 0
  %243 = vmatprep.subr.bf16.mxu0 0
  %244 = vmatpush1.bf16.msra.mxu0 0
  %245 = vmatprep.mubr.bf16.mxu0 0
  %246 = vmatmul.mubr.bf16.gmra.mrb[0].mxu0 %v205
  %v247 = vpop.f32.mrb[0].mxu0
  %v248 = vadd.f32 %v198, %v247
  %v249 = vpop.f32.mrb[0].mxu0
  %v250 = vadd.f32 %v200, %v249
  %v251 = vpop.f32.mrb[0].mxu0
  %v252 = vpop.f32.mrb[0].mxu0
  %253 = vdwg.mxu0
  %254 = vrot.lane.b32.xlu0 %v109, 2
  %v255 = vpop.permute.xlu0 %254
  %256 = vrot.lane.b32.xlu0 %v120, 2
  %v257 = vpop.permute.xlu0 %256
  %vm258 = vcmp.lt.s32.totalorder %v37, 2
  %v259 = vsel %vm258, %v255, %v257
  %v260 = vsel %vm258, %v257, %v255
  %v261 = vsel %vm67, 1, 0
  %v262 = vsel %vm68, 1, 0
  %vm263 = vcmp.eq.s32.totalorder %v261, 1
  %vm264 = vcmp.eq.s32.totalorder %v262, 1
  %v265 = vsel %vm263, %v260, 0.0
  %v266 = vsel %vm264, %v259, 0.0
  %v267 = vpack.c.bf16 %v265, %v265
  %v268 = vpack.c.bf16 %v266, %v266
  %v270 = vsel %vm152, %v112, 0
  %v273 = vsel %vm156, %v267, 0
  %v276 = vsel %vm156, %v268, 0
  %278 = vmatprep.subr.bf16.mxu0 %v276
  %279 = vmatpush1.bf16.msra.mxu0 %v273
  %280 = vmatprep.subr.bf16.mxu0 0
  %281 = vmatpush1.bf16.msra.mxu0 0
  %282 = vmatprep.subr.bf16.mxu0 0
  %283 = vmatpush1.bf16.msra.mxu0 0
  %284 = vmatprep.subr.bf16.mxu0 0
  %285 = vmatpush1.bf16.msra.mxu0 0
  %286 = vmatprep.subr.bf16.mxu0 0
  %287 = vmatpush1.bf16.msra.mxu0 0
  %288 = vmatprep.subr.bf16.mxu0 0
  %289 = vmatpush1.bf16.msra.mxu0 0
  %290 = vmatprep.subr.bf16.mxu0 0
  %291 = vmatpush1.bf16.msra.mxu0 0
  %292 = vmatprep.subr.bf16.mxu0 0
  %293 = vmatpush1.bf16.msra.mxu0 0
  %294 = vmatprep.subr.bf16.mxu0 0
  %295 = vmatpush1.bf16.msra.mxu0 0
  %296 = vmatprep.subr.bf16.mxu0 0
  %297 = vmatpush1.bf16.msra.mxu0 0
  %298 = vmatprep.subr.bf16.mxu0 0
  %299 = vmatpush1.bf16.msra.mxu0 0
  %300 = vmatprep.subr.bf16.mxu0 0
  %301 = vmatpush1.bf16.msra.mxu0 0
  %302 = vmatprep.subr.bf16.mxu0 0
  %303 = vmatpush1.bf16.msra.mxu0 0
  %304 = vmatprep.subr.bf16.mxu0 0
  %305 = vmatpush1.bf16.msra.mxu0 0
  %306 = vmatprep.subr.bf16.mxu0 0
  %307 = vmatpush1.bf16.msra.mxu0 0
  %308 = vmatprep.subr.bf16.mxu0 0
  %309 = vmatpush1.bf16.msra.mxu0 0
  %310 = vmatprep.mubr.bf16.mxu0 0
  %311 = vmatmul.mubr.bf16.gmra.mrb[0].mxu0 %v270
  %v312 = vpop.f32.mrb[0].mxu0
  %v313 = vadd.f32 0.0, %v312
  %v314 = vpop.f32.mrb[0].mxu0
  %v315 = vadd.f32 0.0, %v314
  %v316 = vpop.f32.mrb[0].mxu0
  %v317 = vpop.f32.mrb[0].mxu0
  %318 = vdwg.mxu0
  %v319 = vadd.f32 %v248, %v313
  %v320 = vadd.f32 %v250, %v315
  %321 = vrot.lane.b32.xlu0 %v109, 1
  %v322 = vpop.permute.xlu0 %321
  %323 = vrot.lane.b32.xlu0 %v120, 1
  %v324 = vpop.permute.xlu0 %323
  %vm325 = vcmp.lt.s32.totalorder %v37, 1
  %v326 = vsel %vm325, %v322, %v324
  %v327 = vsel %vm325, %v324, %v322
  %v328 = vsel %vm69, 1, 0
  %v329 = vsel %vm70, 1, 0
  %vm330 = vcmp.eq.s32.totalorder %v328, 1
  %vm331 = vcmp.eq.s32.totalorder %v329, 1
  %v332 = vsel %vm330, %v327, 0.0
  %v333 = vsel %vm331, %v326, 0.0
  %v334 = vpack.c.bf16 %v332, %v332
  %v335 = vpack.c.bf16 %v333, %v333
  %v337 = vsel %vm152, %v113, 0
  %v340 = vsel %vm156, %v334, 0
  %v343 = vsel %vm156, %v335, 0
  %345 = vmatprep.subr.bf16.mxu0 %v343
  %346 = vmatpush1.bf16.msra.mxu0 %v340
  %347 = vmatprep.subr.bf16.mxu0 0
  %348 = vmatpush1.bf16.msra.mxu0 0
  %349 = vmatprep.subr.bf16.mxu0 0
  %350 = vmatpush1.bf16.msra.mxu0 0
  %351 = vmatprep.subr.bf16.mxu0 0
  %352 = vmatpush1.bf16.msra.mxu0 0
  %353 = vmatprep.subr.bf16.mxu0 0
  %354 = vmatpush1.bf16.msra.mxu0 0
  %355 = vmatprep.subr.bf16.mxu0 0
  %356 = vmatpush1.bf16.msra.mxu0 0
  %357 = vmatprep.subr.bf16.mxu0 0
  %358 = vmatpush1.bf16.msra.mxu0 0
  %359 = vmatprep.subr.bf16.mxu0 0
  %360 = vmatpush1.bf16.msra.mxu0 0
  %361 = vmatprep.subr.bf16.mxu0 0
  %362 = vmatpush1.bf16.msra.mxu0 0
  %363 = vmatprep.subr.bf16.mxu0 0
  %364 = vmatpush1.bf16.msra.mxu0 0
  %365 = vmatprep.subr.bf16.mxu0 0
  %366 = vmatpush1.bf16.msra.mxu0 0
  %367 = vmatprep.subr.bf16.mxu0 0
  %368 = vmatpush1.bf16.msra.mxu0 0
  %369 = vmatprep.subr.bf16.mxu0 0
  %370 = vmatpush1.bf16.msra.mxu0 0
  %371 = vmatprep.subr.bf16.mxu0 0
  %372 = vmatpush1.bf16.msra.mxu0 0
  %373 = vmatprep.subr.bf16.mxu0 0
  %374 = vmatpush1.bf16.msra.mxu0 0
  %375 = vmatprep.subr.bf16.mxu0 0
  %376 = vmatpush1.bf16.msra.mxu0 0
  %377 = vmatprep.mubr.bf16.mxu0 0
  %378 = vmatmul.mubr.bf16.gmra.mrb[0].mxu0 %v337
  %v379 = vpop.f32.mrb[0].mxu0
  %v380 = vadd.f32 0.0, %v379
  %v381 = vpop.f32.mrb[0].mxu0
  %v382 = vadd.f32 0.0, %v381
  %v383 = vpop.f32.mrb[0].mxu0
  %v384 = vpop.f32.mrb[0].mxu0
  %385 = vdwg.mxu0
  %v386 = vadd.f32 %v319, %v380
  %v387 = vadd.f32 %v320, %v382
  %v388 = vpack.c.bf16 %v109, %v109
  %v389 = vpack.c.bf16 %v120, %v120
  %v391 = vsel %vm152, %v114, 0
  %v394 = vsel %vm156, %v388, 0
  %v397 = vsel %vm156, %v389, 0
  %399 = vmatprep.subr.bf16.mxu0 %v397
  %400 = vmatpush1.bf16.msra.mxu0 %v394
  %401 = vmatprep.subr.bf16.mxu0 0
  %402 = vmatpush1.bf16.msra.mxu0 0
  %403 = vmatprep.subr.bf16.mxu0 0
  %404 = vmatpush1.bf16.msra.mxu0 0
  %405 = vmatprep.subr.bf16.mxu0 0
  %406 = vmatpush1.bf16.msra.mxu0 0
  %407 = vmatprep.subr.bf16.mxu0 0
  %408 = vmatpush1.bf16.msra.mxu0 0
  %409 = vmatprep.subr.bf16.mxu0 0
  %410 = vmatpush1.bf16.msra.mxu0 0
  %411 = vmatprep.subr.bf16.mxu0 0
  %412 = vmatpush1.bf16.msra.mxu0 0
  %413 = vmatprep.subr.bf16.mxu0 0
  %414 = vmatpush1.bf16.msra.mxu0 0
  %415 = vmatprep.subr.bf16.mxu0 0
  %416 = vmatpush1.bf16.msra.mxu0 0
  %417 = vmatprep.subr.bf16.mxu0 0
  %418 = vmatpush1.bf16.msra.mxu0 0
  %419 = vmatprep.subr.bf16.mxu0 0
  %420 = vmatpush1.bf16.msra.mxu0 0
  %421 = vmatprep.subr.bf16.mxu0 0
  %422 = vmatpush1.bf16.msra.mxu0 0
  %423 = vmatprep.subr.bf16.mxu0 0
  %424 = vmatpush1.bf16.msra.mxu0 0
  %425 = vmatprep.subr.bf16.mxu0 0
  %426 = vmatpush1.bf16.msra.mxu0 0
  %427 = vmatprep.subr.bf16.mxu0 0
  %428 = vmatpush1.bf16.msra.mxu0 0
  %429 = vmatprep.subr.bf16.mxu0 0
  %430 = vmatpush1.bf16.msra.mxu0 0
  %431 = vmatprep.mubr.bf16.mxu0 0
  %432 = vmatmul.mubr.bf16.gmra.mrb[0].mxu0 %v391
  %v433 = vpop.f32.mrb[0].mxu0
  %v434 = vadd.f32 0.0, %v433
  %v435 = vpop.f32.mrb[0].mxu0
  %v436 = vadd.f32 0.0, %v435
  %v437 = vpop.f32.mrb[0].mxu0
  %v438 = vpop.f32.mrb[0].mxu0
  %439 = vdwg.mxu0
  %v440 = vadd.f32 %v386, %v434
  %v441 = vadd.f32 %v387, %v436
  %442 = vrot.lane.b32.xlu0 %v109, 127
  %v443 = vpop.permute.xlu0 %442
  %444 = vrot.lane.b32.xlu0 %v120, 127
  %v445 = vpop.permute.xlu0 %444
  %vm446 = vcmp.lt.s32.totalorder %v37, 127
  %v447 = vsel %vm446, %v443, %v445
  %v448 = vsel %vm446, %v445, %v443
  %v449 = vsel %vm71, 1, 0
  %v450 = vsel %vm72, 1, 0
  %vm451 = vcmp.eq.s32.totalorder %v449, 1
  %vm452 = vcmp.eq.s32.totalorder %v450, 1
  %v453 = vsel %vm451, %v447, 0.0
  %v454 = vsel %vm452, %v448, 0.0
  %v455 = vpack.c.bf16 %v453, %v453
  %v456 = vpack.c.bf16 %v454, %v454
  %v458 = vsel %vm152, %v115, 0
  %v461 = vsel %vm156, %v455, 0
  %v464 = vsel %vm156, %v456, 0
  %466 = vmatprep.subr.bf16.mxu0 %v464
  %467 = vmatpush1.bf16.msra.mxu0 %v461
  %468 = vmatprep.subr.bf16.mxu0 0
  %469 = vmatpush1.bf16.msra.mxu0 0
  %470 = vmatprep.subr.bf16.mxu0 0
  %471 = vmatpush1.bf16.msra.mxu0 0
  %472 = vmatprep.subr.bf16.mxu0 0
  %473 = vmatpush1.bf16.msra.mxu0 0
  %474 = vmatprep.subr.bf16.mxu0 0
  %475 = vmatpush1.bf16.msra.mxu0 0
  %476 = vmatprep.subr.bf16.mxu0 0
  %477 = vmatpush1.bf16.msra.mxu0 0
  %478 = vmatprep.subr.bf16.mxu0 0
  %479 = vmatpush1.bf16.msra.mxu0 0
  %480 = vmatprep.subr.bf16.mxu0 0
  %481 = vmatpush1.bf16.msra.mxu0 0
  %482 = vmatprep.subr.bf16.mxu0 0
  %483 = vmatpush1.bf16.msra.mxu0 0
  %484 = vmatprep.subr.bf16.mxu0 0
  %485 = vmatpush1.bf16.msra.mxu0 0
  %486 = vmatprep.subr.bf16.mxu0 0
  %487 = vmatpush1.bf16.msra.mxu0 0
  %488 = vmatprep.subr.bf16.mxu0 0
  %489 = vmatpush1.bf16.msra.mxu0 0
  %490 = vmatprep.subr.bf16.mxu0 0
  %491 = vmatpush1.bf16.msra.mxu0 0
  %492 = vmatprep.subr.bf16.mxu0 0
  %493 = vmatpush1.bf16.msra.mxu0 0
  %494 = vmatprep.subr.bf16.mxu0 0
  %495 = vmatpush1.bf16.msra.mxu0 0
  %496 = vmatprep.subr.bf16.mxu0 0
  %497 = vmatpush1.bf16.msra.mxu0 0
  %498 = vmatprep.mubr.bf16.mxu0 0
  %499 = vmatmul.mubr.bf16.gmra.mrb[0].mxu0 %v458
  %v500 = vpop.f32.mrb[0].mxu0
  %v501 = vadd.f32 0.0, %v500
  %v502 = vpop.f32.mrb[0].mxu0
  %v503 = vadd.f32 0.0, %v502
  %v504 = vpop.f32.mrb[0].mxu0
  %v505 = vpop.f32.mrb[0].mxu0
  %506 = vdwg.mxu0
  %v507 = vadd.f32 %v440, %v501
  %v508 = vadd.f32 %v441, %v503
  %509 = vrot.lane.b32.xlu0 %v109, 126
  %v510 = vpop.permute.xlu0 %509
  %511 = vrot.lane.b32.xlu0 %v120, 126
  %v512 = vpop.permute.xlu0 %511
  %vm513 = vcmp.lt.s32.totalorder %v37, 126
  %v514 = vsel %vm513, %v510, %v512
  %v515 = vsel %vm513, %v512, %v510
  %v516 = vsel %vm73, 1, 0
  %v517 = vsel %vm74, 1, 0
  %vm518 = vcmp.eq.s32.totalorder %v516, 1
  %vm519 = vcmp.eq.s32.totalorder %v517, 1
  %v520 = vsel %vm518, %v514, 0.0
  %v521 = vsel %vm519, %v515, 0.0
  %v522 = vpack.c.bf16 %v520, %v520
  %v523 = vpack.c.bf16 %v521, %v521
  %v525 = vsel %vm152, %v116, 0
  %v528 = vsel %vm156, %v522, 0
  %v531 = vsel %vm156, %v523, 0
  %533 = vmatprep.subr.bf16.mxu0 %v531
  %534 = vmatpush1.bf16.msra.mxu0 %v528
  %535 = vmatprep.subr.bf16.mxu0 0
  %536 = vmatpush1.bf16.msra.mxu0 0
  %537 = vmatprep.subr.bf16.mxu0 0
  %538 = vmatpush1.bf16.msra.mxu0 0
  %539 = vmatprep.subr.bf16.mxu0 0
  %540 = vmatpush1.bf16.msra.mxu0 0
  %541 = vmatprep.subr.bf16.mxu0 0
  %542 = vmatpush1.bf16.msra.mxu0 0
  %543 = vmatprep.subr.bf16.mxu0 0
  %544 = vmatpush1.bf16.msra.mxu0 0
  %545 = vmatprep.subr.bf16.mxu0 0
  %546 = vmatpush1.bf16.msra.mxu0 0
  %547 = vmatprep.subr.bf16.mxu0 0
  %548 = vmatpush1.bf16.msra.mxu0 0
  %549 = vmatprep.subr.bf16.mxu0 0
  %550 = vmatpush1.bf16.msra.mxu0 0
  %551 = vmatprep.subr.bf16.mxu0 0
  %552 = vmatpush1.bf16.msra.mxu0 0
  %553 = vmatprep.subr.bf16.mxu0 0
  %554 = vmatpush1.bf16.msra.mxu0 0
  %555 = vmatprep.subr.bf16.mxu0 0
  %556 = vmatpush1.bf16.msra.mxu0 0
  %557 = vmatprep.subr.bf16.mxu0 0
  %558 = vmatpush1.bf16.msra.mxu0 0
  %559 = vmatprep.subr.bf16.mxu0 0
  %560 = vmatpush1.bf16.msra.mxu0 0
  %561 = vmatprep.subr.bf16.mxu0 0
  %562 = vmatpush1.bf16.msra.mxu0 0
  %563 = vmatprep.subr.bf16.mxu0 0
  %564 = vmatpush1.bf16.msra.mxu0 0
  %565 = vmatprep.mubr.bf16.mxu0 0
  %566 = vmatmul.mubr.bf16.gmra.mrb[0].mxu0 %v525
  %v567 = vpop.f32.mrb[0].mxu0
  %v568 = vadd.f32 0.0, %v567
  %v569 = vpop.f32.mrb[0].mxu0
  %v570 = vadd.f32 0.0, %v569
  %v571 = vpop.f32.mrb[0].mxu0
  %v572 = vpop.f32.mrb[0].mxu0
  %573 = vdwg.mxu0
  %v574 = vadd.f32 %v507, %v568
  %v575 = vadd.f32 %v508, %v570
  %576 = vrot.lane.b32.xlu0 %v109, 125
  %v577 = vpop.permute.xlu0 %576
  %578 = vrot.lane.b32.xlu0 %v120, 125
  %v579 = vpop.permute.xlu0 %578
  %vm580 = vcmp.lt.s32.totalorder %v37, 125
  %v581 = vsel %vm580, %v577, %v579
  %v582 = vsel %vm580, %v579, %v577
  %v583 = vsel %vm75, 1, 0
  %v584 = vsel %vm76, 1, 0
  %vm585 = vcmp.eq.s32.totalorder %v583, 1
  %vm586 = vcmp.eq.s32.totalorder %v584, 1
  %v587 = vsel %vm585, %v581, 0.0
  %v588 = vsel %vm586, %v582, 0.0
  %v589 = vpack.c.bf16 %v587, %v587
  %v590 = vpack.c.bf16 %v588, %v588
  %v592 = vsel %vm152, %v117, 0
  %v595 = vsel %vm156, %v589, 0
  %v598 = vsel %vm156, %v590, 0
  %600 = vmatprep.subr.bf16.mxu0 %v598
  %601 = vmatpush1.bf16.msra.mxu0 %v595
  %602 = vmatprep.subr.bf16.mxu0 0
  %603 = vmatpush1.bf16.msra.mxu0 0
  %604 = vmatprep.subr.bf16.mxu0 0
  %605 = vmatpush1.bf16.msra.mxu0 0
  %606 = vmatprep.subr.bf16.mxu0 0
  %607 = vmatpush1.bf16.msra.mxu0 0
  %608 = vmatprep.subr.bf16.mxu0 0
  %609 = vmatpush1.bf16.msra.mxu0 0
  %610 = vmatprep.subr.bf16.mxu0 0
  %611 = vmatpush1.bf16.msra.mxu0 0
  %612 = vmatprep.subr.bf16.mxu0 0
  %613 = vmatpush1.bf16.msra.mxu0 0
  %614 = vmatprep.subr.bf16.mxu0 0
  %615 = vmatpush1.bf16.msra.mxu0 0
  %616 = vmatprep.subr.bf16.mxu0 0
  %617 = vmatpush1.bf16.msra.mxu0 0
  %618 = vmatprep.subr.bf16.mxu0 0
  %619 = vmatpush1.bf16.msra.mxu0 0
  %620 = vmatprep.subr.bf16.mxu0 0
  %621 = vmatpush1.bf16.msra.mxu0 0
  %622 = vmatprep.subr.bf16.mxu0 0
  %623 = vmatpush1.bf16.msra.mxu0 0
  %624 = vmatprep.subr.bf16.mxu0 0
  %625 = vmatpush1.bf16.msra.mxu0 0
  %626 = vmatprep.subr.bf16.mxu0 0
  %627 = vmatpush1.bf16.msra.mxu0 0
  %628 = vmatprep.subr.bf16.mxu0 0
  %629 = vmatpush1.bf16.msra.mxu0 0
  %630 = vmatprep.subr.bf16.mxu0 0
  %631 = vmatpush1.bf16.msra.mxu0 0
  %632 = vmatprep.mubr.bf16.mxu0 0
  %633 = vmatmul.mubr.bf16.gmra.mrb[0].mxu0 %v592
  %v634 = vpop.f32.mrb[0].mxu0
  %v635 = vadd.f32 0.0, %v634
  %v636 = vpop.f32.mrb[0].mxu0
  %v637 = vadd.f32 0.0, %v636
  %v638 = vpop.f32.mrb[0].mxu0
  %v639 = vpop.f32.mrb[0].mxu0
  %640 = vdwg.mxu0
  %v641 = vadd.f32 %v574, %v635
  %v642 = vadd.f32 %v575, %v637
  %643 = vrot.lane.b32.xlu0 %v109, 124
  %v644 = vpop.permute.xlu0 %643
  %645 = vrot.lane.b32.xlu0 %v120, 124
  %v646 = vpop.permute.xlu0 %645
  %vm647 = vcmp.lt.s32.totalorder %v37, 124
  %v648 = vsel %vm647, %v644, %v646
  %v649 = vsel %vm647, %v646, %v644
  %v650 = vsel %vm77, 1, 0
  %v651 = vsel %vm78, 1, 0
  %vm652 = vcmp.eq.s32.totalorder %v650, 1
  %vm653 = vcmp.eq.s32.totalorder %v651, 1
  %v654 = vsel %vm652, %v648, 0.0
  %v655 = vsel %vm653, %v649, 0.0
  %v656 = vpack.c.bf16 %v654, %v654
  %v657 = vpack.c.bf16 %v655, %v655
  %v659 = vsel %vm152, %v118, 0
  %v662 = vsel %vm156, %v656, 0
  %v665 = vsel %vm156, %v657, 0
  %667 = vmatprep.subr.bf16.mxu0 %v665
  %668 = vmatpush1.bf16.msra.mxu0 %v662
  %669 = vmatprep.subr.bf16.mxu0 0
  %670 = vmatpush1.bf16.msra.mxu0 0
  %671 = vmatprep.subr.bf16.mxu0 0
  %672 = vmatpush1.bf16.msra.mxu0 0
  %673 = vmatprep.subr.bf16.mxu0 0
  %674 = vmatpush1.bf16.msra.mxu0 0
  %675 = vmatprep.subr.bf16.mxu0 0
  %676 = vmatpush1.bf16.msra.mxu0 0
  %677 = vmatprep.subr.bf16.mxu0 0
  %678 = vmatpush1.bf16.msra.mxu0 0
  %679 = vmatprep.subr.bf16.mxu0 0
  %680 = vmatpush1.bf16.msra.mxu0 0
  %681 = vmatprep.subr.bf16.mxu0 0
  %682 = vmatpush1.bf16.msra.mxu0 0
  %683 = vmatprep.subr.bf16.mxu0 0
  %684 = vmatpush1.bf16.msra.mxu0 0
  %685 = vmatprep.subr.bf16.mxu0 0
  %686 = vmatpush1.bf16.msra.mxu0 0
  %687 = vmatprep.subr.bf16.mxu0 0
  %688 = vmatpush1.bf16.msra.mxu0 0
  %689 = vmatprep.subr.bf16.mxu0 0
  %690 = vmatpush1.bf16.msra.mxu0 0
  %691 = vmatprep.subr.bf16.mxu0 0
  %692 = vmatpush1.bf16.msra.mxu0 0
  %693 = vmatprep.subr.bf16.mxu0 0
  %694 = vmatpush1.bf16.msra.mxu0 0
  %695 = vmatprep.subr.bf16.mxu0 0
  %696 = vmatpush1.bf16.msra.mxu0 0
  %697 = vmatprep.subr.bf16.mxu0 0
  %698 = vmatpush1.bf16.msra.mxu0 0
  %699 = vmatprep.mubr.bf16.mxu0 0
  %700 = vmatmul.mubr.bf16.gmra.mrb[0].mxu0 %v659
  %v701 = vpop.f32.mrb[0].mxu0
  %v702 = vadd.f32 0.0, %v701
  %v703 = vpop.f32.mrb[0].mxu0
  %v704 = vadd.f32 0.0, %v703
  %v705 = vpop.f32.mrb[0].mxu0
  %v706 = vpop.f32.mrb[0].mxu0
  %707 = vdwg.mxu0
  %v708 = vadd.f32 %v641, %v702
  %v709 = vadd.f32 %v642, %v704
  %v710 = vld [vmem:[%s1] sm:$0xf]
  %v711 = vld [vmem:[%s5] sm:$0xf]
  %v712 = vunpack.c.l.bf16 %v710
  %714 = vset.pattern.permute.xlu0 0
  %715 = vperm.xlu0 %714, %v711
  %v716 = vpop.permute.xlu0 %715
  %v718 = vunpack.c.l.s4 839922192
  %v719 = vunpack.c.0.s8 %v718
  %v720 = vlaneseq
  %v721 = vshrl.u32 %v720, 7
  %v722 = vsub.s32 %v719, %v721
  %v723 = vrot.slane %v716, %v722
  %v725 = vmul.f32 %v712, %v723
  %v726 = vld [vmem:[%s7] sm:$0xf]
  %728 = vset.pattern.permute.xlu0 0
  %729 = vperm.xlu0 %728, %v726
  %v730 = vpop.permute.xlu0 %729
  %v732 = vunpack.c.l.s4 839922192
  %v733 = vunpack.c.0.s8 %v732
  %v734 = vlaneseq
  %v735 = vshrl.u32 %v734, 7
  %v736 = vsub.s32 %v733, %v735
  %v737 = vrot.slane %v730, %v736
  %v739 = vadd.f32 %v725, %v737
  %v740 = vmax.f32 %v739, 0.0
  %v741 = vld [vmem:[%s3] sm:$0x3]
  %v742 = vld [vmem:[%s3 + $0x2] sm:$0x3]
  %v743 = vld [vmem:[%s3 + $0x4] sm:$0x3]
  %v744 = vld [vmem:[%s3 + $0x6] sm:$0x3]
  %v745 = vld [vmem:[%s3 + $0x8] sm:$0x3]
  %v746 = vld [vmem:[%s3 + $0xa] sm:$0x3]
  %v747 = vld [vmem:[%s3 + $0xc] sm:$0x3]
  %v748 = vld [vmem:[%s3 + $0xe] sm:$0x3]
  %v749 = vld [vmem:[%s3 + $0x10] sm:$0x3]
  %v751 = vcombine.high %v740, %v740
  %753 = vrot.lane.b32.xlu0 %v740, 4
  %v754 = vpop.permute.xlu0 %753
  %755 = vrot.lane.b32.xlu0 %v751, 4
  %v756 = vpop.permute.xlu0 %755
  %v757 = vsel %vm126, %v754, %v756
  %v758 = vsel %vm126, %v756, %v754
  %v759 = vsel %vm131, %v758, 0.0
  %v760 = vsel %vm132, %v757, 0.0
  %v761 = vpack.c.bf16 %v759, %v759
  %v762 = vpack.c.bf16 %v760, %v760
  %v764 = vsel %vm152, %v741, 0
  %v767 = vsel %vm156, %v761, 0
  %v770 = vsel %vm156, %v762, 0
  %772 = vmatprep.subr.bf16.mxu0 %v770
  %773 = vmatpush1.bf16.msra.mxu0 %v767
  %774 = vmatprep.subr.bf16.mxu0 0
  %775 = vmatpush1.bf16.msra.mxu0 0
  %776 = vmatprep.subr.bf16.mxu0 0
  %777 = vmatpush1.bf16.msra.mxu0 0
  %778 = vmatprep.subr.bf16.mxu0 0
  %779 = vmatpush1.bf16.msra.mxu0 0
  %780 = vmatprep.subr.bf16.mxu0 0
  %781 = vmatpush1.bf16.msra.mxu0 0
  %782 = vmatprep.subr.bf16.mxu0 0
  %783 = vmatpush1.bf16.msra.mxu0 0
  %784 = vmatprep.subr.bf16.mxu0 0
  %785 = vmatpush1.bf16.msra.mxu0 0
  %786 = vmatprep.subr.bf16.mxu0 0
  %787 = vmatpush1.bf16.msra.mxu0 0
  %788 = vmatprep.subr.bf16.mxu0 0
  %789 = vmatpush1.bf16.msra.mxu0 0
  %790 = vmatprep.subr.bf16.mxu0 0
  %791 = vmatpush1.bf16.msra.mxu0 0
  %792 = vmatprep.subr.bf16.mxu0 0
  %793 = vmatpush1.bf16.msra.mxu0 0
  %794 = vmatprep.subr.bf16.mxu0 0
  %795 = vmatpush1.bf16.msra.mxu0 0
  %796 = vmatprep.subr.bf16.mxu0 0
  %797 = vmatpush1.bf16.msra.mxu0 0
  %798 = vmatprep.subr.bf16.mxu0 0
  %799 = vmatpush1.bf16.msra.mxu0 0
  %800 = vmatprep.subr.bf16.mxu0 0
  %801 = vmatpush1.bf16.msra.mxu0 0
  %802 = vmatprep.subr.bf16.mxu0 0
  %803 = vmatpush1.bf16.msra.mxu0 0
  %804 = vmatprep.mubr.bf16.mxu0 0
  %805 = vmatmul.mubr.bf16.gmra.mrb[0].mxu0 %v764
  %v806 = vpop.f32.mrb[0].mxu0
  %v807 = vadd.f32 0.0, %v806
  %v808 = vpop.f32.mrb[0].mxu0
  %v809 = vadd.f32 0.0, %v808
  %v810 = vpop.f32.mrb[0].mxu0
  %v811 = vpop.f32.mrb[0].mxu0
  %812 = vdwg.mxu0
  %v813 = vadd.f32 %v708, %v807
  %v814 = vadd.f32 %v709, %v809
  %815 = vrot.lane.b32.xlu0 %v740, 3
  %v816 = vpop.permute.xlu0 %815
  %817 = vrot.lane.b32.xlu0 %v751, 3
  %v818 = vpop.permute.xlu0 %817
  %v819 = vsel %vm141, %v816, %v818
  %v820 = vsel %vm141, %v818, %v816
  %v821 = vsel %vm146, %v820, 0.0
  %v822 = vsel %vm147, %v819, 0.0
  %v823 = vpack.c.bf16 %v821, %v821
  %v824 = vpack.c.bf16 %v822, %v822
  %v826 = vsel %vm152, %v742, 0
  %v829 = vsel %vm156, %v823, 0
  %v832 = vsel %vm156, %v824, 0
  %834 = vmatprep.subr.bf16.mxu0 %v832
  %835 = vmatpush1.bf16.msra.mxu0 %v829
  %836 = vmatprep.subr.bf16.mxu0 0
  %837 = vmatpush1.bf16.msra.mxu0 0
  %838 = vmatprep.subr.bf16.mxu0 0
  %839 = vmatpush1.bf16.msra.mxu0 0
  %840 = vmatprep.subr.bf16.mxu0 0
  %841 = vmatpush1.bf16.msra.mxu0 0
  %842 = vmatprep.subr.bf16.mxu0 0
  %843 = vmatpush1.bf16.msra.mxu0 0
  %844 = vmatprep.subr.bf16.mxu0 0
  %845 = vmatpush1.bf16.msra.mxu0 0
  %846 = vmatprep.subr.bf16.mxu0 0
  %847 = vmatpush1.bf16.msra.mxu0 0
  %848 = vmatprep.subr.bf16.mxu0 0
  %849 = vmatpush1.bf16.msra.mxu0 0
  %850 = vmatprep.subr.bf16.mxu0 0
  %851 = vmatpush1.bf16.msra.mxu0 0
  %852 = vmatprep.subr.bf16.mxu0 0
  %853 = vmatpush1.bf16.msra.mxu0 0
  %854 = vmatprep.subr.bf16.mxu0 0
  %855 = vmatpush1.bf16.msra.mxu0 0
  %856 = vmatprep.subr.bf16.mxu0 0
  %857 = vmatpush1.bf16.msra.mxu0 0
  %858 = vmatprep.subr.bf16.mxu0 0
  %859 = vmatpush1.bf16.msra.mxu0 0
  %860 = vmatprep.subr.bf16.mxu0 0
  %861 = vmatpush1.bf16.msra.mxu0 0
  %862 = vmatprep.subr.bf16.mxu0 0
  %863 = vmatpush1.bf16.msra.mxu0 0
  %864 = vmatprep.subr.bf16.mxu0 0
  %865 = vmatpush1.bf16.msra.mxu0 0
  %866 = vmatprep.mubr.bf16.mxu0 0
  %867 = vmatmul.mubr.bf16.gmra.mrb[0].mxu0 %v826
  %v868 = vpop.f32.mrb[0].mxu0
  %v869 = vadd.f32 0.0, %v868
  %v870 = vpop.f32.mrb[0].mxu0
  %v871 = vadd.f32 0.0, %v870
  %v872 = vpop.f32.mrb[0].mxu0
  %v873 = vpop.f32.mrb[0].mxu0
  %874 = vdwg.mxu0
  %v875 = vadd.f32 %v813, %v869
  %v876 = vadd.f32 %v814, %v871
  %877 = vrot.lane.b32.xlu0 %v740, 2
  %v878 = vpop.permute.xlu0 %877
  %879 = vrot.lane.b32.xlu0 %v751, 2
  %v880 = vpop.permute.xlu0 %879
  %v881 = vsel %vm258, %v878, %v880
  %v882 = vsel %vm258, %v880, %v878
  %v883 = vsel %vm263, %v882, 0.0
  %v884 = vsel %vm264, %v881, 0.0
  %v885 = vpack.c.bf16 %v883, %v883
  %v886 = vpack.c.bf16 %v884, %v884
  %v888 = vsel %vm152, %v743, 0
  %v891 = vsel %vm156, %v885, 0
  %v894 = vsel %vm156, %v886, 0
  %896 = vmatprep.subr.bf16.mxu0 %v894
  %897 = vmatpush1.bf16.msra.mxu0 %v891
  %898 = vmatprep.subr.bf16.mxu0 0
  %899 = vmatpush1.bf16.msra.mxu0 0
  %900 = vmatprep.subr.bf16.mxu0 0
  %901 = vmatpush1.bf16.msra.mxu0 0
  %902 = vmatprep.subr.bf16.mxu0 0
  %903 = vmatpush1.bf16.msra.mxu0 0
  %904 = vmatprep.subr.bf16.mxu0 0
  %905 = vmatpush1.bf16.msra.mxu0 0
  %906 = vmatprep.subr.bf16.mxu0 0
  %907 = vmatpush1.bf16.msra.mxu0 0
  %908 = vmatprep.subr.bf16.mxu0 0
  %909 = vmatpush1.bf16.msra.mxu0 0
  %910 = vmatprep.subr.bf16.mxu0 0
  %911 = vmatpush1.bf16.msra.mxu0 0
  %912 = vmatprep.subr.bf16.mxu0 0
  %913 = vmatpush1.bf16.msra.mxu0 0
  %914 = vmatprep.subr.bf16.mxu0 0
  %915 = vmatpush1.bf16.msra.mxu0 0
  %916 = vmatprep.subr.bf16.mxu0 0
  %917 = vmatpush1.bf16.msra.mxu0 0
  %918 = vmatprep.subr.bf16.mxu0 0
  %919 = vmatpush1.bf16.msra.mxu0 0
  %920 = vmatprep.subr.bf16.mxu0 0
  %921 = vmatpush1.bf16.msra.mxu0 0
  %922 = vmatprep.subr.bf16.mxu0 0
  %923 = vmatpush1.bf16.msra.mxu0 0
  %924 = vmatprep.subr.bf16.mxu0 0
  %925 = vmatpush1.bf16.msra.mxu0 0
  %926 = vmatprep.subr.bf16.mxu0 0
  %927 = vmatpush1.bf16.msra.mxu0 0
  %928 = vmatprep.mubr.bf16.mxu0 0
  %929 = vmatmul.mubr.bf16.gmra.mrb[0].mxu0 %v888
  %v930 = vpop.f32.mrb[0].mxu0
  %v931 = vadd.f32 0.0, %v930
  %v932 = vpop.f32.mrb[0].mxu0
  %v933 = vadd.f32 0.0, %v932
  %v934 = vpop.f32.mrb[0].mxu0
  %v935 = vpop.f32.mrb[0].mxu0
  %936 = vdwg.mxu0
  %v937 = vadd.f32 %v875, %v931
  %v938 = vadd.f32 %v876, %v933
  %939 = vrot.lane.b32.xlu0 %v740, 1
  %v940 = vpop.permute.xlu0 %939
  %941 = vrot.lane.b32.xlu0 %v751, 1
  %v942 = vpop.permute.xlu0 %941
  %v943 = vsel %vm325, %v940, %v942
  %v944 = vsel %vm325, %v942, %v940
  %v945 = vsel %vm330, %v944, 0.0
  %v946 = vsel %vm331, %v943, 0.0
  %v947 = vpack.c.bf16 %v945, %v945
  %v948 = vpack.c.bf16 %v946, %v946
  %v950 = vsel %vm152, %v744, 0
  %v953 = vsel %vm156, %v947, 0
  %v956 = vsel %vm156, %v948, 0
  %958 = vmatprep.subr.bf16.mxu0 %v956
  %959 = vmatpush1.bf16.msra.mxu0 %v953
  %960 = vmatprep.subr.bf16.mxu0 0
  %961 = vmatpush1.bf16.msra.mxu0 0
  %962 = vmatprep.subr.bf16.mxu0 0
  %963 = vmatpush1.bf16.msra.mxu0 0
  %964 = vmatprep.subr.bf16.mxu0 0
  %965 = vmatpush1.bf16.msra.mxu0 0
  %966 = vmatprep.subr.bf16.mxu0 0
  %967 = vmatpush1.bf16.msra.mxu0 0
  %968 = vmatprep.subr.bf16.mxu0 0
  %969 = vmatpush1.bf16.msra.mxu0 0
  %970 = vmatprep.subr.bf16.mxu0 0
  %971 = vmatpush1.bf16.msra.mxu0 0
  %972 = vmatprep.subr.bf16.mxu0 0
  %973 = vmatpush1.bf16.msra.mxu0 0
  %974 = vmatprep.subr.bf16.mxu0 0
  %975 = vmatpush1.bf16.msra.mxu0 0
  %976 = vmatprep.subr.bf16.mxu0 0
  %977 = vmatpush1.bf16.msra.mxu0 0
  %978 = vmatprep.subr.bf16.mxu0 0
  %979 = vmatpush1.bf16.msra.mxu0 0
  %980 = vmatprep.subr.bf16.mxu0 0
  %981 = vmatpush1.bf16.msra.mxu0 0
  %982 = vmatprep.subr.bf16.mxu0 0
  %983 = vmatpush1.bf16.msra.mxu0 0
  %984 = vmatprep.subr.bf16.mxu0 0
  %985 = vmatpush1.bf16.msra.mxu0 0
  %986 = vmatprep.subr.bf16.mxu0 0
  %987 = vmatpush1.bf16.msra.mxu0 0
  %988 = vmatprep.subr.bf16.mxu0 0
  %989 = vmatpush1.bf16.msra.mxu0 0
  %990 = vmatprep.mubr.bf16.mxu0 0
  %991 = vmatmul.mubr.bf16.gmra.mrb[0].mxu0 %v950
  %v992 = vpop.f32.mrb[0].mxu0
  %v993 = vadd.f32 0.0, %v992
  %v994 = vpop.f32.mrb[0].mxu0
  %v995 = vadd.f32 0.0, %v994
  %v996 = vpop.f32.mrb[0].mxu0
  %v997 = vpop.f32.mrb[0].mxu0
  %998 = vdwg.mxu0
  %v999 = vadd.f32 %v937, %v993
  %v1000 = vadd.f32 %v938, %v995
  %v1001 = vpack.c.bf16 %v740, %v740
  %v1002 = vpack.c.bf16 %v751, %v751
  %v1004 = vsel %vm152, %v745, 0
  %v1007 = vsel %vm156, %v1001, 0
  %v1010 = vsel %vm156, %v1002, 0
  %1012 = vmatprep.subr.bf16.mxu0 %v1010
  %1013 = vmatpush1.bf16.msra.mxu0 %v1007
  %1014 = vmatprep.subr.bf16.mxu0 0
  %1015 = vmatpush1.bf16.msra.mxu0 0
  %1016 = vmatprep.subr.bf16.mxu0 0
  %1017 = vmatpush1.bf16.msra.mxu0 0
  %1018 = vmatprep.subr.bf16.mxu0 0
  %1019 = vmatpush1.bf16.msra.mxu0 0
  %1020 = vmatprep.subr.bf16.mxu0 0
  %1021 = vmatpush1.bf16.msra.mxu0 0
  %1022 = vmatprep.subr.bf16.mxu0 0
  %1023 = vmatpush1.bf16.msra.mxu0 0
  %1024 = vmatprep.subr.bf16.mxu0 0
  %1025 = vmatpush1.bf16.msra.mxu0 0
  %1026 = vmatprep.subr.bf16.mxu0 0
  %1027 = vmatpush1.bf16.msra.mxu0 0
  %1028 = vmatprep.subr.bf16.mxu0 0
  %1029 = vmatpush1.bf16.msra.mxu0 0
  %1030 = vmatprep.subr.bf16.mxu0 0
  %1031 = vmatpush1.bf16.msra.mxu0 0
  %1032 = vmatprep.subr.bf16.mxu0 0
  %1033 = vmatpush1.bf16.msra.mxu0 0
  %1034 = vmatprep.subr.bf16.mxu0 0
  %1035 = vmatpush1.bf16.msra.mxu0 0
  %1036 = vmatprep.subr.bf16.mxu0 0
  %1037 = vmatpush1.bf16.msra.mxu0 0
  %1038 = vmatprep.subr.bf16.mxu0 0
  %1039 = vmatpush1.bf16.msra.mxu0 0
  %1040 = vmatprep.subr.bf16.mxu0 0
  %1041 = vmatpush1.bf16.msra.mxu0 0
  %1042 = vmatprep.subr.bf16.mxu0 0
  %1043 = vmatpush1.bf16.msra.mxu0 0
  %1044 = vmatprep.mubr.bf16.mxu0 0
  %1045 = vmatmul.mubr.bf16.gmra.mrb[0].mxu0 %v1004
  %v1046 = vpop.f32.mrb[0].mxu0
  %v1047 = vadd.f32 0.0, %v1046
  %v1048 = vpop.f32.mrb[0].mxu0
  %v1049 = vadd.f32 0.0, %v1048
  %v1050 = vpop.f32.mrb[0].mxu0
  %v1051 = vpop.f32.mrb[0].mxu0
  %1052 = vdwg.mxu0
  %v1053 = vadd.f32 %v999, %v1047
  %v1054 = vadd.f32 %v1000, %v1049
  %1055 = vrot.lane.b32.xlu0 %v740, 127
  %v1056 = vpop.permute.xlu0 %1055
  %1057 = vrot.lane.b32.xlu0 %v751, 127
  %v1058 = vpop.permute.xlu0 %1057
  %v1059 = vsel %vm446, %v1056, %v1058
  %v1060 = vsel %vm446, %v1058, %v1056
  %v1061 = vsel %vm451, %v1059, 0.0
  %v1062 = vsel %vm452, %v1060, 0.0
  %v1063 = vpack.c.bf16 %v1061, %v1061
  %v1064 = vpack.c.bf16 %v1062, %v1062
  %v1066 = vsel %vm152, %v746, 0
  %v1069 = vsel %vm156, %v1063, 0
  %v1072 = vsel %vm156, %v1064, 0
  %1074 = vmatprep.subr.bf16.mxu0 %v1072
  %1075 = vmatpush1.bf16.msra.mxu0 %v1069
  %1076 = vmatprep.subr.bf16.mxu0 0
  %1077 = vmatpush1.bf16.msra.mxu0 0
  %1078 = vmatprep.subr.bf16.mxu0 0
  %1079 = vmatpush1.bf16.msra.mxu0 0
  %1080 = vmatprep.subr.bf16.mxu0 0
  %1081 = vmatpush1.bf16.msra.mxu0 0
  %1082 = vmatprep.subr.bf16.mxu0 0
  %1083 = vmatpush1.bf16.msra.mxu0 0
  %1084 = vmatprep.subr.bf16.mxu0 0
  %1085 = vmatpush1.bf16.msra.mxu0 0
  %1086 = vmatprep.subr.bf16.mxu0 0
  %1087 = vmatpush1.bf16.msra.mxu0 0
  %1088 = vmatprep.subr.bf16.mxu0 0
  %1089 = vmatpush1.bf16.msra.mxu0 0
  %1090 = vmatprep.subr.bf16.mxu0 0
  %1091 = vmatpush1.bf16.msra.mxu0 0
  %1092 = vmatprep.subr.bf16.mxu0 0
  %1093 = vmatpush1.bf16.msra.mxu0 0
  %1094 = vmatprep.subr.bf16.mxu0 0
  %1095 = vmatpush1.bf16.msra.mxu0 0
  %1096 = vmatprep.subr.bf16.mxu0 0
  %1097 = vmatpush1.bf16.msra.mxu0 0
  %1098 = vmatprep.subr.bf16.mxu0 0
  %1099 = vmatpush1.bf16.msra.mxu0 0
  %1100 = vmatprep.subr.bf16.mxu0 0
  %1101 = vmatpush1.bf16.msra.mxu0 0
  %1102 = vmatprep.subr.bf16.mxu0 0
  %1103 = vmatpush1.bf16.msra.mxu0 0
  %1104 = vmatprep.subr.bf16.mxu0 0
  %1105 = vmatpush1.bf16.msra.mxu0 0
  %1106 = vmatprep.mubr.bf16.mxu0 0
  %1107 = vmatmul.mubr.bf16.gmra.mrb[0].mxu0 %v1066
  %v1108 = vpop.f32.mrb[0].mxu0
  %v1109 = vadd.f32 0.0, %v1108
  %v1110 = vpop.f32.mrb[0].mxu0
  %v1111 = vadd.f32 0.0, %v1110
  %v1112 = vpop.f32.mrb[0].mxu0
  %v1113 = vpop.f32.mrb[0].mxu0
  %1114 = vdwg.mxu0
  %v1115 = vadd.f32 %v1053, %v1109
  %v1116 = vadd.f32 %v1054, %v1111
  %1117 = vrot.lane.b32.xlu0 %v740, 126
  %v1118 = vpop.permute.xlu0 %1117
  %1119 = vrot.lane.b32.xlu0 %v751, 126
  %v1120 = vpop.permute.xlu0 %1119
  %v1121 = vsel %vm513, %v1118, %v1120
  %v1122 = vsel %vm513, %v1120, %v1118
  %v1123 = vsel %vm518, %v1121, 0.0
  %v1124 = vsel %vm519, %v1122, 0.0
  %v1125 = vpack.c.bf16 %v1123, %v1123
  %v1126 = vpack.c.bf16 %v1124, %v1124
  %v1128 = vsel %vm152, %v747, 0
  %v1131 = vsel %vm156, %v1125, 0
  %v1134 = vsel %vm156, %v1126, 0
  %1136 = vmatprep.subr.bf16.mxu0 %v1134
  %1137 = vmatpush1.bf16.msra.mxu0 %v1131
  %1138 = vmatprep.subr.bf16.mxu0 0
  %1139 = vmatpush1.bf16.msra.mxu0 0
  %1140 = vmatprep.subr.bf16.mxu0 0
  %1141 = vmatpush1.bf16.msra.mxu0 0
  %1142 = vmatprep.subr.bf16.mxu0 0
  %1143 = vmatpush1.bf16.msra.mxu0 0
  %1144 = vmatprep.subr.bf16.mxu0 0
  %1145 = vmatpush1.bf16.msra.mxu0 0
  %1146 = vmatprep.subr.bf16.mxu0 0
  %1147 = vmatpush1.bf16.msra.mxu0 0
  %1148 = vmatprep.subr.bf16.mxu0 0
  %1149 = vmatpush1.bf16.msra.mxu0 0
  %1150 = vmatprep.subr.bf16.mxu0 0
  %1151 = vmatpush1.bf16.msra.mxu0 0
  %1152 = vmatprep.subr.bf16.mxu0 0
  %1153 = vmatpush1.bf16.msra.mxu0 0
  %1154 = vmatprep.subr.bf16.mxu0 0
  %1155 = vmatpush1.bf16.msra.mxu0 0
  %1156 = vmatprep.subr.bf16.mxu0 0
  %1157 = vmatpush1.bf16.msra.mxu0 0
  %1158 = vmatprep.subr.bf16.mxu0 0
  %1159 = vmatpush1.bf16.msra.mxu0 0
  %1160 = vmatprep.subr.bf16.mxu0 0
  %1161 = vmatpush1.bf16.msra.mxu0 0
  %1162 = vmatprep.subr.bf16.mxu0 0
  %1163 = vmatpush1.bf16.msra.mxu0 0
  %1164 = vmatprep.subr.bf16.mxu0 0
  %1165 = vmatpush1.bf16.msra.mxu0 0
  %1166 = vmatprep.subr.bf16.mxu0 0
  %1167 = vmatpush1.bf16.msra.mxu0 0
  %1168 = vmatprep.mubr.bf16.mxu0 0
  %1169 = vmatmul.mubr.bf16.gmra.mrb[0].mxu0 %v1128
  %v1170 = vpop.f32.mrb[0].mxu0
  %v1171 = vadd.f32 0.0, %v1170
  %v1172 = vpop.f32.mrb[0].mxu0
  %v1173 = vadd.f32 0.0, %v1172
  %v1174 = vpop.f32.mrb[0].mxu0
  %v1175 = vpop.f32.mrb[0].mxu0
  %1176 = vdwg.mxu0
  %v1177 = vadd.f32 %v1115, %v1171
  %v1178 = vadd.f32 %v1116, %v1173
  %1179 = vrot.lane.b32.xlu0 %v740, 125
  %v1180 = vpop.permute.xlu0 %1179
  %1181 = vrot.lane.b32.xlu0 %v751, 125
  %v1182 = vpop.permute.xlu0 %1181
  %v1183 = vsel %vm580, %v1180, %v1182
  %v1184 = vsel %vm580, %v1182, %v1180
  %v1185 = vsel %vm585, %v1183, 0.0
  %v1186 = vsel %vm586, %v1184, 0.0
  %v1187 = vpack.c.bf16 %v1185, %v1185
  %v1188 = vpack.c.bf16 %v1186, %v1186
  %v1190 = vsel %vm152, %v748, 0
  %v1193 = vsel %vm156, %v1187, 0
  %v1196 = vsel %vm156, %v1188, 0
  %1198 = vmatprep.subr.bf16.mxu0 %v1196
  %1199 = vmatpush1.bf16.msra.mxu0 %v1193
  %1200 = vmatprep.subr.bf16.mxu0 0
  %1201 = vmatpush1.bf16.msra.mxu0 0
  %1202 = vmatprep.subr.bf16.mxu0 0
  %1203 = vmatpush1.bf16.msra.mxu0 0
  %1204 = vmatprep.subr.bf16.mxu0 0
  %1205 = vmatpush1.bf16.msra.mxu0 0
  %1206 = vmatprep.subr.bf16.mxu0 0
  %1207 = vmatpush1.bf16.msra.mxu0 0
  %1208 = vmatprep.subr.bf16.mxu0 0
  %1209 = vmatpush1.bf16.msra.mxu0 0
  %1210 = vmatprep.subr.bf16.mxu0 0
  %1211 = vmatpush1.bf16.msra.mxu0 0
  %1212 = vmatprep.subr.bf16.mxu0 0
  %1213 = vmatpush1.bf16.msra.mxu0 0
  %1214 = vmatprep.subr.bf16.mxu0 0
  %1215 = vmatpush1.bf16.msra.mxu0 0
  %1216 = vmatprep.subr.bf16.mxu0 0
  %1217 = vmatpush1.bf16.msra.mxu0 0
  %1218 = vmatprep.subr.bf16.mxu0 0
  %1219 = vmatpush1.bf16.msra.mxu0 0
  %1220 = vmatprep.subr.bf16.mxu0 0
  %1221 = vmatpush1.bf16.msra.mxu0 0
  %1222 = vmatprep.subr.bf16.mxu0 0
  %1223 = vmatpush1.bf16.msra.mxu0 0
  %1224 = vmatprep.subr.bf16.mxu0 0
  %1225 = vmatpush1.bf16.msra.mxu0 0
  %1226 = vmatprep.subr.bf16.mxu0 0
  %1227 = vmatpush1.bf16.msra.mxu0 0
  %1228 = vmatprep.subr.bf16.mxu0 0
  %1229 = vmatpush1.bf16.msra.mxu0 0
  %1230 = vmatprep.mubr.bf16.mxu0 0
  %1231 = vmatmul.mubr.bf16.gmra.mrb[0].mxu0 %v1190
  %v1232 = vpop.f32.mrb[0].mxu0
  %v1233 = vadd.f32 0.0, %v1232
  %v1234 = vpop.f32.mrb[0].mxu0
  %v1235 = vadd.f32 0.0, %v1234
  %v1236 = vpop.f32.mrb[0].mxu0
  %v1237 = vpop.f32.mrb[0].mxu0
  %1238 = vdwg.mxu0
  %v1239 = vadd.f32 %v1177, %v1233
  %v1240 = vadd.f32 %v1178, %v1235
  %1241 = vrot.lane.b32.xlu0 %v740, 124
  %v1242 = vpop.permute.xlu0 %1241
  %1243 = vrot.lane.b32.xlu0 %v751, 124
  %v1244 = vpop.permute.xlu0 %1243
  %v1245 = vsel %vm647, %v1242, %v1244
  %v1246 = vsel %vm647, %v1244, %v1242
  %v1247 = vsel %vm652, %v1245, 0.0
  %v1248 = vsel %vm653, %v1246, 0.0
  %v1249 = vpack.c.bf16 %v1247, %v1247
  %v1250 = vpack.c.bf16 %v1248, %v1248
  %v1252 = vsel %vm152, %v749, 0
  %v1255 = vsel %vm156, %v1249, 0
  %v1258 = vsel %vm156, %v1250, 0
  %1260 = vmatprep.subr.bf16.mxu0 %v1258
  %1261 = vmatpush1.bf16.msra.mxu0 %v1255
  %1262 = vmatprep.subr.bf16.mxu0 0
  %1263 = vmatpush1.bf16.msra.mxu0 0
  %1264 = vmatprep.subr.bf16.mxu0 0
  %1265 = vmatpush1.bf16.msra.mxu0 0
  %1266 = vmatprep.subr.bf16.mxu0 0
  %1267 = vmatpush1.bf16.msra.mxu0 0
  %1268 = vmatprep.subr.bf16.mxu0 0
  %1269 = vmatpush1.bf16.msra.mxu0 0
  %1270 = vmatprep.subr.bf16.mxu0 0
  %1271 = vmatpush1.bf16.msra.mxu0 0
  %1272 = vmatprep.subr.bf16.mxu0 0
  %1273 = vmatpush1.bf16.msra.mxu0 0
  %1274 = vmatprep.subr.bf16.mxu0 0
  %1275 = vmatpush1.bf16.msra.mxu0 0
  %1276 = vmatprep.subr.bf16.mxu0 0
  %1277 = vmatpush1.bf16.msra.mxu0 0
  %1278 = vmatprep.subr.bf16.mxu0 0
  %1279 = vmatpush1.bf16.msra.mxu0 0
  %1280 = vmatprep.subr.bf16.mxu0 0
  %1281 = vmatpush1.bf16.msra.mxu0 0
  %1282 = vmatprep.subr.bf16.mxu0 0
  %1283 = vmatpush1.bf16.msra.mxu0 0
  %1284 = vmatprep.subr.bf16.mxu0 0
  %1285 = vmatpush1.bf16.msra.mxu0 0
  %1286 = vmatprep.subr.bf16.mxu0 0
  %1287 = vmatpush1.bf16.msra.mxu0 0
  %1288 = vmatprep.subr.bf16.mxu0 0
  %1289 = vmatpush1.bf16.msra.mxu0 0
  %1290 = vmatprep.subr.bf16.mxu0 0
  %1291 = vmatpush1.bf16.msra.mxu0 0
  %1292 = vmatprep.mubr.bf16.mxu0 0
  %1293 = vmatmul.mubr.bf16.gmra.mrb[0].mxu0 %v1252
  %v1294 = vpop.f32.mrb[0].mxu0
  %v1295 = vadd.f32 0.0, %v1294
  %v1296 = vpop.f32.mrb[0].mxu0
  %v1297 = vadd.f32 0.0, %v1296
  %v1298 = vpop.f32.mrb[0].mxu0
  %v1299 = vpop.f32.mrb[0].mxu0
  %1300 = vdwg.mxu0
  %v1301 = vadd.f32 %v1239, %v1295
  %v1302 = vadd.f32 %v1240, %v1297
  %v1303 = vld [vmem:[%s8] sm:$0xf]
  %1305 = vset.pattern.permute.xlu0 0
  %1306 = vperm.xlu0 %1305, %v1303
  %v1307 = vpop.permute.xlu0 %1306
  %v1309 = vadd.f32 %v1301, %v1307
  %v1310 = vadd.f32 %v1302, %v1307
  %v1311 = vpack.c.bf16 %v1309, %v1309
  %v1312 = vpack.c.bf16 %v1310, %v1310
  %v1315 = vcombine.low %v1311, %v1312
  %v1317 = vunpack.c.l.s4 1983009808
  %v1318 = vunpack.c.0.s8 %v1317
  %v1319 = vlaneseq
  %v1320 = vshrl.u32 %v1319, 7
  %v1321 = vsub.s32 %v1318, %v1320
  %v1322 = vrot.slane %v1315, %v1321
  %1324 = vst [vmem:[%s9] sm:$0xf] %v1322
  %v1325 = vunpack.c.l.bf16 %v1311
  %v1326 = vunpack.c.l.bf16 %v1312
  %v1327 = vmul.f32 %v1325, %v1325
  %v1328 = vadd.f32 %v1325, %v1326
  %v1329 = vmul.f32 %v1326, %v1326
  %v1330 = vadd.f32 %v1327, %v1329
  %1331 = vst [vmem:[%s10] sm:$0xf] %v1328
  %1332 = vst [vmem:[%s11] sm:$0xf] %v1330
  // Predicated region
  $region38: #{dense_block.4} parent=0 // pred_check
    _
  $region39: #{dense_block.4} parent=0 // pred_check_branch
    %1334 = sbr.rel (0) target = $region41
  $region40: #{dense_block.4} parent=0 // pred_region
    _
  $region41: #{dense_block.4} parent=0 // pred_fallthru
    _
  // Predicated region
  $region42: #{dense_block.4} parent=0 // pred_check
    _
  $region43: #{dense_block.4} parent=0 // pred_check_branch
    %1336 = sbr.rel (0) target = $region45
  $region44: #{dense_block.4} parent=0 // pred_region
    _
  $region45: #{dense_block.4} parent=0 // pred_fallthru
    _
  // Predicated region
  $region46: #{dense_block.4} parent=0 // pred_check
    _
  $region47: #{dense_block.4} parent=0 // pred_check_branch
    %1338 = sbr.rel (0) target = $region49
  $region48: #{dense_block.4} parent=0 // pred_region
    _
  $region49: #{dense_block.4} parent=0 // pred_fallthru
    _
  // Predicated region
  $region50: #{dense_block.4} parent=0 // pred_check
    _
  $region51: #{dense_block.4} parent=0 // pred_check_branch
    %1340 = sbr.rel (0) target = $region53
  $region52: #{dense_block.4} parent=0 // pred_region
    _
  $region53: #{dense_block.4} parent=0 // pred_fallthru
    _
  // Predicated region
  $region54: #{dense_block.4} parent=0 // pred_check
    _
  $region55: #{dense_block.4} parent=0 // pred_check_branch
    %1342 = sbr.rel (0) target = $region57
  $region56: #{dense_block.4} parent=0 // pred_region
    _
  $region57: #{dense_block.4} parent=0 // pred_fallthru
    _
  // Predicated region
  $region58: #{dense_block.4} parent=0 // pred_check
    _
  $region59: #{dense_block.4} parent=0 // pred_check_branch
    %1344 = sbr.rel (0) target = $region61
  $region60: #{dense_block.4} parent=0 // pred_region
    _
  $region61: #{dense_block.4} parent=0 // pred_fallthru
    _

// kernel: dense_block.5
$region0: #{dense_block.5}
  #allocation0 [shape = 'u32[]', space=smem, size = 0x4, offset = 0x4, fixed_abs, tag = 'smem constant byte address 0x4 - core index']
  #allocation1 [shape = 'u32[144,128]{1,0:T(1,128)}', space=vmem, size = 0x12000, scoped, tag = 'internal scratch']
  %s0 = inlined_call_operand.vmem [shape: bf16[4,256], index: 0, kind: input, shape index: {}]
  %s1 = inlined_call_operand.vmem [shape: bf16[4,256], index: 1, kind: input, shape index: {}]
  %s2 = inlined_call_operand.vmem [shape: bf16[4,256], index: 2, kind: input, shape index: {}]
  %s3 = inlined_call_operand.vmem [shape: bf16[9,4,4], index: 3, kind: input, shape index: {}]
  %s4 = inlined_call_operand.vmem [shape: bf16[9,4,4], index: 4, kind: input, shape index: {}]
  %s5 = inlined_call_operand.vmem [shape: bf16[9,4,4], index: 5, kind: input, shape index: {}]
  %s6 = inlined_call_operand.vmem [shape: f32[4,1], index: 6, kind: input, shape index: {}]
  %s7 = inlined_call_operand.vmem [shape: f32[4,1], index: 7, kind: input, shape index: {}]
  %s8 = inlined_call_operand.vmem [shape: f32[4,1], index: 8, kind: input, shape index: {}]
  %s9 = inlined_call_operand.vmem [shape: f32[4,1], index: 9, kind: input, shape index: {}]
  %s10 = inlined_call_operand.vmem [shape: f32[4,1], index: 10, kind: input, shape index: {}]
  %s11 = inlined_call_operand.vmem [shape: f32[4,1], index: 11, kind: input, shape index: {}]
  %s12 = inlined_call_operand.vmem [shape: f32[4,1], index: 12, kind: input, shape index: {}]
  %s13 = inlined_call_operand.vmem [shape: bf16[4,256], index: 13, kind: output, shape index: {0}]
  %s14 = inlined_call_operand.hbm [shape: f32[1,4,128], index: 14, kind: output, shape index: {1}]
  %s15 = inlined_call_operand.hbm [shape: f32[1,4,128], index: 15, kind: output, shape index: {2}]
  %16 = xla_tuple %s13, %s14, %s15
  %s17 = sld [smem:[#allocation0]]
  $region78: #{dense_block.5} parent=0
    _
  %s19 = ssub.s32 1, %s17
  %s20 = scalar_select 0, %s19, %s17
  $region1: #{dense_block.5} parent=0
    #allocation2 [shape = 'u8[2048]{0}', space=vmem, size = 0x800, scoped, tag = 'output window, operand 1, single buffered']
    #allocation3 [shape = 's32[1]{0}', space=sflag, size = 0x4, scoped, tag = 'scoped memory for dense_block.5']
    #allocation4 [shape = 'u8[2048]{0}', space=vmem, size = 0x800, scoped, tag = 'output window, operand 2, single buffered']
    #allocation5 [shape = 's32[1]{0}', space=sflag, size = 0x4, scoped, tag = 'scoped memory for dense_block.5']
    %21 = vsyncpa [#allocation3], 0
    %22 = vsyncpa [#allocation5], 0
    // Predicated region
    $region2: #{dense_block.5} parent=1 // pred_check
      _
    $region3: #{dense_block.5} parent=1 // pred_check_branch
      %24 = sbr.rel (0) target = $region5
    $region4: #{dense_block.5} parent=1 // pred_region
      _
    $region5: #{dense_block.5} parent=1 // pred_fallthru
      _
    // Predicated region
    $region6: #{dense_block.5} parent=1 // pred_check
      _
    $region7: #{dense_block.5} parent=1 // pred_check_branch
      %26 = sbr.rel (0) target = $region9
    $region8: #{dense_block.5} parent=1 // pred_region
      _
    $region9: #{dense_block.5} parent=1 // pred_fallthru
      _
    // Predicated region
    $region10: #{dense_block.5} parent=1 // pred_check
      _
    $region11: #{dense_block.5} parent=1 // pred_check_branch
      %28 = sbr.rel (0) target = $region13
    $region12: #{dense_block.5} parent=1 // pred_region
      _
    $region13: #{dense_block.5} parent=1 // pred_fallthru
      _
    // Predicated region
    $region14: #{dense_block.5} parent=1 // pred_check
      _
    $region15: #{dense_block.5} parent=1 // pred_check_branch
      %30 = sbr.rel (0) target = $region17
    $region16: #{dense_block.5} parent=1 // pred_region
      _
    $region17: #{dense_block.5} parent=1 // pred_fallthru
      _
    // Predicated region
    $region18: #{dense_block.5} parent=1 // pred_check
      _
    $region19: #{dense_block.5} parent=1 // pred_check_branch
      %32 = sbr.rel (0) target = $region21
    $region20: #{dense_block.5} parent=1 // pred_region
      _
    $region21: #{dense_block.5} parent=1 // pred_fallthru
      _
    // Predicated region
    $region22: #{dense_block.5} parent=1 // pred_check
      _
    $region23: #{dense_block.5} parent=1 // pred_check_branch
      %34 = sbr.rel (0) target = $region25
    $region24: #{dense_block.5} parent=1 // pred_region
      _
    $region25: #{dense_block.5} parent=1 // pred_fallthru
      _
    // Predicated region
    $region26: #{dense_block.5} parent=1 // pred_check
      _
    $region27: #{dense_block.5} parent=1 // pred_check_branch
      %36 = sbr.rel (0) target = $region29
    $region28: #{dense_block.5} parent=1 // pred_region
      _
    $region29: #{dense_block.5} parent=1 // pred_fallthru
      _
    // Predicated region
    $region30: #{dense_block.5} parent=1 // pred_check
      _
    $region31: #{dense_block.5} parent=1 // pred_check_branch
      %38 = sbr.rel (0) target = $region33
    $region32: #{dense_block.5} parent=1 // pred_region
      _
    $region33: #{dense_block.5} parent=1 // pred_fallthru
      _
    // Predicated region
    $region34: #{dense_block.5} parent=1 // pred_check
      _
    $region35: #{dense_block.5} parent=1 // pred_check_branch
      %40 = sbr.rel (0) target = $region37
    $region36: #{dense_block.5} parent=1 // pred_region
      _
    $region37: #{dense_block.5} parent=1 // pred_fallthru
      _
    // Predicated region
    $region38: #{dense_block.5} parent=1 // pred_check
      _
    $region39: #{dense_block.5} parent=1 // pred_check_branch
      %42 = sbr.rel (0) target = $region41
    $region40: #{dense_block.5} parent=1 // pred_region
      _
    $region41: #{dense_block.5} parent=1 // pred_fallthru
      _
    // Predicated region
    $region42: #{dense_block.5} parent=1 // pred_check
      _
    $region43: #{dense_block.5} parent=1 // pred_check_branch
      %44 = sbr.rel (0) target = $region45
    $region44: #{dense_block.5} parent=1 // pred_region
      _
    $region45: #{dense_block.5} parent=1 // pred_fallthru
      _
    // Predicated region
    $region46: #{dense_block.5} parent=1 // pred_check
      _
    $region47: #{dense_block.5} parent=1 // pred_check_branch
      %46 = sbr.rel (0) target = $region49
    $region48: #{dense_block.5} parent=1 // pred_region
      _
    $region49: #{dense_block.5} parent=1 // pred_fallthru
      _
    // Predicated region
    $region50: #{dense_block.5} parent=1 // pred_check
      _
    $region51: #{dense_block.5} parent=1 // pred_check_branch
      %48 = sbr.rel (0) target = $region53
    $region52: #{dense_block.5} parent=1 // pred_region
      _
    $region53: #{dense_block.5} parent=1 // pred_fallthru
      _
    %v50 = vlaneseq
    %v51 = vand.u32 %v50, 127
    %v52 = vadd.s32 %v51, 128
    %vm53 = vcmp.lt.s32.totalorder %v51, 0
    %v54 = vsub.s32 0, %v51
    %v55 = vsel %vm53, %v54, %v51
    %v56 = vshrl.u32 %v55, 4
    %v57 = vand.u32 %v55, 15
    %v58 = vsub.s32 0, %v57
    %v59 = vsel %vm53, %v58, %v57
    %vm60 = vcmp.lt.s32.totalorder %v52, 0
    %v61 = vsub.s32 0, %v52
    %v62 = vsel %vm60, %v61, %v52
    %v63 = vshrl.u32 %v62, 4
    %v64 = vand.u32 %v62, 15
    %v65 = vsub.s32 0, %v64
    %v66 = vsel %vm60, %v65, %v64
    %vm67 = vcmp.ne.s32.totalorder %v59, 0
    %vm68 = vcmp.ne.s32.totalorder %v66, 0
    %vm69 = vcmp.lt.s32.totalorder %v59, 0
    %vm70 = vcmp.lt.s32.totalorder %v66, 0
    %vm71 = vmand %vm69, %vm67
    %vm72 = vmand %vm70, %vm68
    %v73 = vadd.s32 %v59, 16
    %v74 = vadd.s32 %v66, 16
    %v75 = vsel %vm71, %v73, %v59
    %v76 = vsel %vm72, %v74, %v66
    %vm77 = vcmp.ge.s32.totalorder %v75, 4
    %vm78 = vcmp.ge.s32.totalorder %v76, 4
    %vm79 = vcmp.ge.s32.totalorder %v75, 3
    %vm80 = vcmp.ge.s32.totalorder %v76, 3
    %vm81 = vcmp.ge.s32.totalorder %v75, 2
    %vm82 = vcmp.ge.s32.totalorder %v76, 2
    %vm83 = vcmp.ge.s32.totalorder %v75, 1
    %vm84 = vcmp.ge.s32.totalorder %v76, 1
    %vm85 = vcmp.lt.s32.totalorder %v75, 15
    %vm86 = vcmp.lt.s32.totalorder %v76, 15
    %vm87 = vcmp.lt.s32.totalorder %v75, 14
    %vm88 = vcmp.lt.s32.totalorder %v76, 14
    %vm89 = vcmp.lt.s32.totalorder %v75, 13
    %vm90 = vcmp.lt.s32.totalorder %v76, 13
    %vm91 = vcmp.lt.s32.totalorder %v75, 12
    %vm92 = vcmp.lt.s32.totalorder %v76, 12
    %v93 = vld [vmem:[%s0] sm:$0xf]
    %v94 = vld [vmem:[%s6] sm:$0xf]
    %v95 = vunpack.c.l.bf16 %v93
    %97 = vset.pattern.permute.xlu0 0
    %98 = vperm.xlu0 %97, %v94
    %v99 = vpop.permute.xlu0 %98
    %v101 = vunpack.c.l.s4 839922192
    %v102 = vunpack.c.0.s8 %v101
    %v103 = vlaneseq
    %v104 = vshrl.u32 %v103, 7
    %v105 = vsub.s32 %v102, %v104
    %v106 = vrot.slane %v99, %v105
    %v108 = vmul.f32 %v95, %v106
    %v109 = vld [vmem:[%s9] sm:$0xf]
    %111 = vset.pattern.permute.xlu0 0
    %112 = vperm.xlu0 %111, %v109
    %v113 = vpop.permute.xlu0 %112
    %v115 = vunpack.c.l.s4 839922192
    %v116 = vunpack.c.0.s8 %v115
    %v117 = vlaneseq
    %v118 = vshrl.u32 %v117, 7
    %v119 = vsub.s32 %v116, %v118
    %v120 = vrot.slane %v113, %v119
    %v122 = vadd.f32 %v108, %v120
    %v123 = vmax.f32 %v122, 0.0
    %v124 = vld [vmem:[%s3] sm:$0x3]
    %v125 = vld [vmem:[%s3 + $0x2] sm:$0x3]
    %v126 = vld [vmem:[%s3 + $0x4] sm:$0x3]
    %v127 = vld [vmem:[%s3 + $0x6] sm:$0x3]
    %v128 = vld [vmem:[%s3 + $0x8] sm:$0x3]
    %v129 = vld [vmem:[%s3 + $0xa] sm:$0x3]
    %v130 = vld [vmem:[%s3 + $0xc] sm:$0x3]
    %v131 = vld [vmem:[%s3 + $0xe] sm:$0x3]
    %v132 = vld [vmem:[%s3 + $0x10] sm:$0x3]
    %v134 = vcombine.high %v123, %v123
    %136 = vrot.lane.b32.xlu0 %v123, 4
    %v137 = vpop.permute.xlu0 %136
    %138 = vrot.lane.b32.xlu0 %v134, 4
    %v139 = vpop.permute.xlu0 %138
    %vm140 = vcmp.lt.s32.totalorder %v51, 4
    %v141 = vsel %vm140, %v137, %v139
    %v142 = vsel %vm140, %v139, %v137
    %v143 = vsel %vm77, 1, 0
    %v144 = vsel %vm78, 1, 0
    %vm145 = vcmp.eq.s32.totalorder %v143, 1
    %vm146 = vcmp.eq.s32.totalorder %v144, 1
    %v147 = vsel %vm145, %v142, 0.0
    %v148 = vsel %vm146, %v141, 0.0
    %v149 = vpack.c.bf16 %v147, %v147
    %v150 = vpack.c.bf16 %v148, %v148
    %151 = vrot.lane.b32.xlu0 %v123, 3
    %v152 = vpop.permute.xlu0 %151
    %153 = vrot.lane.b32.xlu0 %v134, 3
    %v154 = vpop.permute.xlu0 %153
    %vm155 = vcmp.lt.s32.totalorder %v51, 3
    %v156 = vsel %vm155, %v152, %v154
    %v157 = vsel %vm155, %v154, %v152
    %v158 = vsel %vm79, 1, 0
    %v159 = vsel %vm80, 1, 0
    %vm160 = vcmp.eq.s32.totalorder %v158, 1
    %vm161 = vcmp.eq.s32.totalorder %v159, 1
    %v162 = vsel %vm160, %v157, 0.0
    %v163 = vsel %vm161, %v156, 0.0
    %v164 = vpack.c.bf16 %v162, %v162
    %v165 = vpack.c.bf16 %v163, %v163
    %vm166 = vcmask 31744
    %v168 = vsel %vm166, %v125, 0
    %vm170 = vcmask 1041408
    %v172 = vsel %vm170, %v164, 0
    %v175 = vsel %vm170, %v165, 0
    %177 = vmatprep.subr.bf16.mxu0 %v175
    %178 = vmatpush1.bf16.msra.mxu0 %v172
    %179 = vmatprep.subr.bf16.mxu0 0
    %180 = vmatpush1.bf16.msra.mxu0 0
    %181 = vmatprep.subr.bf16.mxu0 0
    %182 = vmatpush1.bf16.msra.mxu0 0
    %183 = vmatprep.subr.bf16.mxu0 0
    %184 = vmatpush1.bf16.msra.mxu0 0
    %185 = vmatprep.subr.bf16.mxu0 0
    %186 = vmatpush1.bf16.msra.mxu0 0
    %187 = vmatprep.subr.bf16.mxu0 0
    %188 = vmatpush1.bf16.msra.mxu0 0
    %189 = vmatprep.subr.bf16.mxu0 0
    %190 = vmatpush1.bf16.msra.mxu0 0
    %191 = vmatprep.subr.bf16.mxu0 0
    %192 = vmatpush1.bf16.msra.mxu0 0
    %193 = vmatprep.subr.bf16.mxu0 0
    %194 = vmatpush1.bf16.msra.mxu0 0
    %195 = vmatprep.subr.bf16.mxu0 0
    %196 = vmatpush1.bf16.msra.mxu0 0
    %197 = vmatprep.subr.bf16.mxu0 0
    %198 = vmatpush1.bf16.msra.mxu0 0
    %199 = vmatprep.subr.bf16.mxu0 0
    %200 = vmatpush1.bf16.msra.mxu0 0
    %201 = vmatprep.subr.bf16.mxu0 0
    %202 = vmatpush1.bf16.msra.mxu0 0
    %203 = vmatprep.subr.bf16.mxu0 0
    %204 = vmatpush1.bf16.msra.mxu0 0
    %205 = vmatprep.subr.bf16.mxu0 0
    %206 = vmatpush1.bf16.msra.mxu0 0
    %207 = vmatprep.subr.bf16.mxu0 0
    %208 = vmatpush1.bf16.msra.mxu0 0
    %209 = vmatprep.mubr.bf16.mxu0 0
    %210 = vmatmul.mubr.bf16.gmra.mrb[0].mxu0 %v168
    %v211 = vpop.f32.mrb[0].mxu0
    %v212 = vadd.f32 0.0, %v211
    %v213 = vpop.f32.mrb[0].mxu0
    %v214 = vadd.f32 0.0, %v213
    %v215 = vpop.f32.mrb[0].mxu0
    %v216 = vpop.f32.mrb[0].mxu0
    %217 = vdwg.mxu0
    %v219 = vsel %vm166, %v124, 0
    %v222 = vsel %vm170, %v149, 0
    %v225 = vsel %vm170, %v150, 0
    %227 = vmatprep.subr.bf16.mxu0 %v225
    %228 = vmatpush1.bf16.msra.mxu0 %v222
    %229 = vmatprep.subr.bf16.mxu0 0
    %230 = vmatpush1.bf16.msra.mxu0 0
    %231 = vmatprep.subr.bf16.mxu0 0
    %232 = vmatpush1.bf16.msra.mxu0 0
    %233 = vmatprep.subr.bf16.mxu0 0
    %234 = vmatpush1.bf16.msra.mxu0 0
    %235 = vmatprep.subr.bf16.mxu0 0
    %236 = vmatpush1.bf16.msra.mxu0 0
    %237 = vmatprep.subr.bf16.mxu0 0
    %238 = vmatpush1.bf16.msra.mxu0 0
    %239 = vmatprep.subr.bf16.mxu0 0
    %240 = vmatpush1.bf16.msra.mxu0 0
    %241 = vmatprep.subr.bf16.mxu0 0
    %242 = vmatpush1.bf16.msra.mxu0 0
    %243 = vmatprep.subr.bf16.mxu0 0
    %244 = vmatpush1.bf16.msra.mxu0 0
    %245 = vmatprep.subr.bf16.mxu0 0
    %246 = vmatpush1.bf16.msra.mxu0 0
    %247 = vmatprep.subr.bf16.mxu0 0
    %248 = vmatpush1.bf16.msra.mxu0 0
    %249 = vmatprep.subr.bf16.mxu0 0
    %250 = vmatpush1.bf16.msra.mxu0 0
    %251 = vmatprep.subr.bf16.mxu0 0
    %252 = vmatpush1.bf16.msra.mxu0 0
    %253 = vmatprep.subr.bf16.mxu0 0
    %254 = vmatpush1.bf16.msra.mxu0 0
    %255 = vmatprep.subr.bf16.mxu0 0
    %256 = vmatpush1.bf16.msra.mxu0 0
    %257 = vmatprep.subr.bf16.mxu0 0
    %258 = vmatpush1.bf16.msra.mxu0 0
    %259 = vmatprep.mubr.bf16.mxu0 0
    %260 = vmatmul.mubr.bf16.gmra.mrb[0].mxu0 %v219
    %v261 = vpop.f32.mrb[0].mxu0
    %v262 = vadd.f32 %v212, %v261
    %v263 = vpop.f32.mrb[0].mxu0
    %v264 = vadd.f32 %v214, %v263
    %v265 = vpop.f32.mrb[0].mxu0
    %v266 = vpop.f32.mrb[0].mxu0
    %267 = vdwg.mxu0
    %268 = vrot.lane.b32.xlu0 %v123, 2
    %v269 = vpop.permute.xlu0 %268
    %270 = vrot.lane.b32.xlu0 %v134, 2
    %v271 = vpop.permute.xlu0 %270
    %vm272 = vcmp.lt.s32.totalorder %v51, 2
    %v273 = vsel %vm272, %v269, %v271
    %v274 = vsel %vm272, %v271, %v269
    %v275 = vsel %vm81, 1, 0
    %v276 = vsel %vm82, 1, 0
    %vm277 = vcmp.eq.s32.totalorder %v275, 1
    %vm278 = vcmp.eq.s32.totalorder %v276, 1
    %v279 = vsel %vm277, %v274, 0.0
    %v280 = vsel %vm278, %v273, 0.0
    %v281 = vpack.c.bf16 %v279, %v279
    %v282 = vpack.c.bf16 %v280, %v280
    %v284 = vsel %vm166, %v126, 0
    %v287 = vsel %vm170, %v281, 0
    %v290 = vsel %vm170, %v282, 0
    %292 = vmatprep.subr.bf16.mxu0 %v290
    %293 = vmatpush1.bf16.msra.mxu0 %v287
    %294 = vmatprep.subr.bf16.mxu0 0
    %295 = vmatpush1.bf16.msra.mxu0 0
    %296 = vmatprep.subr.bf16.mxu0 0
    %297 = vmatpush1.bf16.msra.mxu0 0
    %298 = vmatprep.subr.bf16.mxu0 0
    %299 = vmatpush1.bf16.msra.mxu0 0
    %300 = vmatprep.subr.bf16.mxu0 0
    %301 = vmatpush1.bf16.msra.mxu0 0
    %302 = vmatprep.subr.bf16.mxu0 0
    %303 = vmatpush1.bf16.msra.mxu0 0
    %304 = vmatprep.subr.bf16.mxu0 0
    %305 = vmatpush1.bf16.msra.mxu0 0
    %306 = vmatprep.subr.bf16.mxu0 0
    %307 = vmatpush1.bf16.msra.mxu0 0
    %308 = vmatprep.subr.bf16.mxu0 0
    %309 = vmatpush1.bf16.msra.mxu0 0
    %310 = vmatprep.subr.bf16.mxu0 0
    %311 = vmatpush1.bf16.msra.mxu0 0
    %312 = vmatprep.subr.bf16.mxu0 0
    %313 = vmatpush1.bf16.msra.mxu0 0
    %314 = vmatprep.subr.bf16.mxu0 0
    %315 = vmatpush1.bf16.msra.mxu0 0
    %316 = vmatprep.subr.bf16.mxu0 0
    %317 = vmatpush1.bf16.msra.mxu0 0
    %318 = vmatprep.subr.bf16.mxu0 0
    %319 = vmatpush1.bf16.msra.mxu0 0
    %320 = vmatprep.subr.bf16.mxu0 0
    %321 = vmatpush1.bf16.msra.mxu0 0
    %322 = vmatprep.subr.bf16.mxu0 0
    %323 = vmatpush1.bf16.msra.mxu0 0
    %324 = vmatprep.mubr.bf16.mxu0 0
    %325 = vmatmul.mubr.bf16.gmra.mrb[0].mxu0 %v284
    %v326 = vpop.f32.mrb[0].mxu0
    %v327 = vadd.f32 0.0, %v326
    %v328 = vpop.f32.mrb[0].mxu0
    %v329 = vadd.f32 0.0, %v328
    %v330 = vpop.f32.mrb[0].mxu0
    %v331 = vpop.f32.mrb[0].mxu0
    %332 = vdwg.mxu0
    %v333 = vadd.f32 %v262, %v327
    %v334 = vadd.f32 %v264, %v329
    %335 = vrot.lane.b32.xlu0 %v123, 1
    %v336 = vpop.permute.xlu0 %335
    %337 = vrot.lane.b32.xlu0 %v134, 1
    %v338 = vpop.permute.xlu0 %337
    %vm339 = vcmp.lt.s32.totalorder %v51, 1
    %v340 = vsel %vm339, %v336, %v338
    %v341 = vsel %vm339, %v338, %v336
    %v342 = vsel %vm83, 1, 0
    %v343 = vsel %vm84, 1, 0
    %vm344 = vcmp.eq.s32.totalorder %v342, 1
    %vm345 = vcmp.eq.s32.totalorder %v343, 1
    %v346 = vsel %vm344, %v341, 0.0
    %v347 = vsel %vm345, %v340, 0.0
    %v348 = vpack.c.bf16 %v346, %v346
    %v349 = vpack.c.bf16 %v347, %v347
    %v351 = vsel %vm166, %v127, 0
    %v354 = vsel %vm170, %v348, 0
    %v357 = vsel %vm170, %v349, 0
    %359 = vmatprep.subr.bf16.mxu0 %v357
    %360 = vmatpush1.bf16.msra.mxu0 %v354
    %361 = vmatprep.subr.bf16.mxu0 0
    %362 = vmatpush1.bf16.msra.mxu0 0
    %363 = vmatprep.subr.bf16.mxu0 0
    %364 = vmatpush1.bf16.msra.mxu0 0
    %365 = vmatprep.subr.bf16.mxu0 0
    %366 = vmatpush1.bf16.msra.mxu0 0
    %367 = vmatprep.subr.bf16.mxu0 0
    %368 = vmatpush1.bf16.msra.mxu0 0
    %369 = vmatprep.subr.bf16.mxu0 0
    %370 = vmatpush1.bf16.msra.mxu0 0
    %371 = vmatprep.subr.bf16.mxu0 0
    %372 = vmatpush1.bf16.msra.mxu0 0
    %373 = vmatprep.subr.bf16.mxu0 0
    %374 = vmatpush1.bf16.msra.mxu0 0
    %375 = vmatprep.subr.bf16.mxu0 0
    %376 = vmatpush1.bf16.msra.mxu0 0
    %377 = vmatprep.subr.bf16.mxu0 0
    %378 = vmatpush1.bf16.msra.mxu0 0
    %379 = vmatprep.subr.bf16.mxu0 0
    %380 = vmatpush1.bf16.msra.mxu0 0
    %381 = vmatprep.subr.bf16.mxu0 0
    %382 = vmatpush1.bf16.msra.mxu0 0
    %383 = vmatprep.subr.bf16.mxu0 0
    %384 = vmatpush1.bf16.msra.mxu0 0
    %385 = vmatprep.subr.bf16.mxu0 0
    %386 = vmatpush1.bf16.msra.mxu0 0
    %387 = vmatprep.subr.bf16.mxu0 0
    %388 = vmatpush1.bf16.msra.mxu0 0
    %389 = vmatprep.subr.bf16.mxu0 0
    %390 = vmatpush1.bf16.msra.mxu0 0
    %391 = vmatprep.mubr.bf16.mxu0 0
    %392 = vmatmul.mubr.bf16.gmra.mrb[0].mxu0 %v351
    %v393 = vpop.f32.mrb[0].mxu0
    %v394 = vadd.f32 0.0, %v393
    %v395 = vpop.f32.mrb[0].mxu0
    %v396 = vadd.f32 0.0, %v395
    %v397 = vpop.f32.mrb[0].mxu0
    %v398 = vpop.f32.mrb[0].mxu0
    %399 = vdwg.mxu0
    %v400 = vadd.f32 %v333, %v394
    %v401 = vadd.f32 %v334, %v396
    %v402 = vpack.c.bf16 %v123, %v123
    %v403 = vpack.c.bf16 %v134, %v134
    %v405 = vsel %vm166, %v128, 0
    %v408 = vsel %vm170, %v402, 0
    %v411 = vsel %vm170, %v403, 0
    %413 = vmatprep.subr.bf16.mxu0 %v411
    %414 = vmatpush1.bf16.msra.mxu0 %v408
    %415 = vmatprep.subr.bf16.mxu0 0
    %416 = vmatpush1.bf16.msra.mxu0 0
    %417 = vmatprep.subr.bf16.mxu0 0
    %418 = vmatpush1.bf16.msra.mxu0 0
    %419 = vmatprep.subr.bf16.mxu0 0
    %420 = vmatpush1.bf16.msra.mxu0 0
    %421 = vmatprep.subr.bf16.mxu0 0
    %422 = vmatpush1.bf16.msra.mxu0 0
    %423 = vmatprep.subr.bf16.mxu0 0
    %424 = vmatpush1.bf16.msra.mxu0 0
    %425 = vmatprep.subr.bf16.mxu0 0
    %426 = vmatpush1.bf16.msra.mxu0 0
    %427 = vmatprep.subr.bf16.mxu0 0
    %428 = vmatpush1.bf16.msra.mxu0 0
    %429 = vmatprep.subr.bf16.mxu0 0
    %430 = vmatpush1.bf16.msra.mxu0 0
    %431 = vmatprep.subr.bf16.mxu0 0
    %432 = vmatpush1.bf16.msra.mxu0 0
    %433 = vmatprep.subr.bf16.mxu0 0
    %434 = vmatpush1.bf16.msra.mxu0 0
    %435 = vmatprep.subr.bf16.mxu0 0
    %436 = vmatpush1.bf16.msra.mxu0 0
    %437 = vmatprep.subr.bf16.mxu0 0
    %438 = vmatpush1.bf16.msra.mxu0 0
    %439 = vmatprep.subr.bf16.mxu0 0
    %440 = vmatpush1.bf16.msra.mxu0 0
    %441 = vmatprep.subr.bf16.mxu0 0
    %442 = vmatpush1.bf16.msra.mxu0 0
    %443 = vmatprep.subr.bf16.mxu0 0
    %444 = vmatpush1.bf16.msra.mxu0 0
    %445 = vmatprep.mubr.bf16.mxu0 0
    %446 = vmatmul.mubr.bf16.gmra.mrb[0].mxu0 %v405
    %v447 = vpop.f32.mrb[0].mxu0
    %v448 = vadd.f32 0.0, %v447
    %v449 = vpop.f32.mrb[0].mxu0
    %v450 = vadd.f32 0.0, %v449
    %v451 = vpop.f32.mrb[0].mxu0
    %v452 = vpop.f32.mrb[0].mxu0
    %453 = vdwg.mxu0
    %v454 = vadd.f32 %v400, %v448
    %v455 = vadd.f32 %v401, %v450
    %456 = vrot.lane.b32.xlu0 %v123, 127
    %v457 = vpop.permute.xlu0 %456
    %458 = vrot.lane.b32.xlu0 %v134, 127
    %v459 = vpop.permute.xlu0 %458
    %vm460 = vcmp.lt.s32.totalorder %v51, 127
    %v461 = vsel %vm460, %v457, %v459
    %v462 = vsel %vm460, %v459, %v457
    %v463 = vsel %vm85, 1, 0
    %v464 = vsel %vm86, 1, 0
    %vm465 = vcmp.eq.s32.totalorder %v463, 1
    %vm466 = vcmp.eq.s32.totalorder %v464, 1
    %v467 = vsel %vm465, %v461, 0.0
    %v468 = vsel %vm466, %v462, 0.0
    %v469 = vpack.c.bf16 %v467, %v467
    %v470 = vpack.c.bf16 %v468, %v468
    %v472 = vsel %vm166, %v129, 0
    %v475 = vsel %vm170, %v469, 0
    %v478 = vsel %vm170, %v470, 0
    %480 = vmatprep.subr.bf16.mxu0 %v478
    %481 = vmatpush1.bf16.msra.mxu0 %v475
    %482 = vmatprep.subr.bf16.mxu0 0
    %483 = vmatpush1.bf16.msra.mxu0 0
    %484 = vmatprep.subr.bf16.mxu0 0
    %485 = vmatpush1.bf16.msra.mxu0 0
    %486 = vmatprep.subr.bf16.mxu0 0
    %487 = vmatpush1.bf16.msra.mxu0 0
    %488 = vmatprep.subr.bf16.mxu0 0
    %489 = vmatpush1.bf16.msra.mxu0 0
    %490 = vmatprep.subr.bf16.mxu0 0
    %491 = vmatpush1.bf16.msra.mxu0 0
    %492 = vmatprep.subr.bf16.mxu0 0
    %493 = vmatpush1.bf16.msra.mxu0 0
    %494 = vmatprep.subr.bf16.mxu0 0
    %495 = vmatpush1.bf16.msra.mxu0 0
    %496 = vmatprep.subr.bf16.mxu0 0
    %497 = vmatpush1.bf16.msra.mxu0 0
    %498 = vmatprep.subr.bf16.mxu0 0
    %499 = vmatpush1.bf16.msra.mxu0 0
    %500 = vmatprep.subr.bf16.mxu0 0
    %501 = vmatpush1.bf16.msra.mxu0 0
    %502 = vmatprep.subr.bf16.mxu0 0
    %503 = vmatpush1.bf16.msra.mxu0 0
    %504 = vmatprep.subr.bf16.mxu0 0
    %505 = vmatpush1.bf16.msra.mxu0 0
    %506 = vmatprep.subr.bf16.mxu0 0
    %507 = vmatpush1.bf16.msra.mxu0 0
    %508 = vmatprep.subr.bf16.mxu0 0
    %509 = vmatpush1.bf16.msra.mxu0 0
    %510 = vmatprep.subr.bf16.mxu0 0
    %511 = vmatpush1.bf16.msra.mxu0 0
    %512 = vmatprep.mubr.bf16.mxu0 0
    %513 = vmatmul.mubr.bf16.gmra.mrb[0].mxu0 %v472
    %v514 = vpop.f32.mrb[0].mxu0
    %v515 = vadd.f32 0.0, %v514
    %v516 = vpop.f32.mrb[0].mxu0
    %v517 = vadd.f32 0.0, %v516
    %v518 = vpop.f32.mrb[0].mxu0
    %v519 = vpop.f32.mrb[0].mxu0
    %520 = vdwg.mxu0
    %v521 = vadd.f32 %v454, %v515
    %v522 = vadd.f32 %v455, %v517
    %523 = vrot.lane.b32.xlu0 %v123, 126
    %v524 = vpop.permute.xlu0 %523
    %525 = vrot.lane.b32.xlu0 %v134, 126
    %v526 = vpop.permute.xlu0 %525
    %vm527 = vcmp.lt.s32.totalorder %v51, 126
    %v528 = vsel %vm527, %v524, %v526
    %v529 = vsel %vm527, %v526, %v524
    %v530 = vsel %vm87, 1, 0
    %v531 = vsel %vm88, 1, 0
    %vm532 = vcmp.eq.s32.totalorder %v530, 1
    %vm533 = vcmp.eq.s32.totalorder %v531, 1
    %v534 = vsel %vm532, %v528, 0.0
    %v535 = vsel %vm533, %v529, 0.0
    %v536 = vpack.c.bf16 %v534, %v534
    %v537 = vpack.c.bf16 %v535, %v535
    %v539 = vsel %vm166, %v130, 0
    %v542 = vsel %vm170, %v536, 0
    %v545 = vsel %vm170, %v537, 0
    %547 = vmatprep.subr.bf16.mxu0 %v545
    %548 = vmatpush1.bf16.msra.mxu0 %v542
    %549 = vmatprep.subr.bf16.mxu0 0
    %550 = vmatpush1.bf16.msra.mxu0 0
    %551 = vmatprep.subr.bf16.mxu0 0
    %552 = vmatpush1.bf16.msra.mxu0 0
    %553 = vmatprep.subr.bf16.mxu0 0
    %554 = vmatpush1.bf16.msra.mxu0 0
    %555 = vmatprep.subr.bf16.mxu0 0
    %556 = vmatpush1.bf16.msra.mxu0 0
    %557 = vmatprep.subr.bf16.mxu0 0
    %558 = vmatpush1.bf16.msra.mxu0 0
    %559 = vmatprep.subr.bf16.mxu0 0
    %560 = vmatpush1.bf16.msra.mxu0 0
    %561 = vmatprep.subr.bf16.mxu0 0
    %562 = vmatpush1.bf16.msra.mxu0 0
    %563 = vmatprep.subr.bf16.mxu0 0
    %564 = vmatpush1.bf16.msra.mxu0 0
    %565 = vmatprep.subr.bf16.mxu0 0
    %566 = vmatpush1.bf16.msra.mxu0 0
    %567 = vmatprep.subr.bf16.mxu0 0
    %568 = vmatpush1.bf16.msra.mxu0 0
    %569 = vmatprep.subr.bf16.mxu0 0
    %570 = vmatpush1.bf16.msra.mxu0 0
    %571 = vmatprep.subr.bf16.mxu0 0
    %572 = vmatpush1.bf16.msra.mxu0 0
    %573 = vmatprep.subr.bf16.mxu0 0
    %574 = vmatpush1.bf16.msra.mxu0 0
    %575 = vmatprep.subr.bf16.mxu0 0
    %576 = vmatpush1.bf16.msra.mxu0 0
    %577 = vmatprep.subr.bf16.mxu0 0
    %578 = vmatpush1.bf16.msra.mxu0 0
    %579 = vmatprep.mubr.bf16.mxu0 0
    %580 = vmatmul.mubr.bf16.gmra.mrb[0].mxu0 %v539
    %v581 = vpop.f32.mrb[0].mxu0
    %v582 = vadd.f32 0.0, %v581
    %v583 = vpop.f32.mrb[0].mxu0
    %v584 = vadd.f32 0.0, %v583
    %v585 = vpop.f32.mrb[0].mxu0
    %v586 = vpop.f32.mrb[0].mxu0
    %587 = vdwg.mxu0
    %v588 = vadd.f32 %v521, %v582
    %v589 = vadd.f32 %v522, %v584
    %590 = vrot.lane.b32.xlu0 %v123, 125
    %v591 = vpop.permute.xlu0 %590
    %592 = vrot.lane.b32.xlu0 %v134, 125
    %v593 = vpop.permute.xlu0 %592
    %vm594 = vcmp.lt.s32.totalorder %v51, 125
    %v595 = vsel %vm594, %v591, %v593
    %v596 = vsel %vm594, %v593, %v591
    %v597 = vsel %vm89, 1, 0
    %v598 = vsel %vm90, 1, 0
    %vm599 = vcmp.eq.s32.totalorder %v597, 1
    %vm600 = vcmp.eq.s32.totalorder %v598, 1
    %v601 = vsel %vm599, %v595, 0.0
    %v602 = vsel %vm600, %v596, 0.0
    %v603 = vpack.c.bf16 %v601, %v601
    %v604 = vpack.c.bf16 %v602, %v602
    %v606 = vsel %vm166, %v131, 0
    %v609 = vsel %vm170, %v603, 0
    %v612 = vsel %vm170, %v604, 0
    %614 = vmatprep.subr.bf16.mxu0 %v612
    %615 = vmatpush1.bf16.msra.mxu0 %v609
    %616 = vmatprep.subr.bf16.mxu0 0
    %617 = vmatpush1.bf16.msra.mxu0 0
    %618 = vmatprep.subr.bf16.mxu0 0
    %619 = vmatpush1.bf16.msra.mxu0 0
    %620 = vmatprep.subr.bf16.mxu0 0
    %621 = vmatpush1.bf16.msra.mxu0 0
    %622 = vmatprep.subr.bf16.mxu0 0
    %623 = vmatpush1.bf16.msra.mxu0 0
    %624 = vmatprep.subr.bf16.mxu0 0
    %625 = vmatpush1.bf16.msra.mxu0 0
    %626 = vmatprep.subr.bf16.mxu0 0
    %627 = vmatpush1.bf16.msra.mxu0 0
    %628 = vmatprep.subr.bf16.mxu0 0
    %629 = vmatpush1.bf16.msra.mxu0 0
    %630 = vmatprep.subr.bf16.mxu0 0
    %631 = vmatpush1.bf16.msra.mxu0 0
    %632 = vmatprep.subr.bf16.mxu0 0
    %633 = vmatpush1.bf16.msra.mxu0 0
    %634 = vmatprep.subr.bf16.mxu0 0
    %635 = vmatpush1.bf16.msra.mxu0 0
    %636 = vmatprep.subr.bf16.mxu0 0
    %637 = vmatpush1.bf16.msra.mxu0 0
    %638 = vmatprep.subr.bf16.mxu0 0
    %639 = vmatpush1.bf16.msra.mxu0 0
    %640 = vmatprep.subr.bf16.mxu0 0
    %641 = vmatpush1.bf16.msra.mxu0 0
    %642 = vmatprep.subr.bf16.mxu0 0
    %643 = vmatpush1.bf16.msra.mxu0 0
    %644 = vmatprep.subr.bf16.mxu0 0
    %645 = vmatpush1.bf16.msra.mxu0 0
    %646 = vmatprep.mubr.bf16.mxu0 0
    %647 = vmatmul.mubr.bf16.gmra.mrb[0].mxu0 %v606
    %v648 = vpop.f32.mrb[0].mxu0
    %v649 = vadd.f32 0.0, %v648
    %v650 = vpop.f32.mrb[0].mxu0
    %v651 = vadd.f32 0.0, %v650
    %v652 = vpop.f32.mrb[0].mxu0
    %v653 = vpop.f32.mrb[0].mxu0
    %654 = vdwg.mxu0
    %v655 = vadd.f32 %v588, %v649
    %v656 = vadd.f32 %v589, %v651
    %657 = vrot.lane.b32.xlu0 %v123, 124
    %v658 = vpop.permute.xlu0 %657
    %659 = vrot.lane.b32.xlu0 %v134, 124
    %v660 = vpop.permute.xlu0 %659
    %vm661 = vcmp.lt.s32.totalorder %v51, 124
    %v662 = vsel %vm661, %v658, %v660
    %v663 = vsel %vm661, %v660, %v658
    %v664 = vsel %vm91, 1, 0
    %v665 = vsel %vm92, 1, 0
    %vm666 = vcmp.eq.s32.totalorder %v664, 1
    %vm667 = vcmp.eq.s32.totalorder %v665, 1
    %v668 = vsel %vm666, %v662, 0.0
    %v669 = vsel %vm667, %v663, 0.0
    %v670 = vpack.c.bf16 %v668, %v668
    %v671 = vpack.c.bf16 %v669, %v669
    %v673 = vsel %vm166, %v132, 0
    %v676 = vsel %vm170, %v670, 0
    %v679 = vsel %vm170, %v671, 0
    %681 = vmatprep.subr.bf16.mxu0 %v679
    %682 = vmatpush1.bf16.msra.mxu0 %v676
    %683 = vmatprep.subr.bf16.mxu0 0
    %684 = vmatpush1.bf16.msra.mxu0 0
    %685 = vmatprep.subr.bf16.mxu0 0
    %686 = vmatpush1.bf16.msra.mxu0 0
    %687 = vmatprep.subr.bf16.mxu0 0
    %688 = vmatpush1.bf16.msra.mxu0 0
    %689 = vmatprep.subr.bf16.mxu0 0
    %690 = vmatpush1.bf16.msra.mxu0 0
    %691 = vmatprep.subr.bf16.mxu0 0
    %692 = vmatpush1.bf16.msra.mxu0 0
    %693 = vmatprep.subr.bf16.mxu0 0
    %694 = vmatpush1.bf16.msra.mxu0 0
    %695 = vmatprep.subr.bf16.mxu0 0
    %696 = vmatpush1.bf16.msra.mxu0 0
    %697 = vmatprep.subr.bf16.mxu0 0
    %698 = vmatpush1.bf16.msra.mxu0 0
    %699 = vmatprep.subr.bf16.mxu0 0
    %700 = vmatpush1.bf16.msra.mxu0 0
    %701 = vmatprep.subr.bf16.mxu0 0
    %702 = vmatpush1.bf16.msra.mxu0 0
    %703 = vmatprep.subr.bf16.mxu0 0
    %704 = vmatpush1.bf16.msra.mxu0 0
    %705 = vmatprep.subr.bf16.mxu0 0
    %706 = vmatpush1.bf16.msra.mxu0 0
    %707 = vmatprep.subr.bf16.mxu0 0
    %708 = vmatpush1.bf16.msra.mxu0 0
    %709 = vmatprep.subr.bf16.mxu0 0
    %710 = vmatpush1.bf16.msra.mxu0 0
    %711 = vmatprep.subr.bf16.mxu0 0
    %712 = vmatpush1.bf16.msra.mxu0 0
    %713 = vmatprep.mubr.bf16.mxu0 0
    %714 = vmatmul.mubr.bf16.gmra.mrb[0].mxu0 %v673
    %v715 = vpop.f32.mrb[0].mxu0
    %v716 = vadd.f32 0.0, %v715
    %v717 = vpop.f32.mrb[0].mxu0
    %v718 = vadd.f32 0.0, %v717
    %v719 = vpop.f32.mrb[0].mxu0
    %v720 = vpop.f32.mrb[0].mxu0
    %721 = vdwg.mxu0
    %v722 = vadd.f32 %v655, %v716
    %v723 = vadd.f32 %v656, %v718
    %v724 = vld [vmem:[%s1] sm:$0xf]
    %v725 = vld [vmem:[%s7] sm:$0xf]
    %v726 = vunpack.c.l.bf16 %v724
    %728 = vset.pattern.permute.xlu0 0
    %729 = vperm.xlu0 %728, %v725
    %v730 = vpop.permute.xlu0 %729
    %v732 = vunpack.c.l.s4 839922192
    %v733 = vunpack.c.0.s8 %v732
    %v734 = vlaneseq
    %v735 = vshrl.u32 %v734, 7
    %v736 = vsub.s32 %v733, %v735
    %v737 = vrot.slane %v730, %v736
    %v739 = vmul.f32 %v726, %v737
    %v740 = vld [vmem:[%s10] sm:$0xf]
    %742 = vset.pattern.permute.xlu0 0
    %743 = vperm.xlu0 %742, %v740
    %v744 = vpop.permute.xlu0 %743
    %v746 = vunpack.c.l.s4 839922192
    %v747 = vunpack.c.0.s8 %v746
    %v748 = vlaneseq
    %v749 = vshrl.u32 %v748, 7
    %v750 = vsub.s32 %v747, %v749
    %v751 = vrot.slane %v744, %v750
    %v753 = vadd.f32 %v739, %v751
    %v754 = vmax.f32 %v753, 0.0
    %v755 = vld [vmem:[%s4] sm:$0x3]
    %v756 = vld [vmem:[%s4 + $0x2] sm:$0x3]
    %v757 = vld [vmem:[%s4 + $0x4] sm:$0x3]
    %v758 = vld [vmem:[%s4 + $0x6] sm:$0x3]
    %v759 = vld [vmem:[%s4 + $0x8] sm:$0x3]
    %v760 = vld [vmem:[%s4 + $0xa] sm:$0x3]
    %v761 = vld [vmem:[%s4 + $0xc] sm:$0x3]
    %v762 = vld [vmem:[%s4 + $0xe] sm:$0x3]
    %v763 = vld [vmem:[%s4 + $0x10] sm:$0x3]
    %v765 = vcombine.high %v754, %v754
    %767 = vrot.lane.b32.xlu0 %v754, 4
    %v768 = vpop.permute.xlu0 %767
    %769 = vrot.lane.b32.xlu0 %v765, 4
    %v770 = vpop.permute.xlu0 %769
    %v771 = vsel %vm140, %v768, %v770
    %v772 = vsel %vm140, %v770, %v768
    %v773 = vsel %vm145, %v772, 0.0
    %v774 = vsel %vm146, %v771, 0.0
    %v775 = vpack.c.bf16 %v773, %v773
    %v776 = vpack.c.bf16 %v774, %v774
    %v778 = vsel %vm166, %v755, 0
    %v781 = vsel %vm170, %v775, 0
    %v784 = vsel %vm170, %v776, 0
    %786 = vmatprep.subr.bf16.mxu0 %v784
    %787 = vmatpush1.bf16.msra.mxu0 %v781
    %788 = vmatprep.subr.bf16.mxu0 0
    %789 = vmatpush1.bf16.msra.mxu0 0
    %790 = vmatprep.subr.bf16.mxu0 0
    %791 = vmatpush1.bf16.msra.mxu0 0
    %792 = vmatprep.subr.bf16.mxu0 0
    %793 = vmatpush1.bf16.msra.mxu0 0
    %794 = vmatprep.subr.bf16.mxu0 0
    %795 = vmatpush1.bf16.msra.mxu0 0
    %796 = vmatprep.subr.bf16.mxu0 0
    %797 = vmatpush1.bf16.msra.mxu0 0
    %798 = vmatprep.subr.bf16.mxu0 0
    %799 = vmatpush1.bf16.msra.mxu0 0
    %800 = vmatprep.subr.bf16.mxu0 0
    %801 = vmatpush1.bf16.msra.mxu0 0
    %802 = vmatprep.subr.bf16.mxu0 0
    %803 = vmatpush1.bf16.msra.mxu0 0
    %804 = vmatprep.subr.bf16.mxu0 0
    %805 = vmatpush1.bf16.msra.mxu0 0
    %806 = vmatprep.subr.bf16.mxu0 0
    %807 = vmatpush1.bf16.msra.mxu0 0
    %808 = vmatprep.subr.bf16.mxu0 0
    %809 = vmatpush1.bf16.msra.mxu0 0
    %810 = vmatprep.subr.bf16.mxu0 0
    %811 = vmatpush1.bf16.msra.mxu0 0
    %812 = vmatprep.subr.bf16.mxu0 0
    %813 = vmatpush1.bf16.msra.mxu0 0
    %814 = vmatprep.subr.bf16.mxu0 0
    %815 = vmatpush1.bf16.msra.mxu0 0
    %816 = vmatprep.subr.bf16.mxu0 0
    %817 = vmatpush1.bf16.msra.mxu0 0
    %818 = vmatprep.mubr.bf16.mxu0 0
    %819 = vmatmul.mubr.bf16.gmra.mrb[0].mxu0 %v778
    %v820 = vpop.f32.mrb[0].mxu0
    %v821 = vadd.f32 0.0, %v820
    %v822 = vpop.f32.mrb[0].mxu0
    %v823 = vadd.f32 0.0, %v822
    %v824 = vpop.f32.mrb[0].mxu0
    %v825 = vpop.f32.mrb[0].mxu0
    %826 = vdwg.mxu0
    %v827 = vadd.f32 %v722, %v821
    %v828 = vadd.f32 %v723, %v823
    %829 = vrot.lane.b32.xlu0 %v754, 3
    %v830 = vpop.permute.xlu0 %829
    %831 = vrot.lane.b32.xlu0 %v765, 3
    %v832 = vpop.permute.xlu0 %831
    %v833 = vsel %vm155, %v830, %v832
    %v834 = vsel %vm155, %v832, %v830
    %v835 = vsel %vm160, %v834, 0.0
    %v836 = vsel %vm161, %v833, 0.0
    %v837 = vpack.c.bf16 %v835, %v835
    %v838 = vpack.c.bf16 %v836, %v836
    %v840 = vsel %vm166, %v756, 0
    %v843 = vsel %vm170, %v837, 0
    %v846 = vsel %vm170, %v838, 0
    %848 = vmatprep.subr.bf16.mxu0 %v846
    %849 = vmatpush1.bf16.msra.mxu0 %v843
    %850 = vmatprep.subr.bf16.mxu0 0
    %851 = vmatpush1.bf16.msra.mxu0 0
    %852 = vmatprep.subr.bf16.mxu0 0
    %853 = vmatpush1.bf16.msra.mxu0 0
    %854 = vmatprep.subr.bf16.mxu0 0
    %855 = vmatpush1.bf16.msra.mxu0 0
    %856 = vmatprep.subr.bf16.mxu0 0
    %857 = vmatpush1.bf16.msra.mxu0 0
    %858 = vmatprep.subr.bf16.mxu0 0
    %859 = vmatpush1.bf16.msra.mxu0 0
    %860 = vmatprep.subr.bf16.mxu0 0
    %861 = vmatpush1.bf16.msra.mxu0 0
    %862 = vmatprep.subr.bf16.mxu0 0
    %863 = vmatpush1.bf16.msra.mxu0 0
    %864 = vmatprep.subr.bf16.mxu0 0
    %865 = vmatpush1.bf16.msra.mxu0 0
    %866 = vmatprep.subr.bf16.mxu0 0
    %867 = vmatpush1.bf16.msra.mxu0 0
    %868 = vmatprep.subr.bf16.mxu0 0
    %869 = vmatpush1.bf16.msra.mxu0 0
    %870 = vmatprep.subr.bf16.mxu0 0
    %871 = vmatpush1.bf16.msra.mxu0 0
    %872 = vmatprep.subr.bf16.mxu0 0
    %873 = vmatpush1.bf16.msra.mxu0 0
    %874 = vmatprep.subr.bf16.mxu0 0
    %875 = vmatpush1.bf16.msra.mxu0 0
    %876 = vmatprep.subr.bf16.mxu0 0
    %877 = vmatpush1.bf16.msra.mxu0 0
    %878 = vmatprep.subr.bf16.mxu0 0
    %879 = vmatpush1.bf16.msra.mxu0 0
    %880 = vmatprep.mubr.bf16.mxu0 0
    %881 = vmatmul.mubr.bf16.gmra.mrb[0].mxu0 %v840
    %v882 = vpop.f32.mrb[0].mxu0
    %v883 = vadd.f32 0.0, %v882
    %v884 = vpop.f32.mrb[0].mxu0
    %v885 = vadd.f32 0.0, %v884
    %v886 = vpop.f32.mrb[0].mxu0
    %v887 = vpop.f32.mrb[0].mxu0
    %888 = vdwg.mxu0
    %v889 = vadd.f32 %v827, %v883
    %v890 = vadd.f32 %v828, %v885
    %891 = vrot.lane.b32.xlu0 %v754, 2
    %v892 = vpop.permute.xlu0 %891
    %893 = vrot.lane.b32.xlu0 %v765, 2
    %v894 = vpop.permute.xlu0 %893
    %v895 = vsel %vm272, %v892, %v894
    %v896 = vsel %vm272, %v894, %v892
    %v897 = vsel %vm277, %v896, 0.0
    %v898 = vsel %vm278, %v895, 0.0
    %v899 = vpack.c.bf16 %v897, %v897
    %v900 = vpack.c.bf16 %v898, %v898
    %v902 = vsel %vm166, %v757, 0
    %v905 = vsel %vm170, %v899, 0
    %v908 = vsel %vm170, %v900, 0
    %910 = vmatprep.subr.bf16.mxu0 %v908
    %911 = vmatpush1.bf16.msra.mxu0 %v905
    %912 = vmatprep.subr.bf16.mxu0 0
    %913 = vmatpush1.bf16.msra.mxu0 0
    %914 = vmatprep.subr.bf16.mxu0 0
    %915 = vmatpush1.bf16.msra.mxu0 0
    %916 = vmatprep.subr.bf16.mxu0 0
    %917 = vmatpush1.bf16.msra.mxu0 0
    %918 = vmatprep.subr.bf16.mxu0 0
    %919 = vmatpush1.bf16.msra.mxu0 0
    %920 = vmatprep.subr.bf16.mxu0 0
    %921 = vmatpush1.bf16.msra.mxu0 0
    %922 = vmatprep.subr.bf16.mxu0 0
    %923 = vmatpush1.bf16.msra.mxu0 0
    %924 = vmatprep.subr.bf16.mxu0 0
    %925 = vmatpush1.bf16.msra.mxu0 0
    %926 = vmatprep.subr.bf16.mxu0 0
    %927 = vmatpush1.bf16.msra.mxu0 0
    %928 = vmatprep.subr.bf16.mxu0 0
    %929 = vmatpush1.bf16.msra.mxu0 0
    %930 = vmatprep.subr.bf16.mxu0 0
    %931 = vmatpush1.bf16.msra.mxu0 0
    %932 = vmatprep.subr.bf16.mxu0 0
    %933 = vmatpush1.bf16.msra.mxu0 0
    %934 = vmatprep.subr.bf16.mxu0 0
    %935 = vmatpush1.bf16.msra.mxu0 0
    %936 = vmatprep.subr.bf16.mxu0 0
    %937 = vmatpush1.bf16.msra.mxu0 0
    %938 = vmatprep.subr.bf16.mxu0 0
    %939 = vmatpush1.bf16.msra.mxu0 0
    %940 = vmatprep.subr.bf16.mxu0 0
    %941 = vmatpush1.bf16.msra.mxu0 0
    %942 = vmatprep.mubr.bf16.mxu0 0
    %943 = vmatmul.mubr.bf16.gmra.mrb[0].mxu0 %v902
    %v944 = vpop.f32.mrb[0].mxu0
    %v945 = vadd.f32 0.0, %v944
    %v946 = vpop.f32.mrb[0].mxu0
    %v947 = vadd.f32 0.0, %v946
    %v948 = vpop.f32.mrb[0].mxu0
    %v949 = vpop.f32.mrb[0].mxu0
    %950 = vdwg.mxu0
    %v951 = vadd.f32 %v889, %v945
    %v952 = vadd.f32 %v890, %v947
    %953 = vrot.lane.b32.xlu0 %v754, 1
    %v954 = vpop.permute.xlu0 %953
    %955 = vrot.lane.b32.xlu0 %v765, 1
    %v956 = vpop.permute.xlu0 %955
    %v957 = vsel %vm339, %v954, %v956
    %v958 = vsel %vm339, %v956, %v954
    %v959 = vsel %vm344, %v958, 0.0
    %v960 = vsel %vm345, %v957, 0.0
    %v961 = vpack.c.bf16 %v959, %v959
    %v962 = vpack.c.bf16 %v960, %v960
    %v964 = vsel %vm166, %v758, 0
    %v967 = vsel %vm170, %v961, 0
    %v970 = vsel %vm170, %v962, 0
    %972 = vmatprep.subr.bf16.mxu0 %v970
    %973 = vmatpush1.bf16.msra.mxu0 %v967
    %974 = vmatprep.subr.bf16.mxu0 0
    %975 = vmatpush1.bf16.msra.mxu0 0
    %976 = vmatprep.subr.bf16.mxu0 0
    %977 = vmatpush1.bf16.msra.mxu0 0
    %978 = vmatprep.subr.bf16.mxu0 0
    %979 = vmatpush1.bf16.msra.mxu0 0
    %980 = vmatprep.subr.bf16.mxu0 0
    %981 = vmatpush1.bf16.msra.mxu0 0
    %982 = vmatprep.subr.bf16.mxu0 0
    %983 = vmatpush1.bf16.msra.mxu0 0
    %984 = vmatprep.subr.bf16.mxu0 0
    %985 = vmatpush1.bf16.msra.mxu0 0
    %986 = vmatprep.subr.bf16.mxu0 0
    %987 = vmatpush1.bf16.msra.mxu0 0
    %988 = vmatprep.subr.bf16.mxu0 0
    %989 = vmatpush1.bf16.msra.mxu0 0
    %990 = vmatprep.subr.bf16.mxu0 0
    %991 = vmatpush1.bf16.msra.mxu0 0
    %992 = vmatprep.subr.bf16.mxu0 0
    %993 = vmatpush1.bf16.msra.mxu0 0
    %994 = vmatprep.subr.bf16.mxu0 0
    %995 = vmatpush1.bf16.msra.mxu0 0
    %996 = vmatprep.subr.bf16.mxu0 0
    %997 = vmatpush1.bf16.msra.mxu0 0
    %998 = vmatprep.subr.bf16.mxu0 0
    %999 = vmatpush1.bf16.msra.mxu0 0
    %1000 = vmatprep.subr.bf16.mxu0 0
    %1001 = vmatpush1.bf16.msra.mxu0 0
    %1002 = vmatprep.subr.bf16.mxu0 0
    %1003 = vmatpush1.bf16.msra.mxu0 0
    %1004 = vmatprep.mubr.bf16.mxu0 0
    %1005 = vmatmul.mubr.bf16.gmra.mrb[0].mxu0 %v964
    %v1006 = vpop.f32.mrb[0].mxu0
    %v1007 = vadd.f32 0.0, %v1006
    %v1008 = vpop.f32.mrb[0].mxu0
    %v1009 = vadd.f32 0.0, %v1008
    %v1010 = vpop.f32.mrb[0].mxu0
    %v1011 = vpop.f32.mrb[0].mxu0
    %1012 = vdwg.mxu0
    %v1013 = vadd.f32 %v951, %v1007
    %v1014 = vadd.f32 %v952, %v1009
    %v1015 = vpack.c.bf16 %v754, %v754
    %v1016 = vpack.c.bf16 %v765, %v765
    %v1018 = vsel %vm166, %v759, 0
    %v1021 = vsel %vm170, %v1015, 0
    %v1024 = vsel %vm170, %v1016, 0
    %1026 = vmatprep.subr.bf16.mxu0 %v1024
    %1027 = vmatpush1.bf16.msra.mxu0 %v1021
    %1028 = vmatprep.subr.bf16.mxu0 0
    %1029 = vmatpush1.bf16.msra.mxu0 0
    %1030 = vmatprep.subr.bf16.mxu0 0
    %1031 = vmatpush1.bf16.msra.mxu0 0
    %1032 = vmatprep.subr.bf16.mxu0 0
    %1033 = vmatpush1.bf16.msra.mxu0 0
    %1034 = vmatprep.subr.bf16.mxu0 0
    %1035 = vmatpush1.bf16.msra.mxu0 0
    %1036 = vmatprep.subr.bf16.mxu0 0
    %1037 = vmatpush1.bf16.msra.mxu0 0
    %1038 = vmatprep.subr.bf16.mxu0 0
    %1039 = vmatpush1.bf16.msra.mxu0 0
    %1040 = vmatprep.subr.bf16.mxu0 0
    %1041 = vmatpush1.bf16.msra.mxu0 0
    %1042 = vmatprep.subr.bf16.mxu0 0
    %1043 = vmatpush1.bf16.msra.mxu0 0
    %1044 = vmatprep.subr.bf16.mxu0 0
    %1045 = vmatpush1.bf16.msra.mxu0 0
    %1046 = vmatprep.subr.bf16.mxu0 0
    %1047 = vmatpush1.bf16.msra.mxu0 0
    %1048 = vmatprep.subr.bf16.mxu0 0
    %1049 = vmatpush1.bf16.msra.mxu0 0
    %1050 = vmatprep.subr.bf16.mxu0 0
    %1051 = vmatpush1.bf16.msra.mxu0 0
    %1052 = vmatprep.subr.bf16.mxu0 0
    %1053 = vmatpush1.bf16.msra.mxu0 0
    %1054 = vmatprep.subr.bf16.mxu0 0
    %1055 = vmatpush1.bf16.msra.mxu0 0
    %1056 = vmatprep.subr.bf16.mxu0 0
    %1057 = vmatpush1.bf16.msra.mxu0 0
    %1058 = vmatprep.mubr.bf16.mxu0 0
    %1059 = vmatmul.mubr.bf16.gmra.mrb[0].mxu0 %v1018
    %v1060 = vpop.f32.mrb[0].mxu0
    %v1061 = vadd.f32 0.0, %v1060
    %v1062 = vpop.f32.mrb[0].mxu0
    %v1063 = vadd.f32 0.0, %v1062
    %v1064 = vpop.f32.mrb[0].mxu0
    %v1065 = vpop.f32.mrb[0].mxu0
    %1066 = vdwg.mxu0
    %v1067 = vadd.f32 %v1013, %v1061
    %v1068 = vadd.f32 %v1014, %v1063
    %1069 = vrot.lane.b32.xlu0 %v754, 127
    %v1070 = vpop.permute.xlu0 %1069
    %1071 = vrot.lane.b32.xlu0 %v765, 127
    %v1072 = vpop.permute.xlu0 %1071
    %v1073 = vsel %vm460, %v1070, %v1072
    %v1074 = vsel %vm460, %v1072, %v1070
    %v1075 = vsel %vm465, %v1073, 0.0
    %v1076 = vsel %vm466, %v1074, 0.0
    %v1077 = vpack.c.bf16 %v1075, %v1075
    %v1078 = vpack.c.bf16 %v1076, %v1076
    %v1080 = vsel %vm166, %v760, 0
    %v1083 = vsel %vm170, %v1077, 0
    %v1086 = vsel %vm170, %v1078, 0
    %1088 = vmatprep.subr.bf16.mxu0 %v1086
    %1089 = vmatpush1.bf16.msra.mxu0 %v1083
    %1090 = vmatprep.subr.bf16.mxu0 0
    %1091 = vmatpush1.bf16.msra.mxu0 0
    %1092 = vmatprep.subr.bf16.mxu0 0
    %1093 = vmatpush1.bf16.msra.mxu0 0
    %1094 = vmatprep.subr.bf16.mxu0 0
    %1095 = vmatpush1.bf16.msra.mxu0 0
    %1096 = vmatprep.subr.bf16.mxu0 0
    %1097 = vmatpush1.bf16.msra.mxu0 0
    %1098 = vmatprep.subr.bf16.mxu0 0
    %1099 = vmatpush1.bf16.msra.mxu0 0
    %1100 = vmatprep.subr.bf16.mxu0 0
    %1101 = vmatpush1.bf16.msra.mxu0 0
    %1102 = vmatprep.subr.bf16.mxu0 0
    %1103 = vmatpush1.bf16.msra.mxu0 0
    %1104 = vmatprep.subr.bf16.mxu0 0
    %1105 = vmatpush1.bf16.msra.mxu0 0
    %1106 = vmatprep.subr.bf16.mxu0 0
    %1107 = vmatpush1.bf16.msra.mxu0 0
    %1108 = vmatprep.subr.bf16.mxu0 0
    %1109 = vmatpush1.bf16.msra.mxu0 0
    %1110 = vmatprep.subr.bf16.mxu0 0
    %1111 = vmatpush1.bf16.msra.mxu0 0
    %1112 = vmatprep.subr.bf16.mxu0 0
    %1113 = vmatpush1.bf16.msra.mxu0 0
    %1114 = vmatprep.subr.bf16.mxu0 0
    %1115 = vmatpush1.bf16.msra.mxu0 0
    %1116 = vmatprep.subr.bf16.mxu0 0
    %1117 = vmatpush1.bf16.msra.mxu0 0
    %1118 = vmatprep.subr.bf16.mxu0 0
    %1119 = vmatpush1.bf16.msra.mxu0 0
    %1120 = vmatprep.mubr.bf16.mxu0 0
    %1121 = vmatmul.mubr.bf16.gmra.mrb[0].mxu0 %v1080
    %v1122 = vpop.f32.mrb[0].mxu0
    %v1123 = vadd.f32 0.0, %v1122
    %v1124 = vpop.f32.mrb[0].mxu0
    %v1125 = vadd.f32 0.0, %v1124
    %v1126 = vpop.f32.mrb[0].mxu0
    %v1127 = vpop.f32.mrb[0].mxu0
    %1128 = vdwg.mxu0
    %v1129 = vadd.f32 %v1067, %v1123
    %v1130 = vadd.f32 %v1068, %v1125
    %1131 = vrot.lane.b32.xlu0 %v754, 126
    %v1132 = vpop.permute.xlu0 %1131
    %1133 = vrot.lane.b32.xlu0 %v765, 126
    %v1134 = vpop.permute.xlu0 %1133
    %v1135 = vsel %vm527, %v1132, %v1134
    %v1136 = vsel %vm527, %v1134, %v1132
    %v1137 = vsel %vm532, %v1135, 0.0
    %v1138 = vsel %vm533, %v1136, 0.0
    %v1139 = vpack.c.bf16 %v1137, %v1137
    %v1140 = vpack.c.bf16 %v1138, %v1138
    %v1142 = vsel %vm166, %v761, 0
    %v1145 = vsel %vm170, %v1139, 0
    %v1148 = vsel %vm170, %v1140, 0
    %1150 = vmatprep.subr.bf16.mxu0 %v1148
    %1151 = vmatpush1.bf16.msra.mxu0 %v1145
    %1152 = vmatprep.subr.bf16.mxu0 0
    %1153 = vmatpush1.bf16.msra.mxu0 0
    %1154 = vmatprep.subr.bf16.mxu0 0
    %1155 = vmatpush1.bf16.msra.mxu0 0
    %1156 = vmatprep.subr.bf16.mxu0 0
    %1157 = vmatpush1.bf16.msra.mxu0 0
    %1158 = vmatprep.subr.bf16.mxu0 0
    %1159 = vmatpush1.bf16.msra.mxu0 0
    %1160 = vmatprep.subr.bf16.mxu0 0
    %1161 = vmatpush1.bf16.msra.mxu0 0
    %1162 = vmatprep.subr.bf16.mxu0 0
    %1163 = vmatpush1.bf16.msra.mxu0 0
    %1164 = vmatprep.subr.bf16.mxu0 0
    %1165 = vmatpush1.bf16.msra.mxu0 0
    %1166 = vmatprep.subr.bf16.mxu0 0
    %1167 = vmatpush1.bf16.msra.mxu0 0
    %1168 = vmatprep.subr.bf16.mxu0 0
    %1169 = vmatpush1.bf16.msra.mxu0 0
    %1170 = vmatprep.subr.bf16.mxu0 0
    %1171 = vmatpush1.bf16.msra.mxu0 0
    %1172 = vmatprep.subr.bf16.mxu0 0
    %1173 = vmatpush1.bf16.msra.mxu0 0
    %1174 = vmatprep.subr.bf16.mxu0 0
    %1175 = vmatpush1.bf16.msra.mxu0 0
    %1176 = vmatprep.subr.bf16.mxu0 0
    %1177 = vmatpush1.bf16.msra.mxu0 0
    %1178 = vmatprep.subr.bf16.mxu0 0
    %1179 = vmatpush1.bf16.msra.mxu0 0
    %1180 = vmatprep.subr.bf16.mxu0 0
    %1181 = vmatpush1.bf16.msra.mxu0 0
    %1182 = vmatprep.mubr.bf16.mxu0 0
    %1183 = vmatmul.mubr.bf16.gmra.mrb[0].mxu0 %v1142
    %v1184 = vpop.f32.mrb[0].mxu0
    %v1185 = vadd.f32 0.0, %v1184
    %v1186 = vpop.f32.mrb[0].mxu0
    %v1187 = vadd.f32 0.0, %v1186
    %v1188 = vpop.f32.mrb[0].mxu0
    %v1189 = vpop.f32.mrb[0].mxu0
    %1190 = vdwg.mxu0
    %v1191 = vadd.f32 %v1129, %v1185
    %v1192 = vadd.f32 %v1130, %v1187
    %1193 = vrot.lane.b32.xlu0 %v754, 125
    %v1194 = vpop.permute.xlu0 %1193
    %1195 = vrot.lane.b32.xlu0 %v765, 125
    %v1196 = vpop.permute.xlu0 %1195
    %v1197 = vsel %vm594, %v1194, %v1196
    %v1198 = vsel %vm594, %v1196, %v1194
    %v1199 = vsel %vm599, %v1197, 0.0
    %v1200 = vsel %vm600, %v1198, 0.0
    %v1201 = vpack.c.bf16 %v1199, %v1199
    %v1202 = vpack.c.bf16 %v1200, %v1200
    %v1204 = vsel %vm166, %v762, 0
    %v1207 = vsel %vm170, %v1201, 0
    %v1210 = vsel %vm170, %v1202, 0
    %1212 = vmatprep.subr.bf16.mxu0 %v1210
    %1213 = vmatpush1.bf16.msra.mxu0 %v1207
    %1214 = vmatprep.subr.bf16.mxu0 0
    %1215 = vmatpush1.bf16.msra.mxu0 0
    %1216 = vmatprep.subr.bf16.mxu0 0
    %1217 = vmatpush1.bf16.msra.mxu0 0
    %1218 = vmatprep.subr.bf16.mxu0 0
    %1219 = vmatpush1.bf16.msra.mxu0 0
    %1220 = vmatprep.subr.bf16.mxu0 0
    %1221 = vmatpush1.bf16.msra.mxu0 0
    %1222 = vmatprep.subr.bf16.mxu0 0
    %1223 = vmatpush1.bf16.msra.mxu0 0
    %1224 = vmatprep.subr.bf16.mxu0 0
    %1225 = vmatpush1.bf16.msra.mxu0 0
    %1226 = vmatprep.subr.bf16.mxu0 0
    %1227 = vmatpush1.bf16.msra.mxu0 0
    %1228 = vmatprep.subr.bf16.mxu0 0
    %1229 = vmatpush1.bf16.msra.mxu0 0
    %1230 = vmatprep.subr.bf16.mxu0 0
    %1231 = vmatpush1.bf16.msra.mxu0 0
    %1232 = vmatprep.subr.bf16.mxu0 0
    %1233 = vmatpush1.bf16.msra.mxu0 0
    %1234 = vmatprep.subr.bf16.mxu0 0
    %1235 = vmatpush1.bf16.msra.mxu0 0
    %1236 = vmatprep.subr.bf16.mxu0 0
    %1237 = vmatpush1.bf16.msra.mxu0 0
    %1238 = vmatprep.subr.bf16.mxu0 0
    %1239 = vmatpush1.bf16.msra.mxu0 0
    %1240 = vmatprep.subr.bf16.mxu0 0
    %1241 = vmatpush1.bf16.msra.mxu0 0
    %1242 = vmatprep.subr.bf16.mxu0 0
    %1243 = vmatpush1.bf16.msra.mxu0 0
    %1244 = vmatprep.mubr.bf16.mxu0 0
    %1245 = vmatmul.mubr.bf16.gmra.mrb[0].mxu0 %v1204
    %v1246 = vpop.f32.mrb[0].mxu0
    %v1247 = vadd.f32 0.0, %v1246
    %v1248 = vpop.f32.mrb[0].mxu0
    %v1249 = vadd.f32 0.0, %v1248
    %v1250 = vpop.f32.mrb[0].mxu0
    %v1251 = vpop.f32.mrb[0].mxu0
    %1252 = vdwg.mxu0
    %v1253 = vadd.f32 %v1191, %v1247
    %v1254 = vadd.f32 %v1192, %v1249
    %1255 = vrot.lane.b32.xlu0 %v754, 124
    %v1256 = vpop.permute.xlu0 %1255
    %1257 = vrot.lane.b32.xlu0 %v765, 124
    %v1258 = vpop.permute.xlu0 %1257
    %v1259 = vsel %vm661, %v1256, %v1258
    %v1260 = vsel %vm661, %v1258, %v1256
    %v1261 = vsel %vm666, %v1259, 0.0
    %v1262 = vsel %vm667, %v1260, 0.0
    %v1263 = vpack.c.bf16 %v1261, %v1261
    %v1264 = vpack.c.bf16 %v1262, %v1262
    %v1266 = vsel %vm166, %v763, 0
    %v1269 = vsel %vm170, %v1263, 0
    %v1272 = vsel %vm170, %v1264, 0
    %1274 = vmatprep.subr.bf16.mxu0 %v1272
    %1275 = vmatpush1.bf16.msra.mxu0 %v1269
    %1276 = vmatprep.subr.bf16.mxu0 0
    %1277 = vmatpush1.bf16.msra.mxu0 0
    %1278 = vmatprep.subr.bf16.mxu0 0
    %1279 = vmatpush1.bf16.msra.mxu0 0
    %1280 = vmatprep.subr.bf16.mxu0 0
    %1281 = vmatpush1.bf16.msra.mxu0 0
    %1282 = vmatprep.subr.bf16.mxu0 0
    %1283 = vmatpush1.bf16.msra.mxu0 0
    %1284 = vmatprep.subr.bf16.mxu0 0
    %1285 = vmatpush1.bf16.msra.mxu0 0
    %1286 = vmatprep.subr.bf16.mxu0 0
    %1287 = vmatpush1.bf16.msra.mxu0 0
    %1288 = vmatprep.subr.bf16.mxu0 0
    %1289 = vmatpush1.bf16.msra.mxu0 0
    %1290 = vmatprep.subr.bf16.mxu0 0
    %1291 = vmatpush1.bf16.msra.mxu0 0
    %1292 = vmatprep.subr.bf16.mxu0 0
    %1293 = vmatpush1.bf16.msra.mxu0 0
    %1294 = vmatprep.subr.bf16.mxu0 0
    %1295 = vmatpush1.bf16.msra.mxu0 0
    %1296 = vmatprep.subr.bf16.mxu0 0
    %1297 = vmatpush1.bf16.msra.mxu0 0
    %1298 = vmatprep.subr.bf16.mxu0 0
    %1299 = vmatpush1.bf16.msra.mxu0 0
    %1300 = vmatprep.subr.bf16.mxu0 0
    %1301 = vmatpush1.bf16.msra.mxu0 0
    %1302 = vmatprep.subr.bf16.mxu0 0
    %1303 = vmatpush1.bf16.msra.mxu0 0
    %1304 = vmatprep.subr.bf16.mxu0 0
    %1305 = vmatpush1.bf16.msra.mxu0 0
    %1306 = vmatprep.mubr.bf16.mxu0 0
    %1307 = vmatmul.mubr.bf16.gmra.mrb[0].mxu0 %v1266
    %v1308 = vpop.f32.mrb[0].mxu0
    %v1309 = vadd.f32 0.0, %v1308
    %v1310 = vpop.f32.mrb[0].mxu0
    %v1311 = vadd.f32 0.0, %v1310
    %v1312 = vpop.f32.mrb[0].mxu0
    %v1313 = vpop.f32.mrb[0].mxu0
    %1314 = vdwg.mxu0
    %v1315 = vadd.f32 %v1253, %v1309
    %v1316 = vadd.f32 %v1254, %v1311
    %v1317 = vld [vmem:[%s2] sm:$0xf]
    %v1318 = vld [vmem:[%s8] sm:$0xf]
    %v1319 = vunpack.c.l.bf16 %v1317
    %1321 = vset.pattern.permute.xlu0 0
    %1322 = vperm.xlu0 %1321, %v1318
    %v1323 = vpop.permute.xlu0 %1322
    %v1325 = vunpack.c.l.s4 839922192
    %v1326 = vunpack.c.0.s8 %v1325
    %v1327 = vlaneseq
    %v1328 = vshrl.u32 %v1327, 7
    %v1329 = vsub.s32 %v1326, %v1328
    %v1330 = vrot.slane %v1323, %v1329
    %v1332 = vmul.f32 %v1319, %v1330
    %v1333 = vld [vmem:[%s11] sm:$0xf]
    %1335 = vset.pattern.permute.xlu0 0
    %1336 = vperm.xlu0 %1335, %v1333
    %v1337 = vpop.permute.xlu0 %1336
    %v1339 = vunpack.c.l.s4 839922192
    %v1340 = vunpack.c.0.s8 %v1339
    %v1341 = vlaneseq
    %v1342 = vshrl.u32 %v1341, 7
    %v1343 = vsub.s32 %v1340, %v1342
    %v1344 = vrot.slane %v1337, %v1343
    %v1346 = vadd.f32 %v1332, %v1344
    %v1347 = vmax.f32 %v1346, 0.0
    %v1348 = vld [vmem:[%s5] sm:$0x3]
    %v1349 = vld [vmem:[%s5 + $0x2] sm:$0x3]
    %v1350 = vld [vmem:[%s5 + $0x4] sm:$0x3]
    %v1351 = vld [vmem:[%s5 + $0x6] sm:$0x3]
    %v1352 = vld [vmem:[%s5 + $0x8] sm:$0x3]
    %v1353 = vld [vmem:[%s5 + $0xa] sm:$0x3]
    %v1354 = vld [vmem:[%s5 + $0xc] sm:$0x3]
    %v1355 = vld [vmem:[%s5 + $0xe] sm:$0x3]
    %v1356 = vld [vmem:[%s5 + $0x10] sm:$0x3]
    %v1358 = vcombine.high %v1347, %v1347
    %1360 = vrot.lane.b32.xlu0 %v1347, 4
    %v1361 = vpop.permute.xlu0 %1360
    %1362 = vrot.lane.b32.xlu0 %v1358, 4
    %v1363 = vpop.permute.xlu0 %1362
    %v1364 = vsel %vm140, %v1361, %v1363
    %v1365 = vsel %vm140, %v1363, %v1361
    %v1366 = vsel %vm145, %v1365, 0.0
    %v1367 = vsel %vm146, %v1364, 0.0
    %v1368 = vpack.c.bf16 %v1366, %v1366
    %v1369 = vpack.c.bf16 %v1367, %v1367
    %v1371 = vsel %vm166, %v1348, 0
    %v1374 = vsel %vm170, %v1368, 0
    %v1377 = vsel %vm170, %v1369, 0
    %1379 = vmatprep.subr.bf16.mxu0 %v1377
    %1380 = vmatpush1.bf16.msra.mxu0 %v1374
    %1381 = vmatprep.subr.bf16.mxu0 0
    %1382 = vmatpush1.bf16.msra.mxu0 0
    %1383 = vmatprep.subr.bf16.mxu0 0
    %1384 = vmatpush1.bf16.msra.mxu0 0
    %1385 = vmatprep.subr.bf16.mxu0 0
    %1386 = vmatpush1.bf16.msra.mxu0 0
    %1387 = vmatprep.subr.bf16.mxu0 0
    %1388 = vmatpush1.bf16.msra.mxu0 0
    %1389 = vmatprep.subr.bf16.mxu0 0
    %1390 = vmatpush1.bf16.msra.mxu0 0
    %1391 = vmatprep.subr.bf16.mxu0 0
    %1392 = vmatpush1.bf16.msra.mxu0 0
    %1393 = vmatprep.subr.bf16.mxu0 0
    %1394 = vmatpush1.bf16.msra.mxu0 0
    %1395 = vmatprep.subr.bf16.mxu0 0
    %1396 = vmatpush1.bf16.msra.mxu0 0
    %1397 = vmatprep.subr.bf16.mxu0 0
    %1398 = vmatpush1.bf16.msra.mxu0 0
    %1399 = vmatprep.subr.bf16.mxu0 0
    %1400 = vmatpush1.bf16.msra.mxu0 0
    %1401 = vmatprep.subr.bf16.mxu0 0
    %1402 = vmatpush1.bf16.msra.mxu0 0
    %1403 = vmatprep.subr.bf16.mxu0 0
    %1404 = vmatpush1.bf16.msra.mxu0 0
    %1405 = vmatprep.subr.bf16.mxu0 0
    %1406 = vmatpush1.bf16.msra.mxu0 0
    %1407 = vmatprep.subr.bf16.mxu0 0
    %1408 = vmatpush1.bf16.msra.mxu0 0
    %1409 = vmatprep.subr.bf16.mxu0 0
    %1410 = vmatpush1.bf16.msra.mxu0 0
    %1411 = vmatprep.mubr.bf16.mxu0 0
    %1412 = vmatmul.mubr.bf16.gmra.mrb[0].mxu0 %v1371
    %v1413 = vpop.f32.mrb[0].mxu0
    %v1414 = vadd.f32 0.0, %v1413
    %v1415 = vpop.f32.mrb[0].mxu0
    %v1416 = vadd.f32 0.0, %v1415
    %v1417 = vpop.f32.mrb[0].mxu0
    %v1418 = vpop.f32.mrb[0].mxu0
    %1419 = vdwg.mxu0
    %v1420 = vadd.f32 %v1315, %v1414
    %v1421 = vadd.f32 %v1316, %v1416
    %1422 = vrot.lane.b32.xlu0 %v1347, 3
    %v1423 = vpop.permute.xlu0 %1422
    %1424 = vrot.lane.b32.xlu0 %v1358, 3
    %v1425 = vpop.permute.xlu0 %1424
    %v1426 = vsel %vm155, %v1423, %v1425
    %v1427 = vsel %vm155, %v1425, %v1423
    %v1428 = vsel %vm160, %v1427, 0.0
    %v1429 = vsel %vm161, %v1426, 0.0
    %v1430 = vpack.c.bf16 %v1428, %v1428
    %v1431 = vpack.c.bf16 %v1429, %v1429
    %v1433 = vsel %vm166, %v1349, 0
    %v1436 = vsel %vm170, %v1430, 0
    %v1439 = vsel %vm170, %v1431, 0
    %1441 = vmatprep.subr.bf16.mxu0 %v1439
    %1442 = vmatpush1.bf16.msra.mxu0 %v1436
    %1443 = vmatprep.subr.bf16.mxu0 0
    %1444 = vmatpush1.bf16.msra.mxu0 0
    %1445 = vmatprep.subr.bf16.mxu0 0
    %1446 = vmatpush1.bf16.msra.mxu0 0
    %1447 = vmatprep.subr.bf16.mxu0 0
    %1448 = vmatpush1.bf16.msra.mxu0 0
    %1449 = vmatprep.subr.bf16.mxu0 0
    %1450 = vmatpush1.bf16.msra.mxu0 0
    %1451 = vmatprep.subr.bf16.mxu0 0
    %1452 = vmatpush1.bf16.msra.mxu0 0
    %1453 = vmatprep.subr.bf16.mxu0 0
    %1454 = vmatpush1.bf16.msra.mxu0 0
    %1455 = vmatprep.subr.bf16.mxu0 0
    %1456 = vmatpush1.bf16.msra.mxu0 0
    %1457 = vmatprep.subr.bf16.mxu0 0
    %1458 = vmatpush1.bf16.msra.mxu0 0
    %1459 = vmatprep.subr.bf16.mxu0 0
    %1460 = vmatpush1.bf16.msra.mxu0 0
    %1461 = vmatprep.subr.bf16.mxu0 0
    %1462 = vmatpush1.bf16.msra.mxu0 0
    %1463 = vmatprep.subr.bf16.mxu0 0
    %1464 = vmatpush1.bf16.msra.mxu0 0
    %1465 = vmatprep.subr.bf16.mxu0 0
    %1466 = vmatpush1.bf16.msra.mxu0 0
    %1467 = vmatprep.subr.bf16.mxu0 0
    %1468 = vmatpush1.bf16.msra.mxu0 0
    %1469 = vmatprep.subr.bf16.mxu0 0
    %1470 = vmatpush1.bf16.msra.mxu0 0
    %1471 = vmatprep.subr.bf16.mxu0 0
    %1472 = vmatpush1.bf16.msra.mxu0 0
    %1473 = vmatprep.mubr.bf16.mxu0 0
    %1474 = vmatmul.mubr.bf16.gmra.mrb[0].mxu0 %v1433
    %v1475 = vpop.f32.mrb[0].mxu0
    %v1476 = vadd.f32 0.0, %v1475
    %v1477 = vpop.f32.mrb[0].mxu0
    %v1478 = vadd.f32 0.0, %v1477
    %v1479 = vpop.f32.mrb[0].mxu0
    %v1480 = vpop.f32.mrb[0].mxu0
    %1481 = vdwg.mxu0
    %v1482 = vadd.f32 %v1420, %v1476
    %v1483 = vadd.f32 %v1421, %v1478
    %1484 = vrot.lane.b32.xlu0 %v1347, 2
    %v1485 = vpop.permute.xlu0 %1484
    %1486 = vrot.lane.b32.xlu0 %v1358, 2
    %v1487 = vpop.permute.xlu0 %1486
    %v1488 = vsel %vm272, %v1485, %v1487
    %v1489 = vsel %vm272, %v1487, %v1485
    %v1490 = vsel %vm277, %v1489, 0.0
    %v1491 = vsel %vm278, %v1488, 0.0
    %v1492 = vpack.c.bf16 %v1490, %v1490
    %v1493 = vpack.c.bf16 %v1491, %v1491
    %v1495 = vsel %vm166, %v1350, 0
    %v1498 = vsel %vm170, %v1492, 0
    %v1501 = vsel %vm170, %v1493, 0
    %1503 = vmatprep.subr.bf16.mxu0 %v1501
    %1504 = vmatpush1.bf16.msra.mxu0 %v1498
    %1505 = vmatprep.subr.bf16.mxu0 0
    %1506 = vmatpush1.bf16.msra.mxu0 0
    %1507 = vmatprep.subr.bf16.mxu0 0
    %1508 = vmatpush1.bf16.msra.mxu0 0
    %1509 = vmatprep.subr.bf16.mxu0 0
    %1510 = vmatpush1.bf16.msra.mxu0 0
    %1511 = vmatprep.subr.bf16.mxu0 0
    %1512 = vmatpush1.bf16.msra.mxu0 0
    %1513 = vmatprep.subr.bf16.mxu0 0
    %1514 = vmatpush1.bf16.msra.mxu0 0
    %1515 = vmatprep.subr.bf16.mxu0 0
    %1516 = vmatpush1.bf16.msra.mxu0 0
    %1517 = vmatprep.subr.bf16.mxu0 0
    %1518 = vmatpush1.bf16.msra.mxu0 0
    %1519 = vmatprep.subr.bf16.mxu0 0
    %1520 = vmatpush1.bf16.msra.mxu0 0
    %1521 = vmatprep.subr.bf16.mxu0 0
    %1522 = vmatpush1.bf16.msra.mxu0 0
    %1523 = vmatprep.subr.bf16.mxu0 0
    %1524 = vmatpush1.bf16.msra.mxu0 0
    %1525 = vmatprep.subr.bf16.mxu0 0
    %1526 = vmatpush1.bf16.msra.mxu0 0
    %1527 = vmatprep.subr.bf16.mxu0 0
    %1528 = vmatpush1.bf16.msra.mxu0 0
    %1529 = vmatprep.subr.bf16.mxu0 0
    %1530 = vmatpush1.bf16.msra.mxu0 0
    %1531 = vmatprep.subr.bf16.mxu0 0
    %1532 = vmatpush1.bf16.msra.mxu0 0
    %1533 = vmatprep.subr.bf16.mxu0 0
    %1534 = vmatpush1.bf16.msra.mxu0 0
    %1535 = vmatprep.mubr.bf16.mxu0 0
    %1536 = vmatmul.mubr.bf16.gmra.mrb[0].mxu0 %v1495
    %v1537 = vpop.f32.mrb[0].mxu0
    %v1538 = vadd.f32 0.0, %v1537
    %v1539 = vpop.f32.mrb[0].mxu0
    %v1540 = vadd.f32 0.0, %v1539
    %v1541 = vpop.f32.mrb[0].mxu0
    %v1542 = vpop.f32.mrb[0].mxu0
    %1543 = vdwg.mxu0
    %v1544 = vadd.f32 %v1482, %v1538
    %v1545 = vadd.f32 %v1483, %v1540
    %1546 = vrot.lane.b32.xlu0 %v1347, 1
    %v1547 = vpop.permute.xlu0 %1546
    %1548 = vrot.lane.b32.xlu0 %v1358, 1
    %v1549 = vpop.permute.xlu0 %1548
    %v1550 = vsel %vm339, %v1547, %v1549
    %v1551 = vsel %vm339, %v1549, %v1547
    %v1552 = vsel %vm344, %v1551, 0.0
    %v1553 = vsel %vm345, %v1550, 0.0
    %v1554 = vpack.c.bf16 %v1552, %v1552
    %v1555 = vpack.c.bf16 %v1553, %v1553
    %v1557 = vsel %vm166, %v1351, 0
    %v1560 = vsel %vm170, %v1554, 0
    %v1563 = vsel %vm170, %v1555, 0
    %1565 = vmatprep.subr.bf16.mxu0 %v1563
    %1566 = vmatpush1.bf16.msra.mxu0 %v1560
    %1567 = vmatprep.subr.bf16.mxu0 0
    %1568 = vmatpush1.bf16.msra.mxu0 0
    %1569 = vmatprep.subr.bf16.mxu0 0
    %1570 = vmatpush1.bf16.msra.mxu0 0
    %1571 = vmatprep.subr.bf16.mxu0 0
    %1572 = vmatpush1.bf16.msra.mxu0 0
    %1573 = vmatprep.subr.bf16.mxu0 0
    %1574 = vmatpush1.bf16.msra.mxu0 0
    %1575 = vmatprep.subr.bf16.mxu0 0
    %1576 = vmatpush1.bf16.msra.mxu0 0
    %1577 = vmatprep.subr.bf16.mxu0 0
    %1578 = vmatpush1.bf16.msra.mxu0 0
    %1579 = vmatprep.subr.bf16.mxu0 0
    %1580 = vmatpush1.bf16.msra.mxu0 0
    %1581 = vmatprep.subr.bf16.mxu0 0
    %1582 = vmatpush1.bf16.msra.mxu0 0
    %1583 = vmatprep.subr.bf16.mxu0 0
    %1584 = vmatpush1.bf16.msra.mxu0 0
    %1585 = vmatprep.subr.bf16.mxu0 0
    %1586 = vmatpush1.bf16.msra.mxu0 0
    %1587 = vmatprep.subr.bf16.mxu0 0
    %1588 = vmatpush1.bf16.msra.mxu0 0
    %1589 = vmatprep.subr.bf16.mxu0 0
    %1590 = vmatpush1.bf16.msra.mxu0 0
    %1591 = vmatprep.subr.bf16.mxu0 0
    %1592 = vmatpush1.bf16.msra.mxu0 0
    %1593 = vmatprep.subr.bf16.mxu0 0
    %1594 = vmatpush1.bf16.msra.mxu0 0
    %1595 = vmatprep.subr.bf16.mxu0 0
    %1596 = vmatpush1.bf16.msra.mxu0 0
    %1597 = vmatprep.mubr.bf16.mxu0 0
    %1598 = vmatmul.mubr.bf16.gmra.mrb[0].mxu0 %v1557
    %v1599 = vpop.f32.mrb[0].mxu0
    %v1600 = vadd.f32 0.0, %v1599
    %v1601 = vpop.f32.mrb[0].mxu0
    %v1602 = vadd.f32 0.0, %v1601
    %v1603 = vpop.f32.mrb[0].mxu0
    %v1604 = vpop.f32.mrb[0].mxu0
    %1605 = vdwg.mxu0
    %v1606 = vadd.f32 %v1544, %v1600
    %v1607 = vadd.f32 %v1545, %v1602
    %v1608 = vpack.c.bf16 %v1347, %v1347
    %v1609 = vpack.c.bf16 %v1358, %v1358
    %v1611 = vsel %vm166, %v1352, 0
    %v1614 = vsel %vm170, %v1608, 0
    %v1617 = vsel %vm170, %v1609, 0
    %1619 = vmatprep.subr.bf16.mxu0 %v1617
    %1620 = vmatpush1.bf16.msra.mxu0 %v1614
    %1621 = vmatprep.subr.bf16.mxu0 0
    %1622 = vmatpush1.bf16.msra.mxu0 0
    %1623 = vmatprep.subr.bf16.mxu0 0
    %1624 = vmatpush1.bf16.msra.mxu0 0
    %1625 = vmatprep.subr.bf16.mxu0 0
    %1626 = vmatpush1.bf16.msra.mxu0 0
    %1627 = vmatprep.subr.bf16.mxu0 0
    %1628 = vmatpush1.bf16.msra.mxu0 0
    %1629 = vmatprep.subr.bf16.mxu0 0
    %1630 = vmatpush1.bf16.msra.mxu0 0
    %1631 = vmatprep.subr.bf16.mxu0 0
    %1632 = vmatpush1.bf16.msra.mxu0 0
    %1633 = vmatprep.subr.bf16.mxu0 0
    %1634 = vmatpush1.bf16.msra.mxu0 0
    %1635 = vmatprep.subr.bf16.mxu0 0
    %1636 = vmatpush1.bf16.msra.mxu0 0
    %1637 = vmatprep.subr.bf16.mxu0 0
    %1638 = vmatpush1.bf16.msra.mxu0 0
    %1639 = vmatprep.subr.bf16.mxu0 0
    %1640 = vmatpush1.bf16.msra.mxu0 0
    %1641 = vmatprep.subr.bf16.mxu0 0
    %1642 = vmatpush1.bf16.msra.mxu0 0
    %1643 = vmatprep.subr.bf16.mxu0 0
    %1644 = vmatpush1.bf16.msra.mxu0 0
    %1645 = vmatprep.subr.bf16.mxu0 0
    %1646 = vmatpush1.bf16.msra.mxu0 0
    %1647 = vmatprep.subr.bf16.mxu0 0
    %1648 = vmatpush1.bf16.msra.mxu0 0
    %1649 = vmatprep.subr.bf16.mxu0 0
    %1650 = vmatpush1.bf16.msra.mxu0 0
    %1651 = vmatprep.mubr.bf16.mxu0 0
    %1652 = vmatmul.mubr.bf16.gmra.mrb[0].mxu0 %v1611
    %v1653 = vpop.f32.mrb[0].mxu0
    %v1654 = vadd.f32 0.0, %v1653
    %v1655 = vpop.f32.mrb[0].mxu0
    %v1656 = vadd.f32 0.0, %v1655
    %v1657 = vpop.f32.mrb[0].mxu0
    %v1658 = vpop.f32.mrb[0].mxu0
    %1659 = vdwg.mxu0
    %v1660 = vadd.f32 %v1606, %v1654
    %v1661 = vadd.f32 %v1607, %v1656
    %1662 = vrot.lane.b32.xlu0 %v1347, 127
    %v1663 = vpop.permute.xlu0 %1662
    %1664 = vrot.lane.b32.xlu0 %v1358, 127
    %v1665 = vpop.permute.xlu0 %1664
    %v1666 = vsel %vm460, %v1663, %v1665
    %v1667 = vsel %vm460, %v1665, %v1663
    %v1668 = vsel %vm465, %v1666, 0.0
    %v1669 = vsel %vm466, %v1667, 0.0
    %v1670 = vpack.c.bf16 %v1668, %v1668
    %v1671 = vpack.c.bf16 %v1669, %v1669
    %v1673 = vsel %vm166, %v1353, 0
    %v1676 = vsel %vm170, %v1670, 0
    %v1679 = vsel %vm170, %v1671, 0
    %1681 = vmatprep.subr.bf16.mxu0 %v1679
    %1682 = vmatpush1.bf16.msra.mxu0 %v1676
    %1683 = vmatprep.subr.bf16.mxu0 0
    %1684 = vmatpush1.bf16.msra.mxu0 0
    %1685 = vmatprep.subr.bf16.mxu0 0
    %1686 = vmatpush1.bf16.msra.mxu0 0
    %1687 = vmatprep.subr.bf16.mxu0 0
    %1688 = vmatpush1.bf16.msra.mxu0 0
    %1689 = vmatprep.subr.bf16.mxu0 0
    %1690 = vmatpush1.bf16.msra.mxu0 0
    %1691 = vmatprep.subr.bf16.mxu0 0
    %1692 = vmatpush1.bf16.msra.mxu0 0
    %1693 = vmatprep.subr.bf16.mxu0 0
    %1694 = vmatpush1.bf16.msra.mxu0 0
    %1695 = vmatprep.subr.bf16.mxu0 0
    %1696 = vmatpush1.bf16.msra.mxu0 0
    %1697 = vmatprep.subr.bf16.mxu0 0
    %1698 = vmatpush1.bf16.msra.mxu0 0
    %1699 = vmatprep.subr.bf16.mxu0 0
    %1700 = vmatpush1.bf16.msra.mxu0 0
    %1701 = vmatprep.subr.bf16.mxu0 0
    %1702 = vmatpush1.bf16.msra.mxu0 0
    %1703 = vmatprep.subr.bf16.mxu0 0
    %1704 = vmatpush1.bf16.msra.mxu0 0
    %1705 = vmatprep.subr.bf16.mxu0 0
    %1706 = vmatpush1.bf16.msra.mxu0 0
    %1707 = vmatprep.subr.bf16.mxu0 0
    %1708 = vmatpush1.bf16.msra.mxu0 0
    %1709 = vmatprep.subr.bf16.mxu0 0
    %1710 = vmatpush1.bf16.msra.mxu0 0
    %1711 = vmatprep.subr.bf16.mxu0 0
    %1712 = vmatpush1.bf16.msra.mxu0 0
    %1713 = vmatprep.mubr.bf16.mxu0 0
    %1714 = vmatmul.mubr.bf16.gmra.mrb[0].mxu0 %v1673
    %v1715 = vpop.f32.mrb[0].mxu0
    %v1716 = vadd.f32 0.0, %v1715
    %v1717 = vpop.f32.mrb[0].mxu0
    %v1718 = vadd.f32 0.0, %v1717
    %v1719 = vpop.f32.mrb[0].mxu0
    %v1720 = vpop.f32.mrb[0].mxu0
    %1721 = vdwg.mxu0
    %v1722 = vadd.f32 %v1660, %v1716
    %v1723 = vadd.f32 %v1661, %v1718
    %1724 = vrot.lane.b32.xlu0 %v1347, 126
    %v1725 = vpop.permute.xlu0 %1724
    %1726 = vrot.lane.b32.xlu0 %v1358, 126
    %v1727 = vpop.permute.xlu0 %1726
    %v1728 = vsel %vm527, %v1725, %v1727
    %v1729 = vsel %vm527, %v1727, %v1725
    %v1730 = vsel %vm532, %v1728, 0.0
    %v1731 = vsel %vm533, %v1729, 0.0
    %v1732 = vpack.c.bf16 %v1730, %v1730
    %v1733 = vpack.c.bf16 %v1731, %v1731
    %v1735 = vsel %vm166, %v1354, 0
    %v1738 = vsel %vm170, %v1732, 0
    %v1741 = vsel %vm170, %v1733, 0
    %1743 = vmatprep.subr.bf16.mxu0 %v1741
    %1744 = vmatpush1.bf16.msra.mxu0 %v1738
    %1745 = vmatprep.subr.bf16.mxu0 0
    %1746 = vmatpush1.bf16.msra.mxu0 0
    %1747 = vmatprep.subr.bf16.mxu0 0
    %1748 = vmatpush1.bf16.msra.mxu0 0
    %1749 = vmatprep.subr.bf16.mxu0 0
    %1750 = vmatpush1.bf16.msra.mxu0 0
    %1751 = vmatprep.subr.bf16.mxu0 0
    %1752 = vmatpush1.bf16.msra.mxu0 0
    %1753 = vmatprep.subr.bf16.mxu0 0
    %1754 = vmatpush1.bf16.msra.mxu0 0
    %1755 = vmatprep.subr.bf16.mxu0 0
    %1756 = vmatpush1.bf16.msra.mxu0 0
    %1757 = vmatprep.subr.bf16.mxu0 0
    %1758 = vmatpush1.bf16.msra.mxu0 0
    %1759 = vmatprep.subr.bf16.mxu0 0
    %1760 = vmatpush1.bf16.msra.mxu0 0
    %1761 = vmatprep.subr.bf16.mxu0 0
    %1762 = vmatpush1.bf16.msra.mxu0 0
    %1763 = vmatprep.subr.bf16.mxu0 0
    %1764 = vmatpush1.bf16.msra.mxu0 0
    %1765 = vmatprep.subr.bf16.mxu0 0
    %1766 = vmatpush1.bf16.msra.mxu0 0
    %1767 = vmatprep.subr.bf16.mxu0 0
    %1768 = vmatpush1.bf16.msra.mxu0 0
    %1769 = vmatprep.subr.bf16.mxu0 0
    %1770 = vmatpush1.bf16.msra.mxu0 0
    %1771 = vmatprep.subr.bf16.mxu0 0
    %1772 = vmatpush1.bf16.msra.mxu0 0
    %1773 = vmatprep.subr.bf16.mxu0 0
    %1774 = vmatpush1.bf16.msra.mxu0 0
    %1775 = vmatprep.mubr.bf16.mxu0 0
    %1776 = vmatmul.mubr.bf16.gmra.mrb[0].mxu0 %v1735
    %v1777 = vpop.f32.mrb[0].mxu0
    %v1778 = vadd.f32 0.0, %v1777
    %v1779 = vpop.f32.mrb[0].mxu0
    %v1780 = vadd.f32 0.0, %v1779
    %v1781 = vpop.f32.mrb[0].mxu0
    %v1782 = vpop.f32.mrb[0].mxu0
    %1783 = vdwg.mxu0
    %v1784 = vadd.f32 %v1722, %v1778
    %v1785 = vadd.f32 %v1723, %v1780
    %1786 = vrot.lane.b32.xlu0 %v1347, 125
    %v1787 = vpop.permute.xlu0 %1786
    %1788 = vrot.lane.b32.xlu0 %v1358, 125
    %v1789 = vpop.permute.xlu0 %1788
    %v1790 = vsel %vm594, %v1787, %v1789
    %v1791 = vsel %vm594, %v1789, %v1787
    %v1792 = vsel %vm599, %v1790, 0.0
    %v1793 = vsel %vm600, %v1791, 0.0
    %v1794 = vpack.c.bf16 %v1792, %v1792
    %v1795 = vpack.c.bf16 %v1793, %v1793
    %v1797 = vsel %vm166, %v1355, 0
    %v1800 = vsel %vm170, %v1794, 0
    %v1803 = vsel %vm170, %v1795, 0
    %1805 = vmatprep.subr.bf16.mxu0 %v1803
    %1806 = vmatpush1.bf16.msra.mxu0 %v1800
    %1807 = vmatprep.subr.bf16.mxu0 0
    %1808 = vmatpush1.bf16.msra.mxu0 0
    %1809 = vmatprep.subr.bf16.mxu0 0
    %1810 = vmatpush1.bf16.msra.mxu0 0
    %1811 = vmatprep.subr.bf16.mxu0 0
    %1812 = vmatpush1.bf16.msra.mxu0 0
    %1813 = vmatprep.subr.bf16.mxu0 0
    %1814 = vmatpush1.bf16.msra.mxu0 0
    %1815 = vmatprep.subr.bf16.mxu0 0
    %1816 = vmatpush1.bf16.msra.mxu0 0
    %1817 = vmatprep.subr.bf16.mxu0 0
    %1818 = vmatpush1.bf16.msra.mxu0 0
    %1819 = vmatprep.subr.bf16.mxu0 0
    %1820 = vmatpush1.bf16.msra.mxu0 0
    %1821 = vmatprep.subr.bf16.mxu0 0
    %1822 = vmatpush1.bf16.msra.mxu0 0
    %1823 = vmatprep.subr.bf16.mxu0 0
    %1824 = vmatpush1.bf16.msra.mxu0 0
    %1825 = vmatprep.subr.bf16.mxu0 0
    %1826 = vmatpush1.bf16.msra.mxu0 0
    %1827 = vmatprep.subr.bf16.mxu0 0
    %1828 = vmatpush1.bf16.msra.mxu0 0
    %1829 = vmatprep.subr.bf16.mxu0 0
    %1830 = vmatpush1.bf16.msra.mxu0 0
    %1831 = vmatprep.subr.bf16.mxu0 0
    %1832 = vmatpush1.bf16.msra.mxu0 0
    %1833 = vmatprep.subr.bf16.mxu0 0
    %1834 = vmatpush1.bf16.msra.mxu0 0
    %1835 = vmatprep.subr.bf16.mxu0 0
    %1836 = vmatpush1.bf16.msra.mxu0 0
    %1837 = vmatprep.mubr.bf16.mxu0 0
    %1838 = vmatmul.mubr.bf16.gmra.mrb[0].mxu0 %v1797
    %v1839 = vpop.f32.mrb[0].mxu0
    %v1840 = vadd.f32 0.0, %v1839
    %v1841 = vpop.f32.mrb[0].mxu0
    %v1842 = vadd.f32 0.0, %v1841
    %v1843 = vpop.f32.mrb[0].mxu0
    %v1844 = vpop.f32.mrb[0].mxu0
    %1845 = vdwg.mxu0
    %v1846 = vadd.f32 %v1784, %v1840
    %v1847 = vadd.f32 %v1785, %v1842
    %1848 = vrot.lane.b32.xlu0 %v1347, 124
    %v1849 = vpop.permute.xlu0 %1848
    %1850 = vrot.lane.b32.xlu0 %v1358, 124
    %v1851 = vpop.permute.xlu0 %1850
    %v1852 = vsel %vm661, %v1849, %v1851
    %v1853 = vsel %vm661, %v1851, %v1849
    %v1854 = vsel %vm666, %v1852, 0.0
    %v1855 = vsel %vm667, %v1853, 0.0
    %v1856 = vpack.c.bf16 %v1854, %v1854
    %v1857 = vpack.c.bf16 %v1855, %v1855
    %v1859 = vsel %vm166, %v1356, 0
    %v1862 = vsel %vm170, %v1856, 0
    %v1865 = vsel %vm170, %v1857, 0
    %1867 = vmatprep.subr.bf16.mxu0 %v1865
    %1868 = vmatpush1.bf16.msra.mxu0 %v1862
    %1869 = vmatprep.subr.bf16.mxu0 0
    %1870 = vmatpush1.bf16.msra.mxu0 0
    %1871 = vmatprep.subr.bf16.mxu0 0
    %1872 = vmatpush1.bf16.msra.mxu0 0
    %1873 = vmatprep.subr.bf16.mxu0 0
    %1874 = vmatpush1.bf16.msra.mxu0 0
    %1875 = vmatprep.subr.bf16.mxu0 0
    %1876 = vmatpush1.bf16.msra.mxu0 0
    %1877 = vmatprep.subr.bf16.mxu0 0
    %1878 = vmatpush1.bf16.msra.mxu0 0
    %1879 = vmatprep.subr.bf16.mxu0 0
    %1880 = vmatpush1.bf16.msra.mxu0 0
    %1881 = vmatprep.subr.bf16.mxu0 0
    %1882 = vmatpush1.bf16.msra.mxu0 0
    %1883 = vmatprep.subr.bf16.mxu0 0
    %1884 = vmatpush1.bf16.msra.mxu0 0
    %1885 = vmatprep.subr.bf16.mxu0 0
    %1886 = vmatpush1.bf16.msra.mxu0 0
    %1887 = vmatprep.subr.bf16.mxu0 0
    %1888 = vmatpush1.bf16.msra.mxu0 0
    %1889 = vmatprep.subr.bf16.mxu0 0
    %1890 = vmatpush1.bf16.msra.mxu0 0
    %1891 = vmatprep.subr.bf16.mxu0 0
    %1892 = vmatpush1.bf16.msra.mxu0 0
    %1893 = vmatprep.subr.bf16.mxu0 0
    %1894 = vmatpush1.bf16.msra.mxu0 0
    %1895 = vmatprep.subr.bf16.mxu0 0
    %1896 = vmatpush1.bf16.msra.mxu0 0
    %1897 = vmatprep.subr.bf16.mxu0 0
    %1898 = vmatpush1.bf16.msra.mxu0 0
    %1899 = vmatprep.mubr.bf16.mxu0 0
    %1900 = vmatmul.mubr.bf16.gmra.mrb[0].mxu0 %v1859
    %v1901 = vpop.f32.mrb[0].mxu0
    %v1902 = vadd.f32 0.0, %v1901
    %v1903 = vpop.f32.mrb[0].mxu0
    %v1904 = vadd.f32 0.0, %v1903
    %v1905 = vpop.f32.mrb[0].mxu0
    %v1906 = vpop.f32.mrb[0].mxu0
    %1907 = vdwg.mxu0
    %v1908 = vadd.f32 %v1846, %v1902
    %v1909 = vadd.f32 %v1847, %v1904
    %v1910 = vld [vmem:[%s12] sm:$0xf]
    %1912 = vset.pattern.permute.xlu0 0
    %1913 = vperm.xlu0 %1912, %v1910
    %v1914 = vpop.permute.xlu0 %1913
    %v1916 = vadd.f32 %v1908, %v1914
    %v1917 = vadd.f32 %v1909, %v1914
    %v1918 = vpack.c.bf16 %v1916, %v1916
    %v1919 = vpack.c.bf16 %v1917, %v1917
    %v1922 = vcombine.low %v1918, %v1919
    %v1924 = vunpack.c.l.s4 1983009808
    %v1925 = vunpack.c.0.s8 %v1924
    %v1926 = vlaneseq
    %v1927 = vshrl.u32 %v1926, 7
    %v1928 = vsub.s32 %v1925, %v1927
    %v1929 = vrot.slane %v1922, %v1928
    %1931 = vst [vmem:[%s13] sm:$0xf] %v1929
    %v1932 = vunpack.c.l.bf16 %v1918
    %v1933 = vunpack.c.l.bf16 %v1919
    %v1934 = vmul.f32 %v1932, %v1932
    %v1935 = vadd.f32 %v1932, %v1933
    %v1936 = vmul.f32 %v1933, %v1933
    %v1937 = vadd.f32 %v1934, %v1936
    %1938 = vst [vmem:[#allocation2] sm:$0xf] %v1935
    %1939 = vst [vmem:[#allocation4] sm:$0xf] %v1937
    // Predicated region
    $region54: #{dense_block.5} parent=1 // pred_check
      _
    $region55: #{dense_block.5} parent=1 // pred_check_branch
      %1941 = sbr.rel (0) target = $region57
    $region56: #{dense_block.5} parent=1 // pred_region
      _
    $region57: #{dense_block.5} parent=1 // pred_fallthru
      _
    // Predicated region
    $region58: #{dense_block.5} parent=1 // pred_check
      _
    $region59: #{dense_block.5} parent=1 // pred_check_branch
      %1943 = sbr.rel (0) target = $region61
    $region60: #{dense_block.5} parent=1 // pred_region
      %s1945 = ssub.s32 64, 64
      %1946 = vsyncadd [#allocation3], %s1945
      %s1948 = sshll.u32 [#allocation2], 4
      %s1949 = int_to_ptr.vmem [resolvable:$true] %s1948
      %1951 = dma.vmem_to_hbm [thread:$0]  %s1949, 64, %s14, [#allocation3]
    $region61: #{dense_block.5} parent=1 // pred_fallthru
      _
    // Predicated region
    $region62: #{dense_block.5} parent=1 // pred_check
      _
    $region63: #{dense_block.5} parent=1 // pred_check_branch
      %1953 = sbr.rel (0) target = $region65
    $region64: #{dense_block.5} parent=1 // pred_region
      %s1955 = ssub.s32 64, 64
      %1956 = vsyncadd [#allocation5], %s1955
      %s1958 = sshll.u32 [#allocation4], 4
      %s1959 = int_to_ptr.vmem [resolvable:$true] %s1958
      %1961 = dma.vmem_to_hbm [thread:$0]  %s1959, 64, %s15, [#allocation5]
    $region65: #{dense_block.5} parent=1 // pred_fallthru
      _
    // Predicated region
    $region66: #{dense_block.5} parent=1 // pred_check
      _
    $region67: #{dense_block.5} parent=1 // pred_check_branch
      %1963 = sbr.rel (0) target = $region69
    $region68: #{dense_block.5} parent=1 // pred_region
      _
    $region69: #{dense_block.5} parent=1 // pred_fallthru
      _
    // Predicated region
    $region70: #{dense_block.5} parent=1 // pred_check
      _
    $region71: #{dense_block.5} parent=1 // pred_check_branch
      %1965 = sbr.rel (0) target = $region73
    $region72: #{dense_block.5} parent=1 // pred_region
      %1966 = dma.done [#allocation3], 64
    $region73: #{dense_block.5} parent=1 // pred_fallthru
      _
    // Predicated region
    $region74: #{dense_block.5} parent=1 // pred_check
      _
    $region75: #{dense_block.5} parent=1 // pred_check_branch
      %1968 = sbr.rel (0) target = $region77
    $region76: #{dense_block.5} parent=1 // pred_region
      %1969 = dma.done [#allocation5], 64
    $region77: #{dense_block.5} parent=1 // pred_fallthru
      _
    %1970 = vsyncpa [#allocation3], 1
    %1971 = vsyncpa [#allocation5], 1

</llo_original>
